<compile_context>
chip_gen: v7x
topology: tpu7x:2x2x1
jax: 0.10.0
libtpu: 0.0.40
codegen_flags: <defaults>
</compile_context>

<pallas_src>
import math
import functools

import numpy as np
import jax
import jax.numpy as jnp
from jax.experimental import pallas as pl
from jax.experimental.pallas import tpu as pltpu

# ----------------------------- configuration --------------------------------
NUM_CLASSES = 4                    # foreground classes
CLS_OUT = NUM_CLASSES + 1          # + background (softmax, last row dropped)
NUM_ANCHORS = 2                    # anchors per feature-map location
BACKBONE_C = 16
IMG_SIZE = 32                      # model input resolution (the "resized" image)
TARGET_STDS = (0.1, 0.1, 0.2, 0.2)  # SSD DeltaXYWHBBoxCoder target_stds
WH_RATIO_CLIP = 16.0 / 1000.0

# static geometry
F0_HW = 8                          # bb1: 3x3 stride-4 conv on 32x32 -> 8x8
F1_HW = 4                          # bb2: 3x3 stride-2 conv on 8x8   -> 4x4
M0 = F0_HW * F0_HW                 # 64 level-0 spatial positions / image
M1 = F1_HW * F1_HW                 # 16 level-1 spatial positions / image
MP = M0 + M1                       # 80 head columns per image
P = MP * NUM_ANCHORS               # 160 priors per image
KDIM1 = 32                         # 9*3 = 27 padded to 32 (friendly sublanes)
KDIM = 9 * BACKBONE_C              # 144
HEAD_C = NUM_ANCHORS * (CLS_OUT + 4)   # 18 fused cls+reg output channels


# ---------------- compile-time constants (numpy, trace-time only) -----------

def _conv_selection(hi, wi, stride):
    """0/1 matrices S[t] (Hi*Wi, Ho*Wo): patches[:, t*C:(t+1)*C].T = x @ S[t].
    Encodes the 3x3/pad-1/stride conv gather incl. zero padding at borders."""
    ho = (hi + 2 - 3) // stride + 1
    wo = (wi + 2 - 3) // stride + 1
    s = np.zeros((9, hi * wi, ho * wo), np.float32)
    for dy in range(3):
        for dx in range(3):
            t = dy * 3 + dx
            for oy in range(ho):
                for ox in range(wo):
                    iy = stride * oy + dy - 1
                    ix = stride * ox + dx - 1
                    if 0 <= iy < hi and 0 <= ix < wi:
                        s[t, iy * wi + ix, oy * wo + ox] = 1.0
    return s


_S_BB2 = _conv_selection(F0_HW, F0_HW, 2)   # (9, 64, 16)
_S_H0 = _conv_selection(F0_HW, F0_HW, 1)    # (9, 64, 64)
_S_H1 = _conv_selection(F1_HW, F1_HW, 1)    # (9, 16, 16)


def _gen_priors_stacked():
    """SSD grid priors, (y, x, anchor)-ordered per level (matches
    permute(1,2,0).reshape(-1, C)), returned in the kernel's stacked layout
    (NUM_ANCHORS*4, MP): row a*4+c, column = spatial position (lvl0 | lvl1)."""
    pri = []
    for hw, stride in ((F0_HW, 4), (F1_HW, 8)):
        base = 4.0 * stride
        ys = (np.arange(hw, dtype=np.float32) + 0.5) * stride
        xs = (np.arange(hw, dtype=np.float32) + 0.5) * stride
        cy, cx = np.meshgrid(ys, xs, indexing="ij")
        per_scale = []
        for s in (0.5, 1.0):                       # one scale per anchor
            half = 0.5 * base * s
            per_scale.append(np.stack([cx - half, cy - half,
                                       cx + half, cy + half], axis=-1))
        pri.append(np.stack(per_scale, axis=2).reshape(-1, 4))   # (hw*hw*A, 4)
    pri = np.concatenate(pri, axis=0).astype(np.float32)         # (P, 4)
    return pri.reshape(MP, NUM_ANCHORS, 4).transpose(1, 2, 0).reshape(
        NUM_ANCHORS * 4, MP)


_PRIORS_STACKED = _gen_priors_stacked()          # (8, 80)


# ------------------------------ fused kernel --------------------------------

def _make_fused_kernel(img_h, img_w, scale_x, scale_y):
    std_x, std_y, std_w, std_h = TARGET_STDS
    max_ratio = abs(math.log(WH_RATIO_CLIP))

    def conv_from_taps(xb, s_ref, w_ref, b_ref):
        # xb: (Cin, Mi) bf16; s_ref: (9, Mi, Mo); w_ref: (Cout, 9*Cin); b: (Cout,1)
        taps = [
            jnp.dot(xb, s_ref[t], preferred_element_type=jnp.float32
                    ).astype(jnp.bfloat16)
            for t in range(9)
        ]
        patches = jnp.concatenate(taps, axis=0)                 # (9*Cin, Mo) bf16
        return jnp.dot(w_ref[...], patches,
                       preferred_element_type=jnp.float32) + b_ref[...]

    def kernel(p1_ref, w1_ref, b1_ref, w2_ref, b2_ref, s2_ref,
               wh0_ref, bh0_ref, sh0_ref, wh1_ref, bh1_ref, sh1_ref,
               pri_ref, boxes_ref, scores_ref):
        # ---------------- backbone (all VMEM-resident) ----------------------
        f0 = jnp.dot(w1_ref[...], p1_ref[0],
                     preferred_element_type=jnp.float32) + b1_ref[...]
        f0 = jnp.maximum(f0, 0.0).astype(jnp.bfloat16)          # (16, 64)

        f1 = conv_from_taps(f0, s2_ref, w2_ref, b2_ref)         # (16, 16) f32
        f1 = jnp.maximum(f1, 0.0).astype(jnp.bfloat16)

        # ---------------- fused cls+reg heads, both levels ------------------
        h0 = conv_from_taps(f0, sh0_ref, wh0_ref, bh0_ref)      # (18, 64)
        h1 = conv_from_taps(f1, sh1_ref, wh1_ref, bh1_ref)      # (18, 16)
        h = jnp.concatenate([h0, h1], axis=1)                   # (18, 80)

        # ---------------- post-processing (lane-dense, priors on lanes) -----
        pri = pri_ref[...]                                      # (8, 80)
        score_rows, box_rows = [], []
        for a in range(NUM_ANCHORS):
            # softmax over classes (sublane axis), drop background (last row)
            cls = h[a * CLS_OUT:(a + 1) * CLS_OUT, :]           # (5, 80)
            mx = jnp.max(cls, axis=0, keepdims=True)
            e = jnp.exp(cls - mx)
            inv = pl.reciprocal(jnp.sum(e, axis=0, keepdims=True), approx=True)
            score_rows.append(e[:NUM_CLASSES, :] * inv)         # (4, 80)

            # DeltaXYWHBBoxCoder.decode (means=0, stds=TARGET_STDS)
            r0 = NUM_ANCHORS * CLS_OUT + a * 4
            reg = h[r0:r0 + 4, :]                               # (4, 80)
            pa = pri[a * 4:(a + 1) * 4, :]                      # (4, 80)
            px = (pa[0:1] + pa[2:3]) * 0.5
            py = (pa[1:2] + pa[3:4]) * 0.5
            pw = pa[2:3] - pa[0:1]
            ph = pa[3:4] - pa[1:2]

            dx = reg[0:1] * std_x
            dy = reg[1:2] * std_y
            dw = jnp.clip(reg[2:3] * std_w, -max_ratio, max_ratio)
            dh = jnp.clip(reg[3:4] * std_h, -max_ratio, max_ratio)

            gx = px + pw * dx
            gy = py + ph * dy
            gw = pw * jnp.exp(dw)
            gh = ph * jnp.exp(dh)

            # clamp to img_shape, then scale_boxes by the inverse scale_factor
            x1 = jnp.clip(gx - gw * 0.5, 0.0, float(img_w)) * scale_x
            y1 = jnp.clip(gy - gh * 0.5, 0.0, float(img_h)) * scale_y
            x2 = jnp.clip(gx + gw * 0.5, 0.0, float(img_w)) * scale_x
            y2 = jnp.clip(gy + gh * 0.5, 0.0, float(img_h)) * scale_y
            box_rows.append(jnp.concatenate([x1, y1, x2, y2], axis=0))  # (4,80)

        boxes_ref[0] = jnp.concatenate(box_rows, axis=0)        # (8, 80)
        scores_ref[0] = jnp.concatenate(score_rows, axis=0)     # (8, 80)

    return kernel


# ------------------------------ host-side glue ------------------------------

def _flat_w(w_pt):
    """(Cout, Cin, 3, 3) PyTorch weight -> (Cout, 9*Cin), ordering t*Cin+ci."""
    return jnp.transpose(w_pt, (0, 2, 3, 1)).reshape(w_pt.shape[0], -1)


def _im2col_bb1(x_nhwc):
    """im2col for the stride-4 entry conv, transposed to (B, K=32, M=64) bf16.
    Smaller than the image itself, so this XLA-side gather reduces HBM traffic."""
    n = x_nhwc.shape[0]
    xp = jnp.pad(x_nhwc, ((0, 0), (1, 1), (1, 1), (0, 0)))
    cols = []
    for dy in range(3):
        for dx in range(3):
            cols.append(xp[:, dy:dy + 4 * F0_HW:4, dx:dx + 4 * F0_HW:4, :])
    patches = jnp.concatenate(cols, axis=-1)                    # (B, 8, 8, 27)
    patches = patches.reshape(n, M0, 27).transpose(0, 2, 1)     # (B, 27, 64)
    patches = jnp.pad(patches, ((0, 0), (0, KDIM1 - 27), (0, 0)))
    return patches.astype(jnp.bfloat16)


def init_params(key):
    def conv_params(k, cout, cin):
        k1, k2 = jax.random.split(k)
        w = jax.random.normal(k1, (cout, cin, 3, 3), jnp.float32) * 0.1
        b = jax.random.normal(k2, (cout,), jnp.float32) * 0.01
        return w, b

    keys = jax.random.split(key, 6)
    return {
        "bb1": conv_params(keys[0], BACKBONE_C, 3),
        "bb2": conv_params(keys[1], BACKBONE_C, BACKBONE_C),
        "cls": [conv_params(keys[2], NUM_ANCHORS * CLS_OUT, BACKBONE_C),
                conv_params(keys[3], NUM_ANCHORS * CLS_OUT, BACKBONE_C)],
        "reg": [conv_params(keys[4], NUM_ANCHORS * 4, BACKBONE_C),
                conv_params(keys[5], NUM_ANCHORS * 4, BACKBONE_C)],
    }


@functools.partial(jax.jit, static_argnames=("h", "w"))
def ssd_r_forward(params, images_nchw, h, w):
    """images_nchw: (B, 3, IMG_SIZE, IMG_SIZE) already "pipeline-resized".
    h, w: original image size (only feeds the inverse scale_factor).
    Returns (prediction_boxes (B,P,4), prediction_logits (B,P,NUM_CLASSES))."""
    # TODO(synk): the mmdet test_pipeline (LoadImageFromNDArray/Resize/Normalize)
    # is host-side preprocessing; the resized tensor is taken as input directly.
    b = images_nchw.shape[0]
    x = jnp.transpose(images_nchw, (0, 2, 3, 1)).astype(jnp.float32)   # NHWC
    p1 = _im2col_bb1(x)                                                # (B,32,64)

    # --- pack weights (bf16 operands, transposed/fused layouts) -------------
    w1, b1 = params["bb1"]
    w2, b2 = params["bb2"]
    w1t = jnp.pad(_flat_w(w1), ((0, 0), (0, KDIM1 - 27))).astype(jnp.bfloat16)
    b1c = b1.reshape(-1, 1).astype(jnp.float32)
    w2t = _flat_w(w2).astype(jnp.bfloat16)
    b2c = b2.reshape(-1, 1).astype(jnp.float32)

    def head_pack(lvl):                      # fuse cls + reg along Cout (=18)
        cw, cb = params["cls"][lvl]
        rw, rb = params["reg"][lvl]
        wt = jnp.concatenate([_flat_w(cw), _flat_w(rw)], axis=0).astype(jnp.bfloat16)
        bc = jnp.concatenate([cb, rb], axis=0).reshape(-1, 1).astype(jnp.float32)
        return wt, bc

    wh0, bh0 = head_pack(0)
    wh1, bh1 = head_pack(1)

    s2 = jnp.asarray(_S_BB2, jnp.bfloat16)      # (9, 64, 16)
    sh0 = jnp.asarray(_S_H0, jnp.bfloat16)      # (9, 64, 64)
    sh1 = jnp.asarray(_S_H1, jnp.bfloat16)      # (9, 16, 16)
    pri = jnp.asarray(_PRIORS_STACKED, jnp.float32)   # (8, 80)

    # inverse scale_factor = original_size / model_input_size
    scale_x = float(w) / float(IMG_SIZE)
    scale_y = float(h) / float(IMG_SIZE)
    kernel = _make_fused_kernel(IMG_SIZE, IMG_SIZE, scale_x, scale_y)

    def cspec(arr):      # resident constant block (same index every grid step)
        return pl.BlockSpec(arr.shape, lambda i, _n=arr.ndim: (0,) * _n)

    boxes_s, scores_s = pl.pallas_call(
        kernel,
        grid=(b,),
        out_shape=(
            jax.ShapeDtypeStruct((b, NUM_ANCHORS * 4, MP), jnp.float32),
            jax.ShapeDtypeStruct((b, NUM_ANCHORS * NUM_CLASSES, MP), jnp.float32),
        ),
        in_specs=[
            pl.BlockSpec((1, KDIM1, M0), lambda i: (i, 0, 0)),
            cspec(w1t), cspec(b1c), cspec(w2t), cspec(b2c), cspec(s2),
            cspec(wh0), cspec(bh0), cspec(sh0), cspec(wh1), cspec(bh1),
            cspec(sh1), cspec(pri),
        ],
        out_specs=(
            pl.BlockSpec((1, NUM_ANCHORS * 4, MP), lambda i: (i, 0, 0)),
            pl.BlockSpec((1, NUM_ANCHORS * NUM_CLASSES, MP), lambda i: (i, 0, 0)),
        ),
        compiler_params=pltpu.CompilerParams(dimension_semantics=("parallel",)),
    )(p1, w1t, b1c, w2t, b2c, s2, wh0, bh0, sh0, wh1, bh1, sh1, pri)

    # stacked (B, A*4, MP) / (B, A*C, MP) -> prior-major (B, P, 4/C); prior
    # index p = col*2 + a matches the (level, y, x, anchor) reference ordering.
    boxes = boxes_s.reshape(b, NUM_ANCHORS, 4, MP).transpose(0, 3, 1, 2
                                                             ).reshape(b, P, 4)
    scores = scores_s.reshape(b, NUM_ANCHORS, NUM_CLASSES, MP).transpose(
        0, 3, 1, 2).reshape(b, P, NUM_CLASSES)
    return boxes, scores


# ----------------------------------- main ------------------------------------

if __name__ == "__main__":
    key = jax.random.PRNGKey(0)
    k_img, k_par = jax.random.split(key)

    batch = 2
    images = jax.random.normal(k_img, (batch, 3, IMG_SIZE, IMG_SIZE), jnp.float32)
    params = init_params(k_par)

    # pretend the originals were 64x64 -> inverse scale factor of 2x
    prediction_boxes, prediction_logits = ssd_r_forward(params, images, 64, 64)
    jax.block_until_ready((prediction_boxes, prediction_logits))

    assert prediction_boxes.shape == (batch, P, 4), prediction_boxes.shape
    assert prediction_logits.shape == (batch, P, NUM_CLASSES), prediction_logits.shape
    assert bool(jnp.all(jnp.isfinite(prediction_boxes)))
    assert bool(jnp.all(jnp.isfinite(prediction_logits)))
    print("KERNEL_OK")
</pallas_src>

<mosaic_0001>
module attributes {stable_mosaic.version = 11 : i64} {
  func.func @kernel(%arg0: i32, %arg1: memref<1x32x64xbf16, #tpu.memory_space<vmem>>, %arg2: memref<16x32xbf16, #tpu.memory_space<vmem>>, %arg3: memref<16x1xf32, #tpu.memory_space<vmem>>, %arg4: memref<16x144xbf16, #tpu.memory_space<vmem>>, %arg5: memref<16x1xf32, #tpu.memory_space<vmem>>, %arg6: memref<9x64x16xbf16, #tpu.memory_space<vmem>>, %arg7: memref<18x144xbf16, #tpu.memory_space<vmem>>, %arg8: memref<18x1xf32, #tpu.memory_space<vmem>>, %arg9: memref<9x64x64xbf16, #tpu.memory_space<vmem>>, %arg10: memref<18x144xbf16, #tpu.memory_space<vmem>>, %arg11: memref<18x1xf32, #tpu.memory_space<vmem>>, %arg12: memref<9x16x16xbf16, #tpu.memory_space<vmem>>, %arg13: memref<8x80xf32, #tpu.memory_space<vmem>>, %arg14: memref<1x8x80xf32, #tpu.memory_space<vmem>>, %arg15: memref<1x8x80xf32, #tpu.memory_space<vmem>>) attributes {dimension_semantics = [#tpu.dimension_semantics<parallel>], iteration_bounds = array<i64: 2>, scalar_prefetch = 0 : i64, scratch_operands = 0 : i64, tpu.core_type = #tpu.core_type<tc>, window_params = [{transform_indices = @transform_0, window_bounds = array<i64: 1, 32, 64>}, {pipeline_mode = #tpu.pipeline_mode<synchronous>, transform_indices = @transform_1, window_bounds = array<i64: 16, 32>}, {pipeline_mode = #tpu.pipeline_mode<synchronous>, transform_indices = @transform_2, window_bounds = array<i64: 16, 1>}, {pipeline_mode = #tpu.pipeline_mode<synchronous>, transform_indices = @transform_3, window_bounds = array<i64: 16, 144>}, {pipeline_mode = #tpu.pipeline_mode<synchronous>, transform_indices = @transform_4, window_bounds = array<i64: 16, 1>}, {pipeline_mode = #tpu.pipeline_mode<synchronous>, transform_indices = @transform_5, window_bounds = array<i64: 9, 64, 16>}, {pipeline_mode = #tpu.pipeline_mode<synchronous>, transform_indices = @transform_6, window_bounds = array<i64: 18, 144>}, {pipeline_mode = #tpu.pipeline_mode<synchronous>, transform_indices = @transform_7, window_bounds = array<i64: 18, 1>}, {pipeline_mode = #tpu.pipeline_mode<synchronous>, transform_indices = @transform_8, window_bounds = array<i64: 9, 64, 64>}, {pipeline_mode = #tpu.pipeline_mode<synchronous>, transform_indices = @transform_9, window_bounds = array<i64: 18, 144>}, {pipeline_mode = #tpu.pipeline_mode<synchronous>, transform_indices = @transform_10, window_bounds = array<i64: 18, 1>}, {pipeline_mode = #tpu.pipeline_mode<synchronous>, transform_indices = @transform_11, window_bounds = array<i64: 9, 16, 16>}, {pipeline_mode = #tpu.pipeline_mode<synchronous>, transform_indices = @transform_12, window_bounds = array<i64: 8, 80>}, {transform_indices = @transform_13, window_bounds = array<i64: 1, 8, 80>}, {transform_indices = @transform_14, window_bounds = array<i64: 1, 8, 80>}]} {
    %c0 = arith.constant 0 : index
    %c0_0 = arith.constant 0 : index
    %0 = vector.load %arg2[%c0, %c0_0] : memref<16x32xbf16, #tpu.memory_space<vmem>>, vector<16x32xbf16>
    %c0_1 = arith.constant 0 : index
    %c0_2 = arith.constant 0 : index
    %c0_3 = arith.constant 0 : index
    %1 = vector.load %arg1[%c0_1, %c0_2, %c0_3] : memref<1x32x64xbf16, #tpu.memory_space<vmem>>, vector<1x32x64xbf16>
    %2 = vector.shape_cast %1 : vector<1x32x64xbf16> to vector<32x64xbf16>
    %cst = arith.constant dense<0.000000e+00> : vector<16x64xf32>
    %3 = tpu.matmul %0, %2, %cst {dimension_numbers = #tpu.dot_dimension_numbers<[1], [0], [0], [1], [0, 0, 1, 1], [], []>} : vector<16x32xbf16>, vector<32x64xbf16>, vector<16x64xf32> -> vector<16x64xf32>
    %c0_4 = arith.constant 0 : index
    %c0_5 = arith.constant 0 : index
    %4 = vector.load %arg3[%c0_4, %c0_5] : memref<16x1xf32, #tpu.memory_space<vmem>>, vector<16x1xf32>
    %5 = vector.broadcast %4 : vector<16x1xf32> to vector<16x64xf32>
    %6 = arith.addf %3, %5 : vector<16x64xf32>
    %cst_6 = arith.constant 0.000000e+00 : f32
    %7 = vector.broadcast %cst_6 : f32 to vector<16x64xf32>
    %8 = arith.maximumf %6, %7 : vector<16x64xf32>
    %9 = arith.truncf %8 : vector<16x64xf32> to vector<16x64xbf16>
    %c0_7 = arith.constant 0 : index
    %c0_8 = arith.constant 0 : index
    %c0_9 = arith.constant 0 : index
    %10 = vector.load %arg6[%c0_7, %c0_8, %c0_9] : memref<9x64x16xbf16, #tpu.memory_space<vmem>>, vector<1x64x16xbf16>
    %11 = vector.shape_cast %10 : vector<1x64x16xbf16> to vector<64x16xbf16>
    %cst_10 = arith.constant dense<0.000000e+00> : vector<16x16xf32>
    %12 = tpu.matmul %9, %11, %cst_10 {dimension_numbers = #tpu.dot_dimension_numbers<[1], [0], [0], [1], [0, 0, 1, 1], [], []>} : vector<16x64xbf16>, vector<64x16xbf16>, vector<16x16xf32> -> vector<16x16xf32>
    %13 = arith.truncf %12 : vector<16x16xf32> to vector<16x16xbf16>
    %c1 = arith.constant 1 : index
    %c0_11 = arith.constant 0 : index
    %c0_12 = arith.constant 0 : index
    %14 = vector.load %arg6[%c1, %c0_11, %c0_12] : memref<9x64x16xbf16, #tpu.memory_space<vmem>>, vector<1x64x16xbf16>
    %15 = vector.shape_cast %14 : vector<1x64x16xbf16> to vector<64x16xbf16>
    %cst_13 = arith.constant dense<0.000000e+00> : vector<16x16xf32>
    %16 = tpu.matmul %9, %15, %cst_13 {dimension_numbers = #tpu.dot_dimension_numbers<[1], [0], [0], [1], [0, 0, 1, 1], [], []>} : vector<16x64xbf16>, vector<64x16xbf16>, vector<16x16xf32> -> vector<16x16xf32>
    %17 = arith.truncf %16 : vector<16x16xf32> to vector<16x16xbf16>
    %c2 = arith.constant 2 : index
    %c0_14 = arith.constant 0 : index
    %c0_15 = arith.constant 0 : index
    %18 = vector.load %arg6[%c2, %c0_14, %c0_15] : memref<9x64x16xbf16, #tpu.memory_space<vmem>>, vector<1x64x16xbf16>
    %19 = vector.shape_cast %18 : vector<1x64x16xbf16> to vector<64x16xbf16>
    %cst_16 = arith.constant dense<0.000000e+00> : vector<16x16xf32>
    %20 = tpu.matmul %9, %19, %cst_16 {dimension_numbers = #tpu.dot_dimension_numbers<[1], [0], [0], [1], [0, 0, 1, 1], [], []>} : vector<16x64xbf16>, vector<64x16xbf16>, vector<16x16xf32> -> vector<16x16xf32>
    %21 = arith.truncf %20 : vector<16x16xf32> to vector<16x16xbf16>
    %c3 = arith.constant 3 : index
    %c0_17 = arith.constant 0 : index
    %c0_18 = arith.constant 0 : index
    %22 = vector.load %arg6[%c3, %c0_17, %c0_18] : memref<9x64x16xbf16, #tpu.memory_space<vmem>>, vector<1x64x16xbf16>
    %23 = vector.shape_cast %22 : vector<1x64x16xbf16> to vector<64x16xbf16>
    %cst_19 = arith.constant dense<0.000000e+00> : vector<16x16xf32>
    %24 = tpu.matmul %9, %23, %cst_19 {dimension_numbers = #tpu.dot_dimension_numbers<[1], [0], [0], [1], [0, 0, 1, 1], [], []>} : vector<16x64xbf16>, vector<64x16xbf16>, vector<16x16xf32> -> vector<16x16xf32>
    %25 = arith.truncf %24 : vector<16x16xf32> to vector<16x16xbf16>
    %c4 = arith.constant 4 : index
    %c0_20 = arith.constant 0 : index
    %c0_21 = arith.constant 0 : index
    %26 = vector.load %arg6[%c4, %c0_20, %c0_21] : memref<9x64x16xbf16, #tpu.memory_space<vmem>>, vector<1x64x16xbf16>
    %27 = vector.shape_cast %26 : vector<1x64x16xbf16> to vector<64x16xbf16>
    %cst_22 = arith.constant dense<0.000000e+00> : vector<16x16xf32>
    %28 = tpu.matmul %9, %27, %cst_22 {dimension_numbers = #tpu.dot_dimension_numbers<[1], [0], [0], [1], [0, 0, 1, 1], [], []>} : vector<16x64xbf16>, vector<64x16xbf16>, vector<16x16xf32> -> vector<16x16xf32>
    %29 = arith.truncf %28 : vector<16x16xf32> to vector<16x16xbf16>
    %c5 = arith.constant 5 : index
    %c0_23 = arith.constant 0 : index
    %c0_24 = arith.constant 0 : index
    %30 = vector.load %arg6[%c5, %c0_23, %c0_24] : memref<9x64x16xbf16, #tpu.memory_space<vmem>>, vector<1x64x16xbf16>
    %31 = vector.shape_cast %30 : vector<1x64x16xbf16> to vector<64x16xbf16>
    %cst_25 = arith.constant dense<0.000000e+00> : vector<16x16xf32>
    %32 = tpu.matmul %9, %31, %cst_25 {dimension_numbers = #tpu.dot_dimension_numbers<[1], [0], [0], [1], [0, 0, 1, 1], [], []>} : vector<16x64xbf16>, vector<64x16xbf16>, vector<16x16xf32> -> vector<16x16xf32>
    %33 = arith.truncf %32 : vector<16x16xf32> to vector<16x16xbf16>
    %c6 = arith.constant 6 : index
    %c0_26 = arith.constant 0 : index
    %c0_27 = arith.constant 0 : index
    %34 = vector.load %arg6[%c6, %c0_26, %c0_27] : memref<9x64x16xbf16, #tpu.memory_space<vmem>>, vector<1x64x16xbf16>
    %35 = vector.shape_cast %34 : vector<1x64x16xbf16> to vector<64x16xbf16>
    %cst_28 = arith.constant dense<0.000000e+00> : vector<16x16xf32>
    %36 = tpu.matmul %9, %35, %cst_28 {dimension_numbers = #tpu.dot_dimension_numbers<[1], [0], [0], [1], [0, 0, 1, 1], [], []>} : vector<16x64xbf16>, vector<64x16xbf16>, vector<16x16xf32> -> vector<16x16xf32>
    %37 = arith.truncf %36 : vector<16x16xf32> to vector<16x16xbf16>
    %c7 = arith.constant 7 : index
    %c0_29 = arith.constant 0 : index
    %c0_30 = arith.constant 0 : index
    %38 = vector.load %arg6[%c7, %c0_29, %c0_30] : memref<9x64x16xbf16, #tpu.memory_space<vmem>>, vector<1x64x16xbf16>
    %39 = vector.shape_cast %38 : vector<1x64x16xbf16> to vector<64x16xbf16>
    %cst_31 = arith.constant dense<0.000000e+00> : vector<16x16xf32>
    %40 = tpu.matmul %9, %39, %cst_31 {dimension_numbers = #tpu.dot_dimension_numbers<[1], [0], [0], [1], [0, 0, 1, 1], [], []>} : vector<16x64xbf16>, vector<64x16xbf16>, vector<16x16xf32> -> vector<16x16xf32>
    %41 = arith.truncf %40 : vector<16x16xf32> to vector<16x16xbf16>
    %c8 = arith.constant 8 : index
    %c0_32 = arith.constant 0 : index
    %c0_33 = arith.constant 0 : index
    %42 = vector.load %arg6[%c8, %c0_32, %c0_33] : memref<9x64x16xbf16, #tpu.memory_space<vmem>>, vector<1x64x16xbf16>
    %43 = vector.shape_cast %42 : vector<1x64x16xbf16> to vector<64x16xbf16>
    %cst_34 = arith.constant dense<0.000000e+00> : vector<16x16xf32>
    %44 = tpu.matmul %9, %43, %cst_34 {dimension_numbers = #tpu.dot_dimension_numbers<[1], [0], [0], [1], [0, 0, 1, 1], [], []>} : vector<16x64xbf16>, vector<64x16xbf16>, vector<16x16xf32> -> vector<16x16xf32>
    %45 = arith.truncf %44 : vector<16x16xf32> to vector<16x16xbf16>
    %46 = tpu.concatenate %13, %17, %21, %25, %29, %33, %37, %41, %45 in 0 : vector<16x16xbf16>, vector<16x16xbf16>, vector<16x16xbf16>, vector<16x16xbf16>, vector<16x16xbf16>, vector<16x16xbf16>, vector<16x16xbf16>, vector<16x16xbf16>, vector<16x16xbf16> -> vector<144x16xbf16>
    %c0_35 = arith.constant 0 : index
    %c0_36 = arith.constant 0 : index
    %47 = vector.load %arg4[%c0_35, %c0_36] : memref<16x144xbf16, #tpu.memory_space<vmem>>, vector<16x144xbf16>
    %cst_37 = arith.constant dense<0.000000e+00> : vector<16x16xf32>
    %48 = tpu.matmul %47, %46, %cst_37 {dimension_numbers = #tpu.dot_dimension_numbers<[1], [0], [0], [1], [0, 0, 1, 1], [], []>} : vector<16x144xbf16>, vector<144x16xbf16>, vector<16x16xf32> -> vector<16x16xf32>
    %c0_38 = arith.constant 0 : index
    %c0_39 = arith.constant 0 : index
    %49 = vector.load %arg5[%c0_38, %c0_39] : memref<16x1xf32, #tpu.memory_space<vmem>>, vector<16x1xf32>
    %50 = vector.broadcast %49 : vector<16x1xf32> to vector<16x16xf32>
    %51 = arith.addf %48, %50 : vector<16x16xf32>
    %cst_40 = arith.constant 0.000000e+00 : f32
    %52 = vector.broadcast %cst_40 : f32 to vector<16x16xf32>
    %53 = arith.maximumf %51, %52 : vector<16x16xf32>
    %54 = arith.truncf %53 : vector<16x16xf32> to vector<16x16xbf16>
    %c0_41 = arith.constant 0 : index
    %c0_42 = arith.constant 0 : index
    %c0_43 = arith.constant 0 : index
    %55 = vector.load %arg9[%c0_41, %c0_42, %c0_43] : memref<9x64x64xbf16, #tpu.memory_space<vmem>>, vector<1x64x64xbf16>
    %56 = vector.shape_cast %55 : vector<1x64x64xbf16> to vector<64x64xbf16>
    %cst_44 = arith.constant dense<0.000000e+00> : vector<16x64xf32>
    %57 = tpu.matmul %9, %56, %cst_44 {dimension_numbers = #tpu.dot_dimension_numbers<[1], [0], [0], [1], [0, 0, 1, 1], [], []>} : vector<16x64xbf16>, vector<64x64xbf16>, vector<16x64xf32> -> vector<16x64xf32>
    %58 = arith.truncf %57 : vector<16x64xf32> to vector<16x64xbf16>
    %c1_45 = arith.constant 1 : index
    %c0_46 = arith.constant 0 : index
    %c0_47 = arith.constant 0 : index
    %59 = vector.load %arg9[%c1_45, %c0_46, %c0_47] : memref<9x64x64xbf16, #tpu.memory_space<vmem>>, vector<1x64x64xbf16>
    %60 = vector.shape_cast %59 : vector<1x64x64xbf16> to vector<64x64xbf16>
    %cst_48 = arith.constant dense<0.000000e+00> : vector<16x64xf32>
    %61 = tpu.matmul %9, %60, %cst_48 {dimension_numbers = #tpu.dot_dimension_numbers<[1], [0], [0], [1], [0, 0, 1, 1], [], []>} : vector<16x64xbf16>, vector<64x64xbf16>, vector<16x64xf32> -> vector<16x64xf32>
    %62 = arith.truncf %61 : vector<16x64xf32> to vector<16x64xbf16>
    %c2_49 = arith.constant 2 : index
    %c0_50 = arith.constant 0 : index
    %c0_51 = arith.constant 0 : index
    %63 = vector.load %arg9[%c2_49, %c0_50, %c0_51] : memref<9x64x64xbf16, #tpu.memory_space<vmem>>, vector<1x64x64xbf16>
    %64 = vector.shape_cast %63 : vector<1x64x64xbf16> to vector<64x64xbf16>
    %cst_52 = arith.constant dense<0.000000e+00> : vector<16x64xf32>
    %65 = tpu.matmul %9, %64, %cst_52 {dimension_numbers = #tpu.dot_dimension_numbers<[1], [0], [0], [1], [0, 0, 1, 1], [], []>} : vector<16x64xbf16>, vector<64x64xbf16>, vector<16x64xf32> -> vector<16x64xf32>
    %66 = arith.truncf %65 : vector<16x64xf32> to vector<16x64xbf16>
    %c3_53 = arith.constant 3 : index
    %c0_54 = arith.constant 0 : index
    %c0_55 = arith.constant 0 : index
    %67 = vector.load %arg9[%c3_53, %c0_54, %c0_55] : memref<9x64x64xbf16, #tpu.memory_space<vmem>>, vector<1x64x64xbf16>
    %68 = vector.shape_cast %67 : vector<1x64x64xbf16> to vector<64x64xbf16>
    %cst_56 = arith.constant dense<0.000000e+00> : vector<16x64xf32>
    %69 = tpu.matmul %9, %68, %cst_56 {dimension_numbers = #tpu.dot_dimension_numbers<[1], [0], [0], [1], [0, 0, 1, 1], [], []>} : vector<16x64xbf16>, vector<64x64xbf16>, vector<16x64xf32> -> vector<16x64xf32>
    %70 = arith.truncf %69 : vector<16x64xf32> to vector<16x64xbf16>
    %c4_57 = arith.constant 4 : index
    %c0_58 = arith.constant 0 : index
    %c0_59 = arith.constant 0 : index
    %71 = vector.load %arg9[%c4_57, %c0_58, %c0_59] : memref<9x64x64xbf16, #tpu.memory_space<vmem>>, vector<1x64x64xbf16>
    %72 = vector.shape_cast %71 : vector<1x64x64xbf16> to vector<64x64xbf16>
    %cst_60 = arith.constant dense<0.000000e+00> : vector<16x64xf32>
    %73 = tpu.matmul %9, %72, %cst_60 {dimension_numbers = #tpu.dot_dimension_numbers<[1], [0], [0], [1], [0, 0, 1, 1], [], []>} : vector<16x64xbf16>, vector<64x64xbf16>, vector<16x64xf32> -> vector<16x64xf32>
    %74 = arith.truncf %73 : vector<16x64xf32> to vector<16x64xbf16>
    %c5_61 = arith.constant 5 : index
    %c0_62 = arith.constant 0 : index
    %c0_63 = arith.constant 0 : index
    %75 = vector.load %arg9[%c5_61, %c0_62, %c0_63] : memref<9x64x64xbf16, #tpu.memory_space<vmem>>, vector<1x64x64xbf16>
    %76 = vector.shape_cast %75 : vector<1x64x64xbf16> to vector<64x64xbf16>
    %cst_64 = arith.constant dense<0.000000e+00> : vector<16x64xf32>
    %77 = tpu.matmul %9, %76, %cst_64 {dimension_numbers = #tpu.dot_dimension_numbers<[1], [0], [0], [1], [0, 0, 1, 1], [], []>} : vector<16x64xbf16>, vector<64x64xbf16>, vector<16x64xf32> -> vector<16x64xf32>
    %78 = arith.truncf %77 : vector<16x64xf32> to vector<16x64xbf16>
    %c6_65 = arith.constant 6 : index
    %c0_66 = arith.constant 0 : index
    %c0_67 = arith.constant 0 : index
    %79 = vector.load %arg9[%c6_65, %c0_66, %c0_67] : memref<9x64x64xbf16, #tpu.memory_space<vmem>>, vector<1x64x64xbf16>
    %80 = vector.shape_cast %79 : vector<1x64x64xbf16> to vector<64x64xbf16>
    %cst_68 = arith.constant dense<0.000000e+00> : vector<16x64xf32>
    %81 = tpu.matmul %9, %80, %cst_68 {dimension_numbers = #tpu.dot_dimension_numbers<[1], [0], [0], [1], [0, 0, 1, 1], [], []>} : vector<16x64xbf16>, vector<64x64xbf16>, vector<16x64xf32> -> vector<16x64xf32>
    %82 = arith.truncf %81 : vector<16x64xf32> to vector<16x64xbf16>
    %c7_69 = arith.constant 7 : index
    %c0_70 = arith.constant 0 : index
    %c0_71 = arith.constant 0 : index
    %83 = vector.load %arg9[%c7_69, %c0_70, %c0_71] : memref<9x64x64xbf16, #tpu.memory_space<vmem>>, vector<1x64x64xbf16>
    %84 = vector.shape_cast %83 : vector<1x64x64xbf16> to vector<64x64xbf16>
    %cst_72 = arith.constant dense<0.000000e+00> : vector<16x64xf32>
    %85 = tpu.matmul %9, %84, %cst_72 {dimension_numbers = #tpu.dot_dimension_numbers<[1], [0], [0], [1], [0, 0, 1, 1], [], []>} : vector<16x64xbf16>, vector<64x64xbf16>, vector<16x64xf32> -> vector<16x64xf32>
    %86 = arith.truncf %85 : vector<16x64xf32> to vector<16x64xbf16>
    %c8_73 = arith.constant 8 : index
    %c0_74 = arith.constant 0 : index
    %c0_75 = arith.constant 0 : index
    %87 = vector.load %arg9[%c8_73, %c0_74, %c0_75] : memref<9x64x64xbf16, #tpu.memory_space<vmem>>, vector<1x64x64xbf16>
    %88 = vector.shape_cast %87 : vector<1x64x64xbf16> to vector<64x64xbf16>
    %cst_76 = arith.constant dense<0.000000e+00> : vector<16x64xf32>
    %89 = tpu.matmul %9, %88, %cst_76 {dimension_numbers = #tpu.dot_dimension_numbers<[1], [0], [0], [1], [0, 0, 1, 1], [], []>} : vector<16x64xbf16>, vector<64x64xbf16>, vector<16x64xf32> -> vector<16x64xf32>
    %90 = arith.truncf %89 : vector<16x64xf32> to vector<16x64xbf16>
    %91 = tpu.concatenate %58, %62, %66, %70, %74, %78, %82, %86, %90 in 0 : vector<16x64xbf16>, vector<16x64xbf16>, vector<16x64xbf16>, vector<16x64xbf16>, vector<16x64xbf16>, vector<16x64xbf16>, vector<16x64xbf16>, vector<16x64xbf16>, vector<16x64xbf16> -> vector<144x64xbf16>
    %c0_77 = arith.constant 0 : index
    %c0_78 = arith.constant 0 : index
    %92 = vector.load %arg7[%c0_77, %c0_78] : memref<18x144xbf16, #tpu.memory_space<vmem>>, vector<18x144xbf16>
    %cst_79 = arith.constant dense<0.000000e+00> : vector<18x64xf32>
    %93 = tpu.matmul %92, %91, %cst_79 {dimension_numbers = #tpu.dot_dimension_numbers<[1], [0], [0], [1], [0, 0, 1, 1], [], []>} : vector<18x144xbf16>, vector<144x64xbf16>, vector<18x64xf32> -> vector<18x64xf32>
    %c0_80 = arith.constant 0 : index
    %c0_81 = arith.constant 0 : index
    %94 = vector.load %arg8[%c0_80, %c0_81] : memref<18x1xf32, #tpu.memory_space<vmem>>, vector<18x1xf32>
    %95 = vector.broadcast %94 : vector<18x1xf32> to vector<18x64xf32>
    %96 = arith.addf %93, %95 : vector<18x64xf32>
    %c0_82 = arith.constant 0 : index
    %c0_83 = arith.constant 0 : index
    %c0_84 = arith.constant 0 : index
    %97 = vector.load %arg12[%c0_82, %c0_83, %c0_84] : memref<9x16x16xbf16, #tpu.memory_space<vmem>>, vector<1x16x16xbf16>
    %98 = vector.shape_cast %97 : vector<1x16x16xbf16> to vector<16x16xbf16>
    %cst_85 = arith.constant dense<0.000000e+00> : vector<16x16xf32>
    %99 = tpu.matmul %54, %98, %cst_85 {dimension_numbers = #tpu.dot_dimension_numbers<[1], [0], [0], [1], [0, 0, 1, 1], [], []>} : vector<16x16xbf16>, vector<16x16xbf16>, vector<16x16xf32> -> vector<16x16xf32>
    %100 = arith.truncf %99 : vector<16x16xf32> to vector<16x16xbf16>
    %c1_86 = arith.constant 1 : index
    %c0_87 = arith.constant 0 : index
    %c0_88 = arith.constant 0 : index
    %101 = vector.load %arg12[%c1_86, %c0_87, %c0_88] : memref<9x16x16xbf16, #tpu.memory_space<vmem>>, vector<1x16x16xbf16>
    %102 = vector.shape_cast %101 : vector<1x16x16xbf16> to vector<16x16xbf16>
    %cst_89 = arith.constant dense<0.000000e+00> : vector<16x16xf32>
    %103 = tpu.matmul %54, %102, %cst_89 {dimension_numbers = #tpu.dot_dimension_numbers<[1], [0], [0], [1], [0, 0, 1, 1], [], []>} : vector<16x16xbf16>, vector<16x16xbf16>, vector<16x16xf32> -> vector<16x16xf32>
    %104 = arith.truncf %103 : vector<16x16xf32> to vector<16x16xbf16>
    %c2_90 = arith.constant 2 : index
    %c0_91 = arith.constant 0 : index
    %c0_92 = arith.constant 0 : index
    %105 = vector.load %arg12[%c2_90, %c0_91, %c0_92] : memref<9x16x16xbf16, #tpu.memory_space<vmem>>, vector<1x16x16xbf16>
    %106 = vector.shape_cast %105 : vector<1x16x16xbf16> to vector<16x16xbf16>
    %cst_93 = arith.constant dense<0.000000e+00> : vector<16x16xf32>
    %107 = tpu.matmul %54, %106, %cst_93 {dimension_numbers = #tpu.dot_dimension_numbers<[1], [0], [0], [1], [0, 0, 1, 1], [], []>} : vector<16x16xbf16>, vector<16x16xbf16>, vector<16x16xf32> -> vector<16x16xf32>
    %108 = arith.truncf %107 : vector<16x16xf32> to vector<16x16xbf16>
    %c3_94 = arith.constant 3 : index
    %c0_95 = arith.constant 0 : index
    %c0_96 = arith.constant 0 : index
    %109 = vector.load %arg12[%c3_94, %c0_95, %c0_96] : memref<9x16x16xbf16, #tpu.memory_space<vmem>>, vector<1x16x16xbf16>
    %110 = vector.shape_cast %109 : vector<1x16x16xbf16> to vector<16x16xbf16>
    %cst_97 = arith.constant dense<0.000000e+00> : vector<16x16xf32>
    %111 = tpu.matmul %54, %110, %cst_97 {dimension_numbers = #tpu.dot_dimension_numbers<[1], [0], [0], [1], [0, 0, 1, 1], [], []>} : vector<16x16xbf16>, vector<16x16xbf16>, vector<16x16xf32> -> vector<16x16xf32>
    %112 = arith.truncf %111 : vector<16x16xf32> to vector<16x16xbf16>
    %c4_98 = arith.constant 4 : index
    %c0_99 = arith.constant 0 : index
    %c0_100 = arith.constant 0 : index
    %113 = vector.load %arg12[%c4_98, %c0_99, %c0_100] : memref<9x16x16xbf16, #tpu.memory_space<vmem>>, vector<1x16x16xbf16>
    %114 = vector.shape_cast %113 : vector<1x16x16xbf16> to vector<16x16xbf16>
    %cst_101 = arith.constant dense<0.000000e+00> : vector<16x16xf32>
    %115 = tpu.matmul %54, %114, %cst_101 {dimension_numbers = #tpu.dot_dimension_numbers<[1], [0], [0], [1], [0, 0, 1, 1], [], []>} : vector<16x16xbf16>, vector<16x16xbf16>, vector<16x16xf32> -> vector<16x16xf32>
    %116 = arith.truncf %115 : vector<16x16xf32> to vector<16x16xbf16>
    %c5_102 = arith.constant 5 : index
    %c0_103 = arith.constant 0 : index
    %c0_104 = arith.constant 0 : index
    %117 = vector.load %arg12[%c5_102, %c0_103, %c0_104] : memref<9x16x16xbf16, #tpu.memory_space<vmem>>, vector<1x16x16xbf16>
    %118 = vector.shape_cast %117 : vector<1x16x16xbf16> to vector<16x16xbf16>
    %cst_105 = arith.constant dense<0.000000e+00> : vector<16x16xf32>
    %119 = tpu.matmul %54, %118, %cst_105 {dimension_numbers = #tpu.dot_dimension_numbers<[1], [0], [0], [1], [0, 0, 1, 1], [], []>} : vector<16x16xbf16>, vector<16x16xbf16>, vector<16x16xf32> -> vector<16x16xf32>
    %120 = arith.truncf %119 : vector<16x16xf32> to vector<16x16xbf16>
    %c6_106 = arith.constant 6 : index
    %c0_107 = arith.constant 0 : index
    %c0_108 = arith.constant 0 : index
    %121 = vector.load %arg12[%c6_106, %c0_107, %c0_108] : memref<9x16x16xbf16, #tpu.memory_space<vmem>>, vector<1x16x16xbf16>
    %122 = vector.shape_cast %121 : vector<1x16x16xbf16> to vector<16x16xbf16>
    %cst_109 = arith.constant dense<0.000000e+00> : vector<16x16xf32>
    %123 = tpu.matmul %54, %122, %cst_109 {dimension_numbers = #tpu.dot_dimension_numbers<[1], [0], [0], [1], [0, 0, 1, 1], [], []>} : vector<16x16xbf16>, vector<16x16xbf16>, vector<16x16xf32> -> vector<16x16xf32>
    %124 = arith.truncf %123 : vector<16x16xf32> to vector<16x16xbf16>
    %c7_110 = arith.constant 7 : index
    %c0_111 = arith.constant 0 : index
    %c0_112 = arith.constant 0 : index
    %125 = vector.load %arg12[%c7_110, %c0_111, %c0_112] : memref<9x16x16xbf16, #tpu.memory_space<vmem>>, vector<1x16x16xbf16>
    %126 = vector.shape_cast %125 : vector<1x16x16xbf16> to vector<16x16xbf16>
    %cst_113 = arith.constant dense<0.000000e+00> : vector<16x16xf32>
    %127 = tpu.matmul %54, %126, %cst_113 {dimension_numbers = #tpu.dot_dimension_numbers<[1], [0], [0], [1], [0, 0, 1, 1], [], []>} : vector<16x16xbf16>, vector<16x16xbf16>, vector<16x16xf32> -> vector<16x16xf32>
    %128 = arith.truncf %127 : vector<16x16xf32> to vector<16x16xbf16>
    %c8_114 = arith.constant 8 : index
    %c0_115 = arith.constant 0 : index
    %c0_116 = arith.constant 0 : index
    %129 = vector.load %arg12[%c8_114, %c0_115, %c0_116] : memref<9x16x16xbf16, #tpu.memory_space<vmem>>, vector<1x16x16xbf16>
    %130 = vector.shape_cast %129 : vector<1x16x16xbf16> to vector<16x16xbf16>
    %cst_117 = arith.constant dense<0.000000e+00> : vector<16x16xf32>
    %131 = tpu.matmul %54, %130, %cst_117 {dimension_numbers = #tpu.dot_dimension_numbers<[1], [0], [0], [1], [0, 0, 1, 1], [], []>} : vector<16x16xbf16>, vector<16x16xbf16>, vector<16x16xf32> -> vector<16x16xf32>
    %132 = arith.truncf %131 : vector<16x16xf32> to vector<16x16xbf16>
    %133 = tpu.concatenate %100, %104, %108, %112, %116, %120, %124, %128, %132 in 0 : vector<16x16xbf16>, vector<16x16xbf16>, vector<16x16xbf16>, vector<16x16xbf16>, vector<16x16xbf16>, vector<16x16xbf16>, vector<16x16xbf16>, vector<16x16xbf16>, vector<16x16xbf16> -> vector<144x16xbf16>
    %c0_118 = arith.constant 0 : index
    %c0_119 = arith.constant 0 : index
    %134 = vector.load %arg10[%c0_118, %c0_119] : memref<18x144xbf16, #tpu.memory_space<vmem>>, vector<18x144xbf16>
    %cst_120 = arith.constant dense<0.000000e+00> : vector<18x16xf32>
    %135 = tpu.matmul %134, %133, %cst_120 {dimension_numbers = #tpu.dot_dimension_numbers<[1], [0], [0], [1], [0, 0, 1, 1], [], []>} : vector<18x144xbf16>, vector<144x16xbf16>, vector<18x16xf32> -> vector<18x16xf32>
    %c0_121 = arith.constant 0 : index
    %c0_122 = arith.constant 0 : index
    %136 = vector.load %arg11[%c0_121, %c0_122] : memref<18x1xf32, #tpu.memory_space<vmem>>, vector<18x1xf32>
    %137 = vector.broadcast %136 : vector<18x1xf32> to vector<18x16xf32>
    %138 = arith.addf %135, %137 : vector<18x16xf32>
    %139 = tpu.concatenate %96, %138 in 1 : vector<18x64xf32>, vector<18x16xf32> -> vector<18x80xf32>
    %c0_123 = arith.constant 0 : index
    %c0_124 = arith.constant 0 : index
    %140 = vector.load %arg13[%c0_123, %c0_124] : memref<8x80xf32, #tpu.memory_space<vmem>>, vector<8x80xf32>
    %141 = vector.extract_strided_slice %139 {offsets = [0, 0], sizes = [5, 80], strides = [1, 1]} : vector<18x80xf32> to vector<5x80xf32>
    %cst_125 = arith.constant dense<0xFF800000> : vector<80xf32>
    %142 = vector.multi_reduction <maximumf>, %141, %cst_125 [0] : vector<5x80xf32> to vector<80xf32>
    %143 = vector.shape_cast %142 : vector<80xf32> to vector<1x80xf32>
    %144 = vector.broadcast %143 : vector<1x80xf32> to vector<5x80xf32>
    %145 = arith.subf %141, %144 : vector<5x80xf32>
    %146 = math.exp %145 : vector<5x80xf32>
    %cst_126 = arith.constant dense<0.000000e+00> : vector<80xf32>
    %147 = vector.multi_reduction <add>, %146, %cst_126 [0] : vector<5x80xf32> to vector<80xf32>
    %148 = vector.shape_cast %147 : vector<80xf32> to vector<1x80xf32>
    %149 = tpu.reciprocal %148 {approx = true} : vector<1x80xf32> -> vector<1x80xf32>
    %150 = vector.extract_strided_slice %146 {offsets = [0, 0], sizes = [4, 80], strides = [1, 1]} : vector<5x80xf32> to vector<4x80xf32>
    %151 = vector.broadcast %149 : vector<1x80xf32> to vector<4x80xf32>
    %152 = arith.mulf %150, %151 : vector<4x80xf32>
    %153 = vector.extract_strided_slice %139 {offsets = [10, 0], sizes = [4, 80], strides = [1, 1]} : vector<18x80xf32> to vector<4x80xf32>
    %154 = vector.extract_strided_slice %140 {offsets = [0, 0], sizes = [4, 80], strides = [1, 1]} : vector<8x80xf32> to vector<4x80xf32>
    %155 = vector.extract_strided_slice %154 {offsets = [0, 0], sizes = [1, 80], strides = [1, 1]} : vector<4x80xf32> to vector<1x80xf32>
    %156 = vector.extract_strided_slice %154 {offsets = [2, 0], sizes = [1, 80], strides = [1, 1]} : vector<4x80xf32> to vector<1x80xf32>
    %157 = arith.addf %155, %156 : vector<1x80xf32>
    %cst_127 = arith.constant 5.000000e-01 : f32
    %158 = vector.broadcast %cst_127 : f32 to vector<1x80xf32>
    %159 = arith.mulf %157, %158 : vector<1x80xf32>
    %160 = vector.extract_strided_slice %154 {offsets = [1, 0], sizes = [1, 80], strides = [1, 1]} : vector<4x80xf32> to vector<1x80xf32>
    %161 = vector.extract_strided_slice %154 {offsets = [3, 0], sizes = [1, 80], strides = [1, 1]} : vector<4x80xf32> to vector<1x80xf32>
    %162 = arith.addf %160, %161 : vector<1x80xf32>
    %cst_128 = arith.constant 5.000000e-01 : f32
    %163 = vector.broadcast %cst_128 : f32 to vector<1x80xf32>
    %164 = arith.mulf %162, %163 : vector<1x80xf32>
    %165 = vector.extract_strided_slice %154 {offsets = [2, 0], sizes = [1, 80], strides = [1, 1]} : vector<4x80xf32> to vector<1x80xf32>
    %166 = vector.extract_strided_slice %154 {offsets = [0, 0], sizes = [1, 80], strides = [1, 1]} : vector<4x80xf32> to vector<1x80xf32>
    %167 = arith.subf %165, %166 : vector<1x80xf32>
    %168 = vector.extract_strided_slice %154 {offsets = [3, 0], sizes = [1, 80], strides = [1, 1]} : vector<4x80xf32> to vector<1x80xf32>
    %169 = vector.extract_strided_slice %154 {offsets = [1, 0], sizes = [1, 80], strides = [1, 1]} : vector<4x80xf32> to vector<1x80xf32>
    %170 = arith.subf %168, %169 : vector<1x80xf32>
    %171 = vector.extract_strided_slice %153 {offsets = [0, 0], sizes = [1, 80], strides = [1, 1]} : vector<4x80xf32> to vector<1x80xf32>
    %cst_129 = arith.constant 1.000000e-01 : f32
    %172 = vector.broadcast %cst_129 : f32 to vector<1x80xf32>
    %173 = arith.mulf %171, %172 : vector<1x80xf32>
    %174 = vector.extract_strided_slice %153 {offsets = [1, 0], sizes = [1, 80], strides = [1, 1]} : vector<4x80xf32> to vector<1x80xf32>
    %cst_130 = arith.constant 1.000000e-01 : f32
    %175 = vector.broadcast %cst_130 : f32 to vector<1x80xf32>
    %176 = arith.mulf %174, %175 : vector<1x80xf32>
    %177 = vector.extract_strided_slice %153 {offsets = [2, 0], sizes = [1, 80], strides = [1, 1]} : vector<4x80xf32> to vector<1x80xf32>
    %cst_131 = arith.constant 2.000000e-01 : f32
    %178 = vector.broadcast %cst_131 : f32 to vector<1x80xf32>
    %179 = arith.mulf %177, %178 : vector<1x80xf32>
    %cst_132 = arith.constant -4.13516665 : f32
    %cst_133 = arith.constant 4.13516665 : f32
    %180 = vector.broadcast %cst_132 : f32 to vector<1x80xf32>
    %181 = arith.maximumf %180, %179 : vector<1x80xf32>
    %182 = vector.broadcast %cst_133 : f32 to vector<1x80xf32>
    %183 = arith.minimumf %182, %181 : vector<1x80xf32>
    %184 = vector.extract_strided_slice %153 {offsets = [3, 0], sizes = [1, 80], strides = [1, 1]} : vector<4x80xf32> to vector<1x80xf32>
    %cst_134 = arith.constant 2.000000e-01 : f32
    %185 = vector.broadcast %cst_134 : f32 to vector<1x80xf32>
    %186 = arith.mulf %184, %185 : vector<1x80xf32>
    %cst_135 = arith.constant -4.13516665 : f32
    %cst_136 = arith.constant 4.13516665 : f32
    %187 = vector.broadcast %cst_135 : f32 to vector<1x80xf32>
    %188 = arith.maximumf %187, %186 : vector<1x80xf32>
    %189 = vector.broadcast %cst_136 : f32 to vector<1x80xf32>
    %190 = arith.minimumf %189, %188 : vector<1x80xf32>
    %191 = arith.mulf %167, %173 : vector<1x80xf32>
    %192 = arith.addf %159, %191 : vector<1x80xf32>
    %193 = arith.mulf %170, %176 : vector<1x80xf32>
    %194 = arith.addf %164, %193 : vector<1x80xf32>
    %195 = math.exp %183 : vector<1x80xf32>
    %196 = arith.mulf %167, %195 : vector<1x80xf32>
    %197 = math.exp %190 : vector<1x80xf32>
    %198 = arith.mulf %170, %197 : vector<1x80xf32>
    %cst_137 = arith.constant 5.000000e-01 : f32
    %199 = vector.broadcast %cst_137 : f32 to vector<1x80xf32>
    %200 = arith.mulf %196, %199 : vector<1x80xf32>
    %201 = arith.subf %192, %200 : vector<1x80xf32>
    %cst_138 = arith.constant 0.000000e+00 : f32
    %cst_139 = arith.constant 3.200000e+01 : f32
    %202 = vector.broadcast %cst_138 : f32 to vector<1x80xf32>
    %203 = arith.maximumf %202, %201 : vector<1x80xf32>
    %204 = vector.broadcast %cst_139 : f32 to vector<1x80xf32>
    %205 = arith.minimumf %204, %203 : vector<1x80xf32>
    %cst_140 = arith.constant 2.000000e+00 : f32
    %206 = vector.broadcast %cst_140 : f32 to vector<1x80xf32>
    %207 = arith.mulf %205, %206 : vector<1x80xf32>
    %cst_141 = arith.constant 5.000000e-01 : f32
    %208 = vector.broadcast %cst_141 : f32 to vector<1x80xf32>
    %209 = arith.mulf %198, %208 : vector<1x80xf32>
    %210 = arith.subf %194, %209 : vector<1x80xf32>
    %cst_142 = arith.constant 0.000000e+00 : f32
    %cst_143 = arith.constant 3.200000e+01 : f32
    %211 = vector.broadcast %cst_142 : f32 to vector<1x80xf32>
    %212 = arith.maximumf %211, %210 : vector<1x80xf32>
    %213 = vector.broadcast %cst_143 : f32 to vector<1x80xf32>
    %214 = arith.minimumf %213, %212 : vector<1x80xf32>
    %cst_144 = arith.constant 2.000000e+00 : f32
    %215 = vector.broadcast %cst_144 : f32 to vector<1x80xf32>
    %216 = arith.mulf %214, %215 : vector<1x80xf32>
    %cst_145 = arith.constant 5.000000e-01 : f32
    %217 = vector.broadcast %cst_145 : f32 to vector<1x80xf32>
    %218 = arith.mulf %196, %217 : vector<1x80xf32>
    %219 = arith.addf %192, %218 : vector<1x80xf32>
    %cst_146 = arith.constant 0.000000e+00 : f32
    %cst_147 = arith.constant 3.200000e+01 : f32
    %220 = vector.broadcast %cst_146 : f32 to vector<1x80xf32>
    %221 = arith.maximumf %220, %219 : vector<1x80xf32>
    %222 = vector.broadcast %cst_147 : f32 to vector<1x80xf32>
    %223 = arith.minimumf %222, %221 : vector<1x80xf32>
    %cst_148 = arith.constant 2.000000e+00 : f32
    %224 = vector.broadcast %cst_148 : f32 to vector<1x80xf32>
    %225 = arith.mulf %223, %224 : vector<1x80xf32>
    %cst_149 = arith.constant 5.000000e-01 : f32
    %226 = vector.broadcast %cst_149 : f32 to vector<1x80xf32>
    %227 = arith.mulf %198, %226 : vector<1x80xf32>
    %228 = arith.addf %194, %227 : vector<1x80xf32>
    %cst_150 = arith.constant 0.000000e+00 : f32
    %cst_151 = arith.constant 3.200000e+01 : f32
    %229 = vector.broadcast %cst_150 : f32 to vector<1x80xf32>
    %230 = arith.maximumf %229, %228 : vector<1x80xf32>
    %231 = vector.broadcast %cst_151 : f32 to vector<1x80xf32>
    %232 = arith.minimumf %231, %230 : vector<1x80xf32>
    %cst_152 = arith.constant 2.000000e+00 : f32
    %233 = vector.broadcast %cst_152 : f32 to vector<1x80xf32>
    %234 = arith.mulf %232, %233 : vector<1x80xf32>
    %235 = tpu.concatenate %207, %216, %225, %234 in 0 : vector<1x80xf32>, vector<1x80xf32>, vector<1x80xf32>, vector<1x80xf32> -> vector<4x80xf32>
    %236 = vector.extract_strided_slice %139 {offsets = [5, 0], sizes = [5, 80], strides = [1, 1]} : vector<18x80xf32> to vector<5x80xf32>
    %cst_153 = arith.constant dense<0xFF800000> : vector<80xf32>
    %237 = vector.multi_reduction <maximumf>, %236, %cst_153 [0] : vector<5x80xf32> to vector<80xf32>
    %238 = vector.shape_cast %237 : vector<80xf32> to vector<1x80xf32>
    %239 = vector.broadcast %238 : vector<1x80xf32> to vector<5x80xf32>
    %240 = arith.subf %236, %239 : vector<5x80xf32>
    %241 = math.exp %240 : vector<5x80xf32>
    %cst_154 = arith.constant dense<0.000000e+00> : vector<80xf32>
    %242 = vector.multi_reduction <add>, %241, %cst_154 [0] : vector<5x80xf32> to vector<80xf32>
    %243 = vector.shape_cast %242 : vector<80xf32> to vector<1x80xf32>
    %244 = tpu.reciprocal %243 {approx = true} : vector<1x80xf32> -> vector<1x80xf32>
    %245 = vector.extract_strided_slice %241 {offsets = [0, 0], sizes = [4, 80], strides = [1, 1]} : vector<5x80xf32> to vector<4x80xf32>
    %246 = vector.broadcast %244 : vector<1x80xf32> to vector<4x80xf32>
    %247 = arith.mulf %245, %246 : vector<4x80xf32>
    %248 = vector.extract_strided_slice %139 {offsets = [14, 0], sizes = [4, 80], strides = [1, 1]} : vector<18x80xf32> to vector<4x80xf32>
    %249 = vector.extract_strided_slice %140 {offsets = [4, 0], sizes = [4, 80], strides = [1, 1]} : vector<8x80xf32> to vector<4x80xf32>
    %250 = vector.extract_strided_slice %249 {offsets = [0, 0], sizes = [1, 80], strides = [1, 1]} : vector<4x80xf32> to vector<1x80xf32>
    %251 = vector.extract_strided_slice %249 {offsets = [2, 0], sizes = [1, 80], strides = [1, 1]} : vector<4x80xf32> to vector<1x80xf32>
    %252 = arith.addf %250, %251 : vector<1x80xf32>
    %cst_155 = arith.constant 5.000000e-01 : f32
    %253 = vector.broadcast %cst_155 : f32 to vector<1x80xf32>
    %254 = arith.mulf %252, %253 : vector<1x80xf32>
    %255 = vector.extract_strided_slice %249 {offsets = [1, 0], sizes = [1, 80], strides = [1, 1]} : vector<4x80xf32> to vector<1x80xf32>
    %256 = vector.extract_strided_slice %249 {offsets = [3, 0], sizes = [1, 80], strides = [1, 1]} : vector<4x80xf32> to vector<1x80xf32>
    %257 = arith.addf %255, %256 : vector<1x80xf32>
    %cst_156 = arith.constant 5.000000e-01 : f32
    %258 = vector.broadcast %cst_156 : f32 to vector<1x80xf32>
    %259 = arith.mulf %257, %258 : vector<1x80xf32>
    %260 = vector.extract_strided_slice %249 {offsets = [2, 0], sizes = [1, 80], strides = [1, 1]} : vector<4x80xf32> to vector<1x80xf32>
    %261 = vector.extract_strided_slice %249 {offsets = [0, 0], sizes = [1, 80], strides = [1, 1]} : vector<4x80xf32> to vector<1x80xf32>
    %262 = arith.subf %260, %261 : vector<1x80xf32>
    %263 = vector.extract_strided_slice %249 {offsets = [3, 0], sizes = [1, 80], strides = [1, 1]} : vector<4x80xf32> to vector<1x80xf32>
    %264 = vector.extract_strided_slice %249 {offsets = [1, 0], sizes = [1, 80], strides = [1, 1]} : vector<4x80xf32> to vector<1x80xf32>
    %265 = arith.subf %263, %264 : vector<1x80xf32>
    %266 = vector.extract_strided_slice %248 {offsets = [0, 0], sizes = [1, 80], strides = [1, 1]} : vector<4x80xf32> to vector<1x80xf32>
    %cst_157 = arith.constant 1.000000e-01 : f32
    %267 = vector.broadcast %cst_157 : f32 to vector<1x80xf32>
    %268 = arith.mulf %266, %267 : vector<1x80xf32>
    %269 = vector.extract_strided_slice %248 {offsets = [1, 0], sizes = [1, 80], strides = [1, 1]} : vector<4x80xf32> to vector<1x80xf32>
    %cst_158 = arith.constant 1.000000e-01 : f32
    %270 = vector.broadcast %cst_158 : f32 to vector<1x80xf32>
    %271 = arith.mulf %269, %270 : vector<1x80xf32>
    %272 = vector.extract_strided_slice %248 {offsets = [2, 0], sizes = [1, 80], strides = [1, 1]} : vector<4x80xf32> to vector<1x80xf32>
    %cst_159 = arith.constant 2.000000e-01 : f32
    %273 = vector.broadcast %cst_159 : f32 to vector<1x80xf32>
    %274 = arith.mulf %272, %273 : vector<1x80xf32>
    %cst_160 = arith.constant -4.13516665 : f32
    %cst_161 = arith.constant 4.13516665 : f32
    %275 = vector.broadcast %cst_160 : f32 to vector<1x80xf32>
    %276 = arith.maximumf %275, %274 : vector<1x80xf32>
    %277 = vector.broadcast %cst_161 : f32 to vector<1x80xf32>
    %278 = arith.minimumf %277, %276 : vector<1x80xf32>
    %279 = vector.extract_strided_slice %248 {offsets = [3, 0], sizes = [1, 80], strides = [1, 1]} : vector<4x80xf32> to vector<1x80xf32>
    %cst_162 = arith.constant 2.000000e-01 : f32
    %280 = vector.broadcast %cst_162 : f32 to vector<1x80xf32>
    %281 = arith.mulf %279, %280 : vector<1x80xf32>
    %cst_163 = arith.constant -4.13516665 : f32
    %cst_164 = arith.constant 4.13516665 : f32
    %282 = vector.broadcast %cst_163 : f32 to vector<1x80xf32>
    %283 = arith.maximumf %282, %281 : vector<1x80xf32>
    %284 = vector.broadcast %cst_164 : f32 to vector<1x80xf32>
    %285 = arith.minimumf %284, %283 : vector<1x80xf32>
    %286 = arith.mulf %262, %268 : vector<1x80xf32>
    %287 = arith.addf %254, %286 : vector<1x80xf32>
    %288 = arith.mulf %265, %271 : vector<1x80xf32>
    %289 = arith.addf %259, %288 : vector<1x80xf32>
    %290 = math.exp %278 : vector<1x80xf32>
    %291 = arith.mulf %262, %290 : vector<1x80xf32>
    %292 = math.exp %285 : vector<1x80xf32>
    %293 = arith.mulf %265, %292 : vector<1x80xf32>
    %cst_165 = arith.constant 5.000000e-01 : f32
    %294 = vector.broadcast %cst_165 : f32 to vector<1x80xf32>
    %295 = arith.mulf %291, %294 : vector<1x80xf32>
    %296 = arith.subf %287, %295 : vector<1x80xf32>
    %cst_166 = arith.constant 0.000000e+00 : f32
    %cst_167 = arith.constant 3.200000e+01 : f32
    %297 = vector.broadcast %cst_166 : f32 to vector<1x80xf32>
    %298 = arith.maximumf %297, %296 : vector<1x80xf32>
    %299 = vector.broadcast %cst_167 : f32 to vector<1x80xf32>
    %300 = arith.minimumf %299, %298 : vector<1x80xf32>
    %cst_168 = arith.constant 2.000000e+00 : f32
    %301 = vector.broadcast %cst_168 : f32 to vector<1x80xf32>
    %302 = arith.mulf %300, %301 : vector<1x80xf32>
    %cst_169 = arith.constant 5.000000e-01 : f32
    %303 = vector.broadcast %cst_169 : f32 to vector<1x80xf32>
    %304 = arith.mulf %293, %303 : vector<1x80xf32>
    %305 = arith.subf %289, %304 : vector<1x80xf32>
    %cst_170 = arith.constant 0.000000e+00 : f32
    %cst_171 = arith.constant 3.200000e+01 : f32
    %306 = vector.broadcast %cst_170 : f32 to vector<1x80xf32>
    %307 = arith.maximumf %306, %305 : vector<1x80xf32>
    %308 = vector.broadcast %cst_171 : f32 to vector<1x80xf32>
    %309 = arith.minimumf %308, %307 : vector<1x80xf32>
    %cst_172 = arith.constant 2.000000e+00 : f32
    %310 = vector.broadcast %cst_172 : f32 to vector<1x80xf32>
    %311 = arith.mulf %309, %310 : vector<1x80xf32>
    %cst_173 = arith.constant 5.000000e-01 : f32
    %312 = vector.broadcast %cst_173 : f32 to vector<1x80xf32>
    %313 = arith.mulf %291, %312 : vector<1x80xf32>
    %314 = arith.addf %287, %313 : vector<1x80xf32>
    %cst_174 = arith.constant 0.000000e+00 : f32
    %cst_175 = arith.constant 3.200000e+01 : f32
    %315 = vector.broadcast %cst_174 : f32 to vector<1x80xf32>
    %316 = arith.maximumf %315, %314 : vector<1x80xf32>
    %317 = vector.broadcast %cst_175 : f32 to vector<1x80xf32>
    %318 = arith.minimumf %317, %316 : vector<1x80xf32>
    %cst_176 = arith.constant 2.000000e+00 : f32
    %319 = vector.broadcast %cst_176 : f32 to vector<1x80xf32>
    %320 = arith.mulf %318, %319 : vector<1x80xf32>
    %cst_177 = arith.constant 5.000000e-01 : f32
    %321 = vector.broadcast %cst_177 : f32 to vector<1x80xf32>
    %322 = arith.mulf %293, %321 : vector<1x80xf32>
    %323 = arith.addf %289, %322 : vector<1x80xf32>
    %cst_178 = arith.constant 0.000000e+00 : f32
    %cst_179 = arith.constant 3.200000e+01 : f32
    %324 = vector.broadcast %cst_178 : f32 to vector<1x80xf32>
    %325 = arith.maximumf %324, %323 : vector<1x80xf32>
    %326 = vector.broadcast %cst_179 : f32 to vector<1x80xf32>
    %327 = arith.minimumf %326, %325 : vector<1x80xf32>
    %cst_180 = arith.constant 2.000000e+00 : f32
    %328 = vector.broadcast %cst_180 : f32 to vector<1x80xf32>
    %329 = arith.mulf %327, %328 : vector<1x80xf32>
    %330 = tpu.concatenate %302, %311, %320, %329 in 0 : vector<1x80xf32>, vector<1x80xf32>, vector<1x80xf32>, vector<1x80xf32> -> vector<4x80xf32>
    %331 = tpu.concatenate %235, %330 in 0 : vector<4x80xf32>, vector<4x80xf32> -> vector<8x80xf32>
    %c0_181 = arith.constant 0 : index
    %c0_182 = arith.constant 0 : index
    %c0_183 = arith.constant 0 : index
    %332 = vector.load %arg14[%c0_181, %c0_182, %c0_183] : memref<1x8x80xf32, #tpu.memory_space<vmem>>, vector<1x8x80xf32>
    %333 = vector.shape_cast %332 : vector<1x8x80xf32> to vector<8x80xf32>
    %334 = vector.shape_cast %331 : vector<8x80xf32> to vector<1x8x80xf32>
    tpu.vector_store %arg14[%c0_181, %c0_182, %c0_183], %334 {strides = array<i32>} : memref<1x8x80xf32, #tpu.memory_space<vmem>>, vector<1x8x80xf32>,
    %335 = tpu.concatenate %152, %247 in 0 : vector<4x80xf32>, vector<4x80xf32> -> vector<8x80xf32>
    %c0_184 = arith.constant 0 : index
    %c0_185 = arith.constant 0 : index
    %c0_186 = arith.constant 0 : index
    %336 = vector.load %arg15[%c0_184, %c0_185, %c0_186] : memref<1x8x80xf32, #tpu.memory_space<vmem>>, vector<1x8x80xf32>
    %337 = vector.shape_cast %336 : vector<1x8x80xf32> to vector<8x80xf32>
    %338 = vector.shape_cast %335 : vector<8x80xf32> to vector<1x8x80xf32>
    tpu.vector_store %arg15[%c0_184, %c0_185, %c0_186], %338 {strides = array<i32>} : memref<1x8x80xf32, #tpu.memory_space<vmem>>, vector<1x8x80xf32>,
    return
  }
  func.func @transform_0(%arg0: i32) -> (i32, i32, i32) {
    %c0_i32 = arith.constant 0 : i32
    %c0_i32_0 = arith.constant 0 : i32
    %c0_i32_1 = arith.constant 0 : i32
    return %arg0, %c0_i32, %c0_i32_0 : i32, i32, i32
  }
  func.func @transform_1(%arg0: i32) -> (i32, i32) {
    %c0_i32 = arith.constant 0 : i32
    %c0_i32_0 = arith.constant 0 : i32
    %c0_i32_1 = arith.constant 0 : i32
    return %c0_i32, %c0_i32_0 : i32, i32
  }
  func.func @transform_2(%arg0: i32) -> (i32, i32) {
    %c0_i32 = arith.constant 0 : i32
    %c0_i32_0 = arith.constant 0 : i32
    %c0_i32_1 = arith.constant 0 : i32
    return %c0_i32, %c0_i32_0 : i32, i32
  }
  func.func @transform_3(%arg0: i32) -> (i32, i32) {
    %c0_i32 = arith.constant 0 : i32
    %c0_i32_0 = arith.constant 0 : i32
    %c0_i32_1 = arith.constant 0 : i32
    return %c0_i32, %c0_i32_0 : i32, i32
  }
  func.func @transform_4(%arg0: i32) -> (i32, i32) {
    %c0_i32 = arith.constant 0 : i32
    %c0_i32_0 = arith.constant 0 : i32
    %c0_i32_1 = arith.constant 0 : i32
    return %c0_i32, %c0_i32_0 : i32, i32
  }
  func.func @transform_5(%arg0: i32) -> (i32, i32, i32) {
    %c0_i32 = arith.constant 0 : i32
    %c0_i32_0 = arith.constant 0 : i32
    %c0_i32_1 = arith.constant 0 : i32
    %c0_i32_2 = arith.constant 0 : i32
    return %c0_i32, %c0_i32_0, %c0_i32_1 : i32, i32, i32
  }
  func.func @transform_6(%arg0: i32) -> (i32, i32) {
    %c0_i32 = arith.constant 0 : i32
    %c0_i32_0 = arith.constant 0 : i32
    %c0_i32_1 = arith.constant 0 : i32
    return %c0_i32, %c0_i32_0 : i32, i32
  }
  func.func @transform_7(%arg0: i32) -> (i32, i32) {
    %c0_i32 = arith.constant 0 : i32
    %c0_i32_0 = arith.constant 0 : i32
    %c0_i32_1 = arith.constant 0 : i32
    return %c0_i32, %c0_i32_0 : i32, i32
  }
  func.func @transform_8(%arg0: i32) -> (i32, i32, i32) {
    %c0_i32 = arith.constant 0 : i32
    %c0_i32_0 = arith.constant 0 : i32
    %c0_i32_1 = arith.constant 0 : i32
    %c0_i32_2 = arith.constant 0 : i32
    return %c0_i32, %c0_i32_0, %c0_i32_1 : i32, i32, i32
  }
  func.func @transform_9(%arg0: i32) -> (i32, i32) {
    %c0_i32 = arith.constant 0 : i32
    %c0_i32_0 = arith.constant 0 : i32
    %c0_i32_1 = arith.constant 0 : i32
    return %c0_i32, %c0_i32_0 : i32, i32
  }
  func.func @transform_10(%arg0: i32) -> (i32, i32) {
    %c0_i32 = arith.constant 0 : i32
    %c0_i32_0 = arith.constant 0 : i32
    %c0_i32_1 = arith.constant 0 : i32
    return %c0_i32, %c0_i32_0 : i32, i32
  }
  func.func @transform_11(%arg0: i32) -> (i32, i32, i32) {
    %c0_i32 = arith.constant 0 : i32
    %c0_i32_0 = arith.constant 0 : i32
    %c0_i32_1 = arith.constant 0 : i32
    %c0_i32_2 = arith.constant 0 : i32
    return %c0_i32, %c0_i32_0, %c0_i32_1 : i32, i32, i32
  }
  func.func @transform_12(%arg0: i32) -> (i32, i32) {
    %c0_i32 = arith.constant 0 : i32
    %c0_i32_0 = arith.constant 0 : i32
    %c0_i32_1 = arith.constant 0 : i32
    return %c0_i32, %c0_i32_0 : i32, i32
  }
  func.func @transform_13(%arg0: i32) -> (i32, i32, i32) {
    %c0_i32 = arith.constant 0 : i32
    %c0_i32_0 = arith.constant 0 : i32
    %c0_i32_1 = arith.constant 0 : i32
    return %arg0, %c0_i32, %c0_i32_0 : i32, i32, i32
  }
  func.func @transform_14(%arg0: i32) -> (i32, i32, i32) {
    %c0_i32 = arith.constant 0 : i32
    %c0_i32_0 = arith.constant 0 : i32
    %c0_i32_1 = arith.constant 0 : i32
    return %arg0, %c0_i32, %c0_i32_0 : i32, i32, i32
  }
}

</mosaic_0001>

<llo_original>
// kernel: ssd_r_forward.1
$region0: #{ssd_r_forward.1}
  #allocation0 [shape = 'u32[]', space=smem, size = 0x4, offset = 0x4, fixed_abs, tag = 'smem constant byte address 0x4 - core index']
  #allocation1 [shape = 'u32[144,128]{1,0:T(1,128)}', space=vmem, size = 0x12000, scoped, tag = 'internal scratch']
  %s0 = inlined_call_operand.vmem [shape: bf16[2,32,64], index: 0, kind: input, shape index: {}]
  %s1 = inlined_call_operand.vmem [shape: bf16[16,32], index: 1, kind: input, shape index: {}]
  %s2 = inlined_call_operand.vmem [shape: f32[16,1], index: 2, kind: input, shape index: {}]
  %s3 = inlined_call_operand.vmem [shape: bf16[16,144], index: 3, kind: input, shape index: {}]
  %s4 = inlined_call_operand.vmem [shape: f32[16,1], index: 4, kind: input, shape index: {}]
  %s5 = inlined_call_operand.vmem [shape: bf16[9,64,16], index: 5, kind: input, shape index: {}]
  %s6 = inlined_call_operand.vmem [shape: bf16[18,144], index: 6, kind: input, shape index: {}]
  %s7 = inlined_call_operand.vmem [shape: f32[18,1], index: 7, kind: input, shape index: {}]
  %s8 = inlined_call_operand.vmem [shape: bf16[9,64,64], index: 8, kind: input, shape index: {}]
  %s9 = inlined_call_operand.vmem [shape: bf16[18,144], index: 9, kind: input, shape index: {}]
  %s10 = inlined_call_operand.vmem [shape: f32[18,1], index: 10, kind: input, shape index: {}]
  %s11 = inlined_call_operand.vmem [shape: bf16[9,16,16], index: 11, kind: input, shape index: {}]
  %s12 = inlined_call_operand.vmem [shape: f32[8,80], index: 12, kind: input, shape index: {}]
  %s13 = inlined_call_operand.vmem [shape: f32[2,8,80], index: 13, kind: output, shape index: {0}]
  %s14 = inlined_call_operand.vmem [shape: f32[2,8,80], index: 14, kind: output, shape index: {1}]
  %15 = xla_tuple %s13, %s14
  %s16 = sld [smem:[#allocation0]]
  $region93: #{ssd_r_forward.1} parent=0
    _
  %s18 = ssub.s32 1, %s16
  %s19 = scalar_select 0, %s18, %s16
  loop: start=0, step=1, limit=4
  $region2: #{ssd_r_forward.1} parent=0 // loop_pre_header
    _
  $region3: #{ssd_r_forward.1} parent=0 // loop_header
    %s21 = sphi 0, %s25
    %p22 = scmp.ge.s32.totalorder %s21, 4
    %s31 = sphi 0, %s33
    %s34 = sphi 0, %s31
    %s35 = sphi 0, %s34
    %s51 = sphi 0, %s35
    %s55 = sphi 0, %s55
    %s57 = sphi 0, %s55
    %s58 = sphi 0, %s57
    %s72 = sphi 0, %s58
    %s76 = sphi 0, %s76
    %s78 = sphi 0, %s76
    %s79 = sphi 0, %s78
    %s93 = sphi 0, %s79
    %s97 = sphi 0, %s97
    %s99 = sphi 0, %s97
    %s100 = sphi 0, %s99
    %s114 = sphi 0, %s100
    %s118 = sphi 0, %s118
    %s120 = sphi 0, %s118
    %s121 = sphi 0, %s120
    %s135 = sphi 0, %s121
    %s139 = sphi 0, %s139
    %s141 = sphi 0, %s139
    %s142 = sphi 0, %s141
    %s156 = sphi 0, %s142
    %s160 = sphi 0, %s160
    %s162 = sphi 0, %s160
    %s163 = sphi 0, %s162
    %s177 = sphi 0, %s163
    %s181 = sphi 0, %s181
    %s183 = sphi 0, %s181
    %s184 = sphi 0, %s183
    %s198 = sphi 0, %s184
    %s202 = sphi 0, %s202
    %s204 = sphi 0, %s202
    %s205 = sphi 0, %s204
    %s219 = sphi 0, %s205
    %s223 = sphi 0, %s223
    %s225 = sphi 0, %s223
    %s226 = sphi 0, %s225
    %s240 = sphi 0, %s226
    %s244 = sphi 0, %s244
    %s246 = sphi 0, %s244
    %s247 = sphi 0, %s246
    %s261 = sphi 0, %s247
    %s265 = sphi 0, %s265
    %s267 = sphi 0, %s265
    %s268 = sphi 0, %s267
    %s282 = sphi 0, %s268
    %s286 = sphi 0, %s286
    %s288 = sphi 0, %s286
    %s289 = sphi 0, %s288
    %s303 = sphi 0, %s289
    %s309 = sphi 0, %s311
    %s312 = sphi 0, %s309
    %s313 = sphi 0, %s312
    %s329 = sphi 0, %s313
    %s335 = sphi 0, %s337
    %s338 = sphi 0, %s335
    %s339 = sphi 0, %s338
    %s355 = sphi 0, %s339
  $region4: #{ssd_r_forward.1} parent=0 // loop_header_branch
    %24 = sbr.rel (%p22) target = $region8
  $region5: #{ssd_r_forward.1} parent=0 // loop_body
    %s26 = ssub.s32 %s21, 1
    %s27 = ssub.s32 %s21, 2
    %s28 = sadd.s32 %s21, 1
    %s29 = ssub.s32 %s21, %s28
    %p30 = scmp.eq.s32.totalorder %s29, 0
    %s32 = sadd.s32 %s31, 1
    %s33 = scalar_select %p30, %s31, %s32
    %p36 = pneg %p30
    %p37 = scmp.eq.s32.totalorder %s21, 1
    %p38 = por %p36, %p37
    %p39 = scmp.ne.s32.totalorder %s31, %s34
    %p40 = scmp.eq.s32.totalorder %s21, 0
    %p41 = por %p39, %p40
    %p42 = scmp.ne.s32.totalorder %s31, %s34
    %p43 = scmp.eq.s32.totalorder %s26, 1
    %p44 = por %p42, %p43
    %p45 = scmp.ne.s32.totalorder %s34, %s35
    %p46 = scmp.eq.s32.totalorder %s26, 0
    %p47 = por %p45, %p46
    %p48 = scmp.ne.s32.totalorder %s34, %s35
    %p49 = scmp.eq.s32.totalorder %s27, 1
    %p50 = por %p48, %p49
    %p52 = scmp.ne.s32.totalorder %s35, %s51
    %p53 = scmp.eq.s32.totalorder %s27, 0
    %p54 = por %p52, %p53
    %s56 = sadd.s32 %s55, 1
    %p59 = scmp.eq.s32.totalorder %s21, 1
    %p60 = scmp.ne.s32.totalorder %s55, %s57
    %p61 = scmp.eq.s32.totalorder %s21, 0
    %p62 = por %p60, %p61
    %p63 = scmp.ne.s32.totalorder %s55, %s57
    %p64 = scmp.eq.s32.totalorder %s26, 1
    %p65 = por %p63, %p64
    %p66 = scmp.ne.s32.totalorder %s57, %s58
    %p67 = scmp.eq.s32.totalorder %s26, 0
    %p68 = por %p66, %p67
    %p69 = scmp.ne.s32.totalorder %s57, %s58
    %p70 = scmp.eq.s32.totalorder %s27, 1
    %p71 = por %p69, %p70
    %p73 = scmp.ne.s32.totalorder %s58, %s72
    %p74 = scmp.eq.s32.totalorder %s27, 0
    %p75 = por %p73, %p74
    %s77 = sadd.s32 %s76, 1
    %p80 = scmp.eq.s32.totalorder %s21, 1
    %p81 = scmp.ne.s32.totalorder %s76, %s78
    %p82 = scmp.eq.s32.totalorder %s21, 0
    %p83 = por %p81, %p82
    %p84 = scmp.ne.s32.totalorder %s76, %s78
    %p85 = scmp.eq.s32.totalorder %s26, 1
    %p86 = por %p84, %p85
    %p87 = scmp.ne.s32.totalorder %s78, %s79
    %p88 = scmp.eq.s32.totalorder %s26, 0
    %p89 = por %p87, %p88
    %p90 = scmp.ne.s32.totalorder %s78, %s79
    %p91 = scmp.eq.s32.totalorder %s27, 1
    %p92 = por %p90, %p91
    %p94 = scmp.ne.s32.totalorder %s79, %s93
    %p95 = scmp.eq.s32.totalorder %s27, 0
    %p96 = por %p94, %p95
    %s98 = sadd.s32 %s97, 1
    %p101 = scmp.eq.s32.totalorder %s21, 1
    %p102 = scmp.ne.s32.totalorder %s97, %s99
    %p103 = scmp.eq.s32.totalorder %s21, 0
    %p104 = por %p102, %p103
    %p105 = scmp.ne.s32.totalorder %s97, %s99
    %p106 = scmp.eq.s32.totalorder %s26, 1
    %p107 = por %p105, %p106
    %p108 = scmp.ne.s32.totalorder %s99, %s100
    %p109 = scmp.eq.s32.totalorder %s26, 0
    %p110 = por %p108, %p109
    %p111 = scmp.ne.s32.totalorder %s99, %s100
    %p112 = scmp.eq.s32.totalorder %s27, 1
    %p113 = por %p111, %p112
    %p115 = scmp.ne.s32.totalorder %s100, %s114
    %p116 = scmp.eq.s32.totalorder %s27, 0
    %p117 = por %p115, %p116
    %s119 = sadd.s32 %s118, 1
    %p122 = scmp.eq.s32.totalorder %s21, 1
    %p123 = scmp.ne.s32.totalorder %s118, %s120
    %p124 = scmp.eq.s32.totalorder %s21, 0
    %p125 = por %p123, %p124
    %p126 = scmp.ne.s32.totalorder %s118, %s120
    %p127 = scmp.eq.s32.totalorder %s26, 1
    %p128 = por %p126, %p127
    %p129 = scmp.ne.s32.totalorder %s120, %s121
    %p130 = scmp.eq.s32.totalorder %s26, 0
    %p131 = por %p129, %p130
    %p132 = scmp.ne.s32.totalorder %s120, %s121
    %p133 = scmp.eq.s32.totalorder %s27, 1
    %p134 = por %p132, %p133
    %p136 = scmp.ne.s32.totalorder %s121, %s135
    %p137 = scmp.eq.s32.totalorder %s27, 0
    %p138 = por %p136, %p137
    %s140 = sadd.s32 %s139, 1
    %p143 = scmp.eq.s32.totalorder %s21, 1
    %p144 = scmp.ne.s32.totalorder %s139, %s141
    %p145 = scmp.eq.s32.totalorder %s21, 0
    %p146 = por %p144, %p145
    %p147 = scmp.ne.s32.totalorder %s139, %s141
    %p148 = scmp.eq.s32.totalorder %s26, 1
    %p149 = por %p147, %p148
    %p150 = scmp.ne.s32.totalorder %s141, %s142
    %p151 = scmp.eq.s32.totalorder %s26, 0
    %p152 = por %p150, %p151
    %p153 = scmp.ne.s32.totalorder %s141, %s142
    %p154 = scmp.eq.s32.totalorder %s27, 1
    %p155 = por %p153, %p154
    %p157 = scmp.ne.s32.totalorder %s142, %s156
    %p158 = scmp.eq.s32.totalorder %s27, 0
    %p159 = por %p157, %p158
    %s161 = sadd.s32 %s160, 1
    %p164 = scmp.eq.s32.totalorder %s21, 1
    %p165 = scmp.ne.s32.totalorder %s160, %s162
    %p166 = scmp.eq.s32.totalorder %s21, 0
    %p167 = por %p165, %p166
    %p168 = scmp.ne.s32.totalorder %s160, %s162
    %p169 = scmp.eq.s32.totalorder %s26, 1
    %p170 = por %p168, %p169
    %p171 = scmp.ne.s32.totalorder %s162, %s163
    %p172 = scmp.eq.s32.totalorder %s26, 0
    %p173 = por %p171, %p172
    %p174 = scmp.ne.s32.totalorder %s162, %s163
    %p175 = scmp.eq.s32.totalorder %s27, 1
    %p176 = por %p174, %p175
    %p178 = scmp.ne.s32.totalorder %s163, %s177
    %p179 = scmp.eq.s32.totalorder %s27, 0
    %p180 = por %p178, %p179
    %s182 = sadd.s32 %s181, 1
    %p185 = scmp.eq.s32.totalorder %s21, 1
    %p186 = scmp.ne.s32.totalorder %s181, %s183
    %p187 = scmp.eq.s32.totalorder %s21, 0
    %p188 = por %p186, %p187
    %p189 = scmp.ne.s32.totalorder %s181, %s183
    %p190 = scmp.eq.s32.totalorder %s26, 1
    %p191 = por %p189, %p190
    %p192 = scmp.ne.s32.totalorder %s183, %s184
    %p193 = scmp.eq.s32.totalorder %s26, 0
    %p194 = por %p192, %p193
    %p195 = scmp.ne.s32.totalorder %s183, %s184
    %p196 = scmp.eq.s32.totalorder %s27, 1
    %p197 = por %p195, %p196
    %p199 = scmp.ne.s32.totalorder %s184, %s198
    %p200 = scmp.eq.s32.totalorder %s27, 0
    %p201 = por %p199, %p200
    %s203 = sadd.s32 %s202, 1
    %p206 = scmp.eq.s32.totalorder %s21, 1
    %p207 = scmp.ne.s32.totalorder %s202, %s204
    %p208 = scmp.eq.s32.totalorder %s21, 0
    %p209 = por %p207, %p208
    %p210 = scmp.ne.s32.totalorder %s202, %s204
    %p211 = scmp.eq.s32.totalorder %s26, 1
    %p212 = por %p210, %p211
    %p213 = scmp.ne.s32.totalorder %s204, %s205
    %p214 = scmp.eq.s32.totalorder %s26, 0
    %p215 = por %p213, %p214
    %p216 = scmp.ne.s32.totalorder %s204, %s205
    %p217 = scmp.eq.s32.totalorder %s27, 1
    %p218 = por %p216, %p217
    %p220 = scmp.ne.s32.totalorder %s205, %s219
    %p221 = scmp.eq.s32.totalorder %s27, 0
    %p222 = por %p220, %p221
    %s224 = sadd.s32 %s223, 1
    %p227 = scmp.eq.s32.totalorder %s21, 1
    %p228 = scmp.ne.s32.totalorder %s223, %s225
    %p229 = scmp.eq.s32.totalorder %s21, 0
    %p230 = por %p228, %p229
    %p231 = scmp.ne.s32.totalorder %s223, %s225
    %p232 = scmp.eq.s32.totalorder %s26, 1
    %p233 = por %p231, %p232
    %p234 = scmp.ne.s32.totalorder %s225, %s226
    %p235 = scmp.eq.s32.totalorder %s26, 0
    %p236 = por %p234, %p235
    %p237 = scmp.ne.s32.totalorder %s225, %s226
    %p238 = scmp.eq.s32.totalorder %s27, 1
    %p239 = por %p237, %p238
    %p241 = scmp.ne.s32.totalorder %s226, %s240
    %p242 = scmp.eq.s32.totalorder %s27, 0
    %p243 = por %p241, %p242
    %s245 = sadd.s32 %s244, 1
    %p248 = scmp.eq.s32.totalorder %s21, 1
    %p249 = scmp.ne.s32.totalorder %s244, %s246
    %p250 = scmp.eq.s32.totalorder %s21, 0
    %p251 = por %p249, %p250
    %p252 = scmp.ne.s32.totalorder %s244, %s246
    %p253 = scmp.eq.s32.totalorder %s26, 1
    %p254 = por %p252, %p253
    %p255 = scmp.ne.s32.totalorder %s246, %s247
    %p256 = scmp.eq.s32.totalorder %s26, 0
    %p257 = por %p255, %p256
    %p258 = scmp.ne.s32.totalorder %s246, %s247
    %p259 = scmp.eq.s32.totalorder %s27, 1
    %p260 = por %p258, %p259
    %p262 = scmp.ne.s32.totalorder %s247, %s261
    %p263 = scmp.eq.s32.totalorder %s27, 0
    %p264 = por %p262, %p263
    %s266 = sadd.s32 %s265, 1
    %p269 = scmp.eq.s32.totalorder %s21, 1
    %p270 = scmp.ne.s32.totalorder %s265, %s267
    %p271 = scmp.eq.s32.totalorder %s21, 0
    %p272 = por %p270, %p271
    %p273 = scmp.ne.s32.totalorder %s265, %s267
    %p274 = scmp.eq.s32.totalorder %s26, 1
    %p275 = por %p273, %p274
    %p276 = scmp.ne.s32.totalorder %s267, %s268
    %p277 = scmp.eq.s32.totalorder %s26, 0
    %p278 = por %p276, %p277
    %p279 = scmp.ne.s32.totalorder %s267, %s268
    %p280 = scmp.eq.s32.totalorder %s27, 1
    %p281 = por %p279, %p280
    %p283 = scmp.ne.s32.totalorder %s268, %s282
    %p284 = scmp.eq.s32.totalorder %s27, 0
    %p285 = por %p283, %p284
    %s287 = sadd.s32 %s286, 1
    %p290 = scmp.eq.s32.totalorder %s21, 1
    %p291 = scmp.ne.s32.totalorder %s286, %s288
    %p292 = scmp.eq.s32.totalorder %s21, 0
    %p293 = por %p291, %p292
    %p294 = scmp.ne.s32.totalorder %s286, %s288
    %p295 = scmp.eq.s32.totalorder %s26, 1
    %p296 = por %p294, %p295
    %p297 = scmp.ne.s32.totalorder %s288, %s289
    %p298 = scmp.eq.s32.totalorder %s26, 0
    %p299 = por %p297, %p298
    %p300 = scmp.ne.s32.totalorder %s288, %s289
    %p301 = scmp.eq.s32.totalorder %s27, 1
    %p302 = por %p300, %p301
    %p304 = scmp.ne.s32.totalorder %s289, %s303
    %p305 = scmp.eq.s32.totalorder %s27, 0
    %p306 = por %p304, %p305
    %s307 = ssub.s32 %s21, %s28
    %p308 = scmp.eq.s32.totalorder %s307, 0
    %s310 = sadd.s32 %s309, 1
    %s311 = scalar_select %p308, %s309, %s310
    %p314 = pneg %p308
    %p315 = scmp.eq.s32.totalorder %s21, 1
    %p316 = por %p314, %p315
    %p317 = scmp.ne.s32.totalorder %s309, %s312
    %p318 = scmp.eq.s32.totalorder %s21, 0
    %p319 = por %p317, %p318
    %p320 = scmp.ne.s32.totalorder %s309, %s312
    %p321 = scmp.eq.s32.totalorder %s26, 1
    %p322 = por %p320, %p321
    %p323 = scmp.ne.s32.totalorder %s312, %s313
    %p324 = scmp.eq.s32.totalorder %s26, 0
    %p325 = por %p323, %p324
    %p326 = scmp.ne.s32.totalorder %s312, %s313
    %p327 = scmp.eq.s32.totalorder %s27, 1
    %p328 = por %p326, %p327
    %p330 = scmp.ne.s32.totalorder %s313, %s329
    %p331 = scmp.eq.s32.totalorder %s27, 0
    %p332 = por %p330, %p331
    %s333 = ssub.s32 %s21, %s28
    %p334 = scmp.eq.s32.totalorder %s333, 0
    %s336 = sadd.s32 %s335, 1
    %s337 = scalar_select %p334, %s335, %s336
    %p340 = pneg %p334
    %p341 = scmp.eq.s32.totalorder %s21, 1
    %p342 = por %p340, %p341
    %p343 = scmp.ne.s32.totalorder %s335, %s338
    %p344 = scmp.eq.s32.totalorder %s21, 0
    %p345 = por %p343, %p344
    %p346 = scmp.ne.s32.totalorder %s335, %s338
    %p347 = scmp.eq.s32.totalorder %s26, 1
    %p348 = por %p346, %p347
    %p349 = scmp.ne.s32.totalorder %s338, %s339
    %p350 = scmp.eq.s32.totalorder %s26, 0
    %p351 = por %p349, %p350
    %p352 = scmp.ne.s32.totalorder %s338, %s339
    %p353 = scmp.eq.s32.totalorder %s27, 1
    %p354 = por %p352, %p353
    %p356 = scmp.ne.s32.totalorder %s339, %s355
    %p357 = scmp.eq.s32.totalorder %s27, 0
    %p358 = por %p356, %p357
    %p359 = scmp.le.s32.totalorder 1, %s21
    %p360 = scmp.lt.s32.totalorder %s21, 3
    %p361 = pnand %p359, %p360
    %p362 = pneg %p361
    // Predicated region
    $region9: #{ssd_r_forward.1} parent=5 // pred_check
      _
    $region10: #{ssd_r_forward.1} parent=5 // pred_check_branch
      %364 = sbr.rel (%p361) target = $region12
    $region11: #{ssd_r_forward.1} parent=5 // pred_region
      %s365 = ssub.s32 %s21, 1
      // Predicated region
      $region13: #{ssd_r_forward.1} parent=11 // pred_check
        %p366 = pneg %p68
      $region14: #{ssd_r_forward.1} parent=11 // pred_check_branch
        %368 = sbr.rel (%p366) target = $region16
      $region15: #{ssd_r_forward.1} parent=11 // pred_region
        _
      $region16: #{ssd_r_forward.1} parent=11 // pred_fallthru
        _
      // Predicated region
      $region17: #{ssd_r_forward.1} parent=11 // pred_check
        %p369 = pneg %p89
      $region18: #{ssd_r_forward.1} parent=11 // pred_check_branch
        %371 = sbr.rel (%p369) target = $region20
      $region19: #{ssd_r_forward.1} parent=11 // pred_region
        _
      $region20: #{ssd_r_forward.1} parent=11 // pred_fallthru
        _
      // Predicated region
      $region21: #{ssd_r_forward.1} parent=11 // pred_check
        %p372 = pneg %p110
      $region22: #{ssd_r_forward.1} parent=11 // pred_check_branch
        %374 = sbr.rel (%p372) target = $region24
      $region23: #{ssd_r_forward.1} parent=11 // pred_region
        _
      $region24: #{ssd_r_forward.1} parent=11 // pred_fallthru
        _
      // Predicated region
      $region25: #{ssd_r_forward.1} parent=11 // pred_check
        %p375 = pneg %p131
      $region26: #{ssd_r_forward.1} parent=11 // pred_check_branch
        %377 = sbr.rel (%p375) target = $region28
      $region27: #{ssd_r_forward.1} parent=11 // pred_region
        _
      $region28: #{ssd_r_forward.1} parent=11 // pred_fallthru
        _
      // Predicated region
      $region29: #{ssd_r_forward.1} parent=11 // pred_check
        %p378 = pneg %p152
      $region30: #{ssd_r_forward.1} parent=11 // pred_check_branch
        %380 = sbr.rel (%p378) target = $region32
      $region31: #{ssd_r_forward.1} parent=11 // pred_region
        _
      $region32: #{ssd_r_forward.1} parent=11 // pred_fallthru
        _
      // Predicated region
      $region33: #{ssd_r_forward.1} parent=11 // pred_check
        %p381 = pneg %p173
      $region34: #{ssd_r_forward.1} parent=11 // pred_check_branch
        %383 = sbr.rel (%p381) target = $region36
      $region35: #{ssd_r_forward.1} parent=11 // pred_region
        _
      $region36: #{ssd_r_forward.1} parent=11 // pred_fallthru
        _
      // Predicated region
      $region37: #{ssd_r_forward.1} parent=11 // pred_check
        %p384 = pneg %p194
      $region38: #{ssd_r_forward.1} parent=11 // pred_check_branch
        %386 = sbr.rel (%p384) target = $region40
      $region39: #{ssd_r_forward.1} parent=11 // pred_region
        _
      $region40: #{ssd_r_forward.1} parent=11 // pred_fallthru
        _
      // Predicated region
      $region41: #{ssd_r_forward.1} parent=11 // pred_check
        %p387 = pneg %p215
      $region42: #{ssd_r_forward.1} parent=11 // pred_check_branch
        %389 = sbr.rel (%p387) target = $region44
      $region43: #{ssd_r_forward.1} parent=11 // pred_region
        _
      $region44: #{ssd_r_forward.1} parent=11 // pred_fallthru
        _
      // Predicated region
      $region45: #{ssd_r_forward.1} parent=11 // pred_check
        %p390 = pneg %p236
      $region46: #{ssd_r_forward.1} parent=11 // pred_check_branch
        %392 = sbr.rel (%p390) target = $region48
      $region47: #{ssd_r_forward.1} parent=11 // pred_region
        _
      $region48: #{ssd_r_forward.1} parent=11 // pred_fallthru
        _
      // Predicated region
      $region49: #{ssd_r_forward.1} parent=11 // pred_check
        %p393 = pneg %p257
      $region50: #{ssd_r_forward.1} parent=11 // pred_check_branch
        %395 = sbr.rel (%p393) target = $region52
      $region51: #{ssd_r_forward.1} parent=11 // pred_region
        _
      $region52: #{ssd_r_forward.1} parent=11 // pred_fallthru
        _
      // Predicated region
      $region53: #{ssd_r_forward.1} parent=11 // pred_check
        %p396 = pneg %p278
      $region54: #{ssd_r_forward.1} parent=11 // pred_check_branch
        %398 = sbr.rel (%p396) target = $region56
      $region55: #{ssd_r_forward.1} parent=11 // pred_region
        _
      $region56: #{ssd_r_forward.1} parent=11 // pred_fallthru
        _
      // Predicated region
      $region57: #{ssd_r_forward.1} parent=11 // pred_check
        %p399 = pneg %p299
      $region58: #{ssd_r_forward.1} parent=11 // pred_check_branch
        %401 = sbr.rel (%p399) target = $region60
      $region59: #{ssd_r_forward.1} parent=11 // pred_region
        _
      $region60: #{ssd_r_forward.1} parent=11 // pred_fallthru
        _
    $region12: #{ssd_r_forward.1} parent=5 // pred_fallthru
      _
    %p402 = scmp.lt.s32.totalorder %s21, 2
    // Predicated region
    $region61: #{ssd_r_forward.1} parent=5 // pred_check
      %p403 = pneg %p402
    $region62: #{ssd_r_forward.1} parent=5 // pred_check_branch
      %405 = sbr.rel (%p403) target = $region64
    $region63: #{ssd_r_forward.1} parent=5 // pred_region
      // Predicated region
      $region65: #{ssd_r_forward.1} parent=63 // pred_check
        %p406 = pneg %p41
      $region66: #{ssd_r_forward.1} parent=63 // pred_check_branch
        %408 = sbr.rel (%p406) target = $region68
      $region67: #{ssd_r_forward.1} parent=63 // pred_region
        %p409 = scmp.lt.s32.totalorder %s21, 1
        %s410 = scalar_select %p409, %s21, 1
        %s411 = smul.addr %s410, 4
        %s412 = smul.addr %s411, 4
        %s413 = scalar_lea.vmem %s0, %s412
      $region68: #{ssd_r_forward.1} parent=63 // pred_fallthru
        _
    $region64: #{ssd_r_forward.1} parent=5 // pred_fallthru
      _
    %p414 = scmp.le.s32.totalorder 1, %s21
    %p415 = scmp.lt.s32.totalorder %s21, 3
    %p416 = pnand %p414, %p415
    %p417 = pneg %p416
    // Predicated region
    $region69: #{ssd_r_forward.1} parent=5 // pred_check
      _
    $region70: #{ssd_r_forward.1} parent=5 // pred_check_branch
      %419 = sbr.rel (%p416) target = $region72
    $region71: #{ssd_r_forward.1} parent=5 // pred_region
      %s420 = ssub.s32 %s21, 1
      %p421 = scmp.lt.s32.totalorder %s26, 1
      %s422 = scalar_select %p421, %s26, 1
      %s423 = smul.addr %s422, 4
      %s424 = smul.addr %s423, 4
      %s425 = scalar_lea.vmem %s0, %s424
      %p426 = pneg %p47
      %p427 = pneg %p44
      %p428 = pneg %p68
      %p429 = pneg %p65
      %p430 = pneg %p89
      %p431 = pneg %p86
      %p432 = pneg %p110
      %p433 = pneg %p107
      %p434 = pneg %p131
      %p435 = pneg %p128
      %p436 = pneg %p152
      %p437 = pneg %p149
      %p438 = pneg %p173
      %p439 = pneg %p170
      %p440 = pneg %p194
      %p441 = pneg %p191
      %p442 = pneg %p215
      %p443 = pneg %p212
      %p444 = pneg %p236
      %p445 = pneg %p233
      %p446 = pneg %p257
      %p447 = pneg %p254
      %p448 = pneg %p278
      %p449 = pneg %p275
      %p450 = pneg %p299
      %p451 = pneg %p296
      %p452 = pneg %p325
      %p453 = pneg %p322
      %p454 = scmp.lt.s32.totalorder %s26, 1
      %s455 = scalar_select %p454, %s26, 1
      %s456 = smul.addr %s455, 8
      %s457 = scalar_lea.vmem %s13, %s456
      %p458 = pneg %p351
      %p459 = pneg %p348
      %p460 = scmp.lt.s32.totalorder %s26, 1
      %s461 = scalar_select %p460, %s26, 1
      %s462 = smul.addr %s461, 8
      %s463 = scalar_lea.vmem %s14, %s462
      %p464 = scmp.lt.s32.totalorder %s26, 1
      %s465 = scalar_select %p464, %s26, 1
      %s466 = smul.addr %s465, 4
      %s467 = smul.addr %s466, 4
      %s468 = scalar_lea.vmem %s0, %s467
      %p469 = scmp.lt.s32.totalorder %s26, 1
      %s470 = scalar_select %p469, %s26, 1
      %s471 = smul.addr %s470, 8
      %s472 = scalar_lea.vmem %s13, %s471
      %p473 = scmp.lt.s32.totalorder %s26, 1
      %s474 = scalar_select %p473, %s26, 1
      %s475 = smul.addr %s474, 8
      %s476 = scalar_lea.vmem %s14, %s475
      %v478 = vld [vmem:[%s1] sm:$0xf]
      %v479 = vld [vmem:[%s1 + $0x4] sm:$0xf]
      %v480 = vld [vmem:[%s468] sm:$0xf]
      %v481 = vld [vmem:[%s468 + $0x4] sm:$0xf]
      %v482 = vld [vmem:[%s468 + $0x8] sm:$0xf]
      %v483 = vld [vmem:[%s468 + $0xc] sm:$0xf]
      %v484 = vld [vmem:[%s2] sm:$0xff]
      %v485 = vld [vmem:[%s2 + $0x8] sm:$0xff]
      %487 = vset.pattern.permute.xlu0 0
      %488 = vperm.xlu0 %487, %v484
      %v489 = vpop.permute.xlu0 %488
      %492 = vset.pattern.permute.xlu0 0
      %493 = vperm.xlu0 %492, %v485
      %v494 = vpop.permute.xlu0 %493
      %v498 = vunpack.c.l.b16 %v478
      %v499 = vunpack.c.l.b16 %v479
      %v500 = vpack.c.b16 %v499, %v498
      %v505 = vunpack.c.l.b16 %v480
      %v506 = vunpack.c.l.b16 %v481
      %v507 = vunpack.c.l.b16 %v482
      %v508 = vunpack.c.l.b16 %v483
      %v509 = vpack.c.b16 %v506, %v505
      %v510 = vpack.c.b16 %v508, %v507
      %vm513 = vcmask 261120
      %v515 = vsel %vm513, %v500, 0
      %517 = vmatprep.subr.bf16.mxu0 0
      %518 = vmatpush1.bf16.msra.mxu0 %v509
      %519 = vmatprep.subr.bf16.mxu0 0
      %520 = vmatpush1.bf16.msra.mxu0 %v510
      %521 = vmatprep.subr.bf16.mxu0 0
      %522 = vmatpush1.bf16.msra.mxu0 0
      %523 = vmatprep.subr.bf16.mxu0 0
      %524 = vmatpush1.bf16.msra.mxu0 0
      %525 = vmatprep.subr.bf16.mxu0 0
      %526 = vmatpush1.bf16.msra.mxu0 0
      %527 = vmatprep.subr.bf16.mxu0 0
      %528 = vmatpush1.bf16.msra.mxu0 0
      %529 = vmatprep.subr.bf16.mxu0 0
      %530 = vmatpush1.bf16.msra.mxu0 0
      %531 = vmatprep.subr.bf16.mxu0 0
      %532 = vmatpush1.bf16.msra.mxu0 0
      %533 = vmatprep.subr.bf16.mxu0 0
      %534 = vmatpush1.bf16.msra.mxu0 0
      %535 = vmatprep.subr.bf16.mxu0 0
      %536 = vmatpush1.bf16.msra.mxu0 0
      %537 = vmatprep.subr.bf16.mxu0 0
      %538 = vmatpush1.bf16.msra.mxu0 0
      %539 = vmatprep.subr.bf16.mxu0 0
      %540 = vmatpush1.bf16.msra.mxu0 0
      %541 = vmatprep.subr.bf16.mxu0 0
      %542 = vmatpush1.bf16.msra.mxu0 0
      %543 = vmatprep.subr.bf16.mxu0 0
      %544 = vmatpush1.bf16.msra.mxu0 0
      %545 = vmatprep.subr.bf16.mxu0 0
      %546 = vmatpush1.bf16.msra.mxu0 0
      %547 = vmatprep.subr.bf16.mxu0 0
      %548 = vmatpush1.bf16.msra.mxu0 0
      %549 = vmatprep.mubr.bf16.mxu0 0
      %550 = vmatmul.mubr.bf16.gmra.mrb[0].mxu0 %v515
      %v551 = vpop.f32.mrb[0].mxu0
      %v552 = vadd.f32 %v489, %v551
      %v553 = vpop.f32.mrb[0].mxu0
      %v554 = vpop.f32.mrb[0].mxu0
      %v555 = vadd.f32 %v494, %v554
      %v556 = vpop.f32.mrb[0].mxu0
      %557 = vdwg.mxu0
      %v558 = vmax.f32 %v552, 0.0
      %v559 = vmax.f32 %v555, 0.0
      %v560 = vpack.c.bf16 %v559, %v558
      %v561 = vld [vmem:[%s5] sm:$0xf]
      %v562 = vld [vmem:[%s5 + $0x4] sm:$0xf]
      %v563 = vld [vmem:[%s5 + $0x8] sm:$0xf]
      %v564 = vld [vmem:[%s5 + $0xc] sm:$0xf]
      %v565 = vld [vmem:[%s5 + $0x10] sm:$0xf]
      %v566 = vld [vmem:[%s5 + $0x14] sm:$0xf]
      %v567 = vld [vmem:[%s5 + $0x18] sm:$0xf]
      %v568 = vld [vmem:[%s5 + $0x1c] sm:$0xf]
      %v577 = vunpack.c.l.b16 %v561
      %v578 = vunpack.c.l.b16 %v562
      %v579 = vunpack.c.l.b16 %v563
      %v580 = vunpack.c.l.b16 %v564
      %v581 = vunpack.c.l.b16 %v565
      %v582 = vunpack.c.l.b16 %v566
      %v583 = vunpack.c.l.b16 %v567
      %v584 = vunpack.c.l.b16 %v568
      %v585 = vpack.c.b16 %v578, %v577
      %v586 = vpack.c.b16 %v580, %v579
      %v587 = vpack.c.b16 %v582, %v581
      %v588 = vpack.c.b16 %v584, %v583
      %vm593 = vcmask 523264
      %v595 = vsel %vm593, %v560, 0
      %597 = vmatprep.subr.bf16.mxu0 0
      %598 = vmatpush1.bf16.msra.mxu0 %v585
      %599 = vmatprep.subr.bf16.mxu0 0
      %600 = vmatpush1.bf16.msra.mxu0 %v586
      %601 = vmatprep.subr.bf16.mxu0 0
      %602 = vmatpush1.bf16.msra.mxu0 %v587
      %603 = vmatprep.subr.bf16.mxu0 0
      %604 = vmatpush1.bf16.msra.mxu0 %v588
      %605 = vmatprep.subr.bf16.mxu0 0
      %606 = vmatpush1.bf16.msra.mxu0 0
      %607 = vmatprep.subr.bf16.mxu0 0
      %608 = vmatpush1.bf16.msra.mxu0 0
      %609 = vmatprep.subr.bf16.mxu0 0
      %610 = vmatpush1.bf16.msra.mxu0 0
      %611 = vmatprep.subr.bf16.mxu0 0
      %612 = vmatpush1.bf16.msra.mxu0 0
      %613 = vmatprep.subr.bf16.mxu0 0
      %614 = vmatpush1.bf16.msra.mxu0 0
      %615 = vmatprep.subr.bf16.mxu0 0
      %616 = vmatpush1.bf16.msra.mxu0 0
      %617 = vmatprep.subr.bf16.mxu0 0
      %618 = vmatpush1.bf16.msra.mxu0 0
      %619 = vmatprep.subr.bf16.mxu0 0
      %620 = vmatpush1.bf16.msra.mxu0 0
      %621 = vmatprep.subr.bf16.mxu0 0
      %622 = vmatpush1.bf16.msra.mxu0 0
      %623 = vmatprep.subr.bf16.mxu0 0
      %624 = vmatpush1.bf16.msra.mxu0 0
      %625 = vmatprep.subr.bf16.mxu0 0
      %626 = vmatpush1.bf16.msra.mxu0 0
      %627 = vmatprep.subr.bf16.mxu0 0
      %628 = vmatpush1.bf16.msra.mxu0 0
      %629 = vmatprep.mubr.bf16.mxu0 0
      %630 = vmatmul.mubr.bf16.gmra.mrb[0].mxu0 %v595
      %v631 = vpop.f32.mrb[0].mxu0
      %v632 = vadd.f32 0.0, %v631
      %v633 = vpop.f32.mrb[0].mxu0
      %v634 = vpop.f32.mrb[0].mxu0
      %v635 = vadd.f32 0.0, %v634
      %v636 = vpop.f32.mrb[0].mxu0
      %637 = vdwg.mxu0
      %v638 = vpack.c.bf16 %v635, %v632
      %s639 = scalar_lea.vmem %s5, 32
      %v640 = vld [vmem:[%s639] sm:$0xf]
      %v641 = vld [vmem:[%s639 + $0x4] sm:$0xf]
      %v642 = vld [vmem:[%s639 + $0x8] sm:$0xf]
      %v643 = vld [vmem:[%s639 + $0xc] sm:$0xf]
      %v644 = vld [vmem:[%s639 + $0x10] sm:$0xf]
      %v645 = vld [vmem:[%s639 + $0x14] sm:$0xf]
      %v646 = vld [vmem:[%s639 + $0x18] sm:$0xf]
      %v647 = vld [vmem:[%s639 + $0x1c] sm:$0xf]
      %v656 = vunpack.c.l.b16 %v640
      %v657 = vunpack.c.l.b16 %v641
      %v658 = vunpack.c.l.b16 %v642
      %v659 = vunpack.c.l.b16 %v643
      %v660 = vunpack.c.l.b16 %v644
      %v661 = vunpack.c.l.b16 %v645
      %v662 = vunpack.c.l.b16 %v646
      %v663 = vunpack.c.l.b16 %v647
      %v664 = vpack.c.b16 %v657, %v656
      %v665 = vpack.c.b16 %v659, %v658
      %v666 = vpack.c.b16 %v661, %v660
      %v667 = vpack.c.b16 %v663, %v662
      %672 = vmatprep.subr.bf16.mxu0 0
      %673 = vmatpush1.bf16.msra.mxu0 %v664
      %674 = vmatprep.subr.bf16.mxu0 0
      %675 = vmatpush1.bf16.msra.mxu0 %v665
      %676 = vmatprep.subr.bf16.mxu0 0
      %677 = vmatpush1.bf16.msra.mxu0 %v666
      %678 = vmatprep.subr.bf16.mxu0 0
      %679 = vmatpush1.bf16.msra.mxu0 %v667
      %680 = vmatprep.subr.bf16.mxu0 0
      %681 = vmatpush1.bf16.msra.mxu0 0
      %682 = vmatprep.subr.bf16.mxu0 0
      %683 = vmatpush1.bf16.msra.mxu0 0
      %684 = vmatprep.subr.bf16.mxu0 0
      %685 = vmatpush1.bf16.msra.mxu0 0
      %686 = vmatprep.subr.bf16.mxu0 0
      %687 = vmatpush1.bf16.msra.mxu0 0
      %688 = vmatprep.subr.bf16.mxu0 0
      %689 = vmatpush1.bf16.msra.mxu0 0
      %690 = vmatprep.subr.bf16.mxu0 0
      %691 = vmatpush1.bf16.msra.mxu0 0
      %692 = vmatprep.subr.bf16.mxu0 0
      %693 = vmatpush1.bf16.msra.mxu0 0
      %694 = vmatprep.subr.bf16.mxu0 0
      %695 = vmatpush1.bf16.msra.mxu0 0
      %696 = vmatprep.subr.bf16.mxu0 0
      %697 = vmatpush1.bf16.msra.mxu0 0
      %698 = vmatprep.subr.bf16.mxu0 0
      %699 = vmatpush1.bf16.msra.mxu0 0
      %700 = vmatprep.subr.bf16.mxu0 0
      %701 = vmatpush1.bf16.msra.mxu0 0
      %702 = vmatprep.subr.bf16.mxu0 0
      %703 = vmatpush1.bf16.msra.mxu0 0
      %704 = vmatprep.mubr.bf16.mxu0 0
      %705 = vmatmul.mubr.bf16.gmra.mrb[0].mxu0 %v595
      %v706 = vpop.f32.mrb[0].mxu0
      %v707 = vadd.f32 0.0, %v706
      %v708 = vpop.f32.mrb[0].mxu0
      %v709 = vpop.f32.mrb[0].mxu0
      %v710 = vadd.f32 0.0, %v709
      %v711 = vpop.f32.mrb[0].mxu0
      %712 = vdwg.mxu0
      %v713 = vpack.c.bf16 %v710, %v707
      %s714 = scalar_lea.vmem %s5, 64
      %v715 = vld [vmem:[%s714] sm:$0xf]
      %v716 = vld [vmem:[%s714 + $0x4] sm:$0xf]
      %v717 = vld [vmem:[%s714 + $0x8] sm:$0xf]
      %v718 = vld [vmem:[%s714 + $0xc] sm:$0xf]
      %v719 = vld [vmem:[%s714 + $0x10] sm:$0xf]
      %v720 = vld [vmem:[%s714 + $0x14] sm:$0xf]
      %v721 = vld [vmem:[%s714 + $0x18] sm:$0xf]
      %v722 = vld [vmem:[%s714 + $0x1c] sm:$0xf]
      %v731 = vunpack.c.l.b16 %v715
      %v732 = vunpack.c.l.b16 %v716
      %v733 = vunpack.c.l.b16 %v717
      %v734 = vunpack.c.l.b16 %v718
      %v735 = vunpack.c.l.b16 %v719
      %v736 = vunpack.c.l.b16 %v720
      %v737 = vunpack.c.l.b16 %v721
      %v738 = vunpack.c.l.b16 %v722
      %v739 = vpack.c.b16 %v732, %v731
      %v740 = vpack.c.b16 %v734, %v733
      %v741 = vpack.c.b16 %v736, %v735
      %v742 = vpack.c.b16 %v738, %v737
      %747 = vmatprep.subr.bf16.mxu0 0
      %748 = vmatpush1.bf16.msra.mxu0 %v739
      %749 = vmatprep.subr.bf16.mxu0 0
      %750 = vmatpush1.bf16.msra.mxu0 %v740
      %751 = vmatprep.subr.bf16.mxu0 0
      %752 = vmatpush1.bf16.msra.mxu0 %v741
      %753 = vmatprep.subr.bf16.mxu0 0
      %754 = vmatpush1.bf16.msra.mxu0 %v742
      %755 = vmatprep.subr.bf16.mxu0 0
      %756 = vmatpush1.bf16.msra.mxu0 0
      %757 = vmatprep.subr.bf16.mxu0 0
      %758 = vmatpush1.bf16.msra.mxu0 0
      %759 = vmatprep.subr.bf16.mxu0 0
      %760 = vmatpush1.bf16.msra.mxu0 0
      %761 = vmatprep.subr.bf16.mxu0 0
      %762 = vmatpush1.bf16.msra.mxu0 0
      %763 = vmatprep.subr.bf16.mxu0 0
      %764 = vmatpush1.bf16.msra.mxu0 0
      %765 = vmatprep.subr.bf16.mxu0 0
      %766 = vmatpush1.bf16.msra.mxu0 0
      %767 = vmatprep.subr.bf16.mxu0 0
      %768 = vmatpush1.bf16.msra.mxu0 0
      %769 = vmatprep.subr.bf16.mxu0 0
      %770 = vmatpush1.bf16.msra.mxu0 0
      %771 = vmatprep.subr.bf16.mxu0 0
      %772 = vmatpush1.bf16.msra.mxu0 0
      %773 = vmatprep.subr.bf16.mxu0 0
      %774 = vmatpush1.bf16.msra.mxu0 0
      %775 = vmatprep.subr.bf16.mxu0 0
      %776 = vmatpush1.bf16.msra.mxu0 0
      %777 = vmatprep.subr.bf16.mxu0 0
      %778 = vmatpush1.bf16.msra.mxu0 0
      %779 = vmatprep.mubr.bf16.mxu0 0
      %780 = vmatmul.mubr.bf16.gmra.mrb[0].mxu0 %v595
      %v781 = vpop.f32.mrb[0].mxu0
      %v782 = vadd.f32 0.0, %v781
      %v783 = vpop.f32.mrb[0].mxu0
      %v784 = vpop.f32.mrb[0].mxu0
      %v785 = vadd.f32 0.0, %v784
      %v786 = vpop.f32.mrb[0].mxu0
      %787 = vdwg.mxu0
      %v788 = vpack.c.bf16 %v785, %v782
      %s789 = scalar_lea.vmem %s5, 96
      %v790 = vld [vmem:[%s789] sm:$0xf]
      %v791 = vld [vmem:[%s789 + $0x4] sm:$0xf]
      %v792 = vld [vmem:[%s789 + $0x8] sm:$0xf]
      %v793 = vld [vmem:[%s789 + $0xc] sm:$0xf]
      %v794 = vld [vmem:[%s789 + $0x10] sm:$0xf]
      %v795 = vld [vmem:[%s789 + $0x14] sm:$0xf]
      %v796 = vld [vmem:[%s789 + $0x18] sm:$0xf]
      %v797 = vld [vmem:[%s789 + $0x1c] sm:$0xf]
      %v806 = vunpack.c.l.b16 %v790
      %v807 = vunpack.c.l.b16 %v791
      %v808 = vunpack.c.l.b16 %v792
      %v809 = vunpack.c.l.b16 %v793
      %v810 = vunpack.c.l.b16 %v794
      %v811 = vunpack.c.l.b16 %v795
      %v812 = vunpack.c.l.b16 %v796
      %v813 = vunpack.c.l.b16 %v797
      %v814 = vpack.c.b16 %v807, %v806
      %v815 = vpack.c.b16 %v809, %v808
      %v816 = vpack.c.b16 %v811, %v810
      %v817 = vpack.c.b16 %v813, %v812
      %822 = vmatprep.subr.bf16.mxu0 0
      %823 = vmatpush1.bf16.msra.mxu0 %v814
      %824 = vmatprep.subr.bf16.mxu0 0
      %825 = vmatpush1.bf16.msra.mxu0 %v815
      %826 = vmatprep.subr.bf16.mxu0 0
      %827 = vmatpush1.bf16.msra.mxu0 %v816
      %828 = vmatprep.subr.bf16.mxu0 0
      %829 = vmatpush1.bf16.msra.mxu0 %v817
      %830 = vmatprep.subr.bf16.mxu0 0
      %831 = vmatpush1.bf16.msra.mxu0 0
      %832 = vmatprep.subr.bf16.mxu0 0
      %833 = vmatpush1.bf16.msra.mxu0 0
      %834 = vmatprep.subr.bf16.mxu0 0
      %835 = vmatpush1.bf16.msra.mxu0 0
      %836 = vmatprep.subr.bf16.mxu0 0
      %837 = vmatpush1.bf16.msra.mxu0 0
      %838 = vmatprep.subr.bf16.mxu0 0
      %839 = vmatpush1.bf16.msra.mxu0 0
      %840 = vmatprep.subr.bf16.mxu0 0
      %841 = vmatpush1.bf16.msra.mxu0 0
      %842 = vmatprep.subr.bf16.mxu0 0
      %843 = vmatpush1.bf16.msra.mxu0 0
      %844 = vmatprep.subr.bf16.mxu0 0
      %845 = vmatpush1.bf16.msra.mxu0 0
      %846 = vmatprep.subr.bf16.mxu0 0
      %847 = vmatpush1.bf16.msra.mxu0 0
      %848 = vmatprep.subr.bf16.mxu0 0
      %849 = vmatpush1.bf16.msra.mxu0 0
      %850 = vmatprep.subr.bf16.mxu0 0
      %851 = vmatpush1.bf16.msra.mxu0 0
      %852 = vmatprep.subr.bf16.mxu0 0
      %853 = vmatpush1.bf16.msra.mxu0 0
      %854 = vmatprep.mubr.bf16.mxu0 0
      %855 = vmatmul.mubr.bf16.gmra.mrb[0].mxu0 %v595
      %v856 = vpop.f32.mrb[0].mxu0
      %v857 = vadd.f32 0.0, %v856
      %v858 = vpop.f32.mrb[0].mxu0
      %v859 = vpop.f32.mrb[0].mxu0
      %v860 = vadd.f32 0.0, %v859
      %v861 = vpop.f32.mrb[0].mxu0
      %862 = vdwg.mxu0
      %v863 = vpack.c.bf16 %v860, %v857
      %s864 = scalar_lea.vmem %s5, 128
      %v865 = vld [vmem:[%s864] sm:$0xf]
      %v866 = vld [vmem:[%s864 + $0x4] sm:$0xf]
      %v867 = vld [vmem:[%s864 + $0x8] sm:$0xf]
      %v868 = vld [vmem:[%s864 + $0xc] sm:$0xf]
      %v869 = vld [vmem:[%s864 + $0x10] sm:$0xf]
      %v870 = vld [vmem:[%s864 + $0x14] sm:$0xf]
      %v871 = vld [vmem:[%s864 + $0x18] sm:$0xf]
      %v872 = vld [vmem:[%s864 + $0x1c] sm:$0xf]
      %v881 = vunpack.c.l.b16 %v865
      %v882 = vunpack.c.l.b16 %v866
      %v883 = vunpack.c.l.b16 %v867
      %v884 = vunpack.c.l.b16 %v868
      %v885 = vunpack.c.l.b16 %v869
      %v886 = vunpack.c.l.b16 %v870
      %v887 = vunpack.c.l.b16 %v871
      %v888 = vunpack.c.l.b16 %v872
      %v889 = vpack.c.b16 %v882, %v881
      %v890 = vpack.c.b16 %v884, %v883
      %v891 = vpack.c.b16 %v886, %v885
      %v892 = vpack.c.b16 %v888, %v887
      %897 = vmatprep.subr.bf16.mxu0 0
      %898 = vmatpush1.bf16.msra.mxu0 %v889
      %899 = vmatprep.subr.bf16.mxu0 0
      %900 = vmatpush1.bf16.msra.mxu0 %v890
      %901 = vmatprep.subr.bf16.mxu0 0
      %902 = vmatpush1.bf16.msra.mxu0 %v891
      %903 = vmatprep.subr.bf16.mxu0 0
      %904 = vmatpush1.bf16.msra.mxu0 %v892
      %905 = vmatprep.subr.bf16.mxu0 0
      %906 = vmatpush1.bf16.msra.mxu0 0
      %907 = vmatprep.subr.bf16.mxu0 0
      %908 = vmatpush1.bf16.msra.mxu0 0
      %909 = vmatprep.subr.bf16.mxu0 0
      %910 = vmatpush1.bf16.msra.mxu0 0
      %911 = vmatprep.subr.bf16.mxu0 0
      %912 = vmatpush1.bf16.msra.mxu0 0
      %913 = vmatprep.subr.bf16.mxu0 0
      %914 = vmatpush1.bf16.msra.mxu0 0
      %915 = vmatprep.subr.bf16.mxu0 0
      %916 = vmatpush1.bf16.msra.mxu0 0
      %917 = vmatprep.subr.bf16.mxu0 0
      %918 = vmatpush1.bf16.msra.mxu0 0
      %919 = vmatprep.subr.bf16.mxu0 0
      %920 = vmatpush1.bf16.msra.mxu0 0
      %921 = vmatprep.subr.bf16.mxu0 0
      %922 = vmatpush1.bf16.msra.mxu0 0
      %923 = vmatprep.subr.bf16.mxu0 0
      %924 = vmatpush1.bf16.msra.mxu0 0
      %925 = vmatprep.subr.bf16.mxu0 0
      %926 = vmatpush1.bf16.msra.mxu0 0
      %927 = vmatprep.subr.bf16.mxu0 0
      %928 = vmatpush1.bf16.msra.mxu0 0
      %929 = vmatprep.mubr.bf16.mxu0 0
      %930 = vmatmul.mubr.bf16.gmra.mrb[0].mxu0 %v595
      %v931 = vpop.f32.mrb[0].mxu0
      %v932 = vadd.f32 0.0, %v931
      %v933 = vpop.f32.mrb[0].mxu0
      %v934 = vpop.f32.mrb[0].mxu0
      %v935 = vadd.f32 0.0, %v934
      %v936 = vpop.f32.mrb[0].mxu0
      %937 = vdwg.mxu0
      %v938 = vpack.c.bf16 %v935, %v932
      %s939 = scalar_lea.vmem %s5, 160
      %v940 = vld [vmem:[%s939] sm:$0xf]
      %v941 = vld [vmem:[%s939 + $0x4] sm:$0xf]
      %v942 = vld [vmem:[%s939 + $0x8] sm:$0xf]
      %v943 = vld [vmem:[%s939 + $0xc] sm:$0xf]
      %v944 = vld [vmem:[%s939 + $0x10] sm:$0xf]
      %v945 = vld [vmem:[%s939 + $0x14] sm:$0xf]
      %v946 = vld [vmem:[%s939 + $0x18] sm:$0xf]
      %v947 = vld [vmem:[%s939 + $0x1c] sm:$0xf]
      %v956 = vunpack.c.l.b16 %v940
      %v957 = vunpack.c.l.b16 %v941
      %v958 = vunpack.c.l.b16 %v942
      %v959 = vunpack.c.l.b16 %v943
      %v960 = vunpack.c.l.b16 %v944
      %v961 = vunpack.c.l.b16 %v945
      %v962 = vunpack.c.l.b16 %v946
      %v963 = vunpack.c.l.b16 %v947
      %v964 = vpack.c.b16 %v957, %v956
      %v965 = vpack.c.b16 %v959, %v958
      %v966 = vpack.c.b16 %v961, %v960
      %v967 = vpack.c.b16 %v963, %v962
      %972 = vmatprep.subr.bf16.mxu0 0
      %973 = vmatpush1.bf16.msra.mxu0 %v964
      %974 = vmatprep.subr.bf16.mxu0 0
      %975 = vmatpush1.bf16.msra.mxu0 %v965
      %976 = vmatprep.subr.bf16.mxu0 0
      %977 = vmatpush1.bf16.msra.mxu0 %v966
      %978 = vmatprep.subr.bf16.mxu0 0
      %979 = vmatpush1.bf16.msra.mxu0 %v967
      %980 = vmatprep.subr.bf16.mxu0 0
      %981 = vmatpush1.bf16.msra.mxu0 0
      %982 = vmatprep.subr.bf16.mxu0 0
      %983 = vmatpush1.bf16.msra.mxu0 0
      %984 = vmatprep.subr.bf16.mxu0 0
      %985 = vmatpush1.bf16.msra.mxu0 0
      %986 = vmatprep.subr.bf16.mxu0 0
      %987 = vmatpush1.bf16.msra.mxu0 0
      %988 = vmatprep.subr.bf16.mxu0 0
      %989 = vmatpush1.bf16.msra.mxu0 0
      %990 = vmatprep.subr.bf16.mxu0 0
      %991 = vmatpush1.bf16.msra.mxu0 0
      %992 = vmatprep.subr.bf16.mxu0 0
      %993 = vmatpush1.bf16.msra.mxu0 0
      %994 = vmatprep.subr.bf16.mxu0 0
      %995 = vmatpush1.bf16.msra.mxu0 0
      %996 = vmatprep.subr.bf16.mxu0 0
      %997 = vmatpush1.bf16.msra.mxu0 0
      %998 = vmatprep.subr.bf16.mxu0 0
      %999 = vmatpush1.bf16.msra.mxu0 0
      %1000 = vmatprep.subr.bf16.mxu0 0
      %1001 = vmatpush1.bf16.msra.mxu0 0
      %1002 = vmatprep.subr.bf16.mxu0 0
      %1003 = vmatpush1.bf16.msra.mxu0 0
      %1004 = vmatprep.mubr.bf16.mxu0 0
      %1005 = vmatmul.mubr.bf16.gmra.mrb[0].mxu0 %v595
      %v1006 = vpop.f32.mrb[0].mxu0
      %v1007 = vadd.f32 0.0, %v1006
      %v1008 = vpop.f32.mrb[0].mxu0
      %v1009 = vpop.f32.mrb[0].mxu0
      %v1010 = vadd.f32 0.0, %v1009
      %v1011 = vpop.f32.mrb[0].mxu0
      %1012 = vdwg.mxu0
      %v1013 = vpack.c.bf16 %v1010, %v1007
      %s1014 = scalar_lea.vmem %s5, 192
      %v1015 = vld [vmem:[%s1014] sm:$0xf]
      %v1016 = vld [vmem:[%s1014 + $0x4] sm:$0xf]
      %v1017 = vld [vmem:[%s1014 + $0x8] sm:$0xf]
      %v1018 = vld [vmem:[%s1014 + $0xc] sm:$0xf]
      %v1019 = vld [vmem:[%s1014 + $0x10] sm:$0xf]
      %v1020 = vld [vmem:[%s1014 + $0x14] sm:$0xf]
      %v1021 = vld [vmem:[%s1014 + $0x18] sm:$0xf]
      %v1022 = vld [vmem:[%s1014 + $0x1c] sm:$0xf]
      %v1031 = vunpack.c.l.b16 %v1015
      %v1032 = vunpack.c.l.b16 %v1016
      %v1033 = vunpack.c.l.b16 %v1017
      %v1034 = vunpack.c.l.b16 %v1018
      %v1035 = vunpack.c.l.b16 %v1019
      %v1036 = vunpack.c.l.b16 %v1020
      %v1037 = vunpack.c.l.b16 %v1021
      %v1038 = vunpack.c.l.b16 %v1022
      %v1039 = vpack.c.b16 %v1032, %v1031
      %v1040 = vpack.c.b16 %v1034, %v1033
      %v1041 = vpack.c.b16 %v1036, %v1035
      %v1042 = vpack.c.b16 %v1038, %v1037
      %1047 = vmatprep.subr.bf16.mxu0 0
      %1048 = vmatpush1.bf16.msra.mxu0 %v1039
      %1049 = vmatprep.subr.bf16.mxu0 0
      %1050 = vmatpush1.bf16.msra.mxu0 %v1040
      %1051 = vmatprep.subr.bf16.mxu0 0
      %1052 = vmatpush1.bf16.msra.mxu0 %v1041
      %1053 = vmatprep.subr.bf16.mxu0 0
      %1054 = vmatpush1.bf16.msra.mxu0 %v1042
      %1055 = vmatprep.subr.bf16.mxu0 0
      %1056 = vmatpush1.bf16.msra.mxu0 0
      %1057 = vmatprep.subr.bf16.mxu0 0
      %1058 = vmatpush1.bf16.msra.mxu0 0
      %1059 = vmatprep.subr.bf16.mxu0 0
      %1060 = vmatpush1.bf16.msra.mxu0 0
      %1061 = vmatprep.subr.bf16.mxu0 0
      %1062 = vmatpush1.bf16.msra.mxu0 0
      %1063 = vmatprep.subr.bf16.mxu0 0
      %1064 = vmatpush1.bf16.msra.mxu0 0
      %1065 = vmatprep.subr.bf16.mxu0 0
      %1066 = vmatpush1.bf16.msra.mxu0 0
      %1067 = vmatprep.subr.bf16.mxu0 0
      %1068 = vmatpush1.bf16.msra.mxu0 0
      %1069 = vmatprep.subr.bf16.mxu0 0
      %1070 = vmatpush1.bf16.msra.mxu0 0
      %1071 = vmatprep.subr.bf16.mxu0 0
      %1072 = vmatpush1.bf16.msra.mxu0 0
      %1073 = vmatprep.subr.bf16.mxu0 0
      %1074 = vmatpush1.bf16.msra.mxu0 0
      %1075 = vmatprep.subr.bf16.mxu0 0
      %1076 = vmatpush1.bf16.msra.mxu0 0
      %1077 = vmatprep.subr.bf16.mxu0 0
      %1078 = vmatpush1.bf16.msra.mxu0 0
      %1079 = vmatprep.mubr.bf16.mxu0 0
      %1080 = vmatmul.mubr.bf16.gmra.mrb[0].mxu0 %v595
      %v1081 = vpop.f32.mrb[0].mxu0
      %v1082 = vadd.f32 0.0, %v1081
      %v1083 = vpop.f32.mrb[0].mxu0
      %v1084 = vpop.f32.mrb[0].mxu0
      %v1085 = vadd.f32 0.0, %v1084
      %v1086 = vpop.f32.mrb[0].mxu0
      %1087 = vdwg.mxu0
      %v1088 = vpack.c.bf16 %v1085, %v1082
      %s1089 = scalar_lea.vmem %s5, 224
      %v1090 = vld [vmem:[%s1089] sm:$0xf]
      %v1091 = vld [vmem:[%s1089 + $0x4] sm:$0xf]
      %v1092 = vld [vmem:[%s1089 + $0x8] sm:$0xf]
      %v1093 = vld [vmem:[%s1089 + $0xc] sm:$0xf]
      %v1094 = vld [vmem:[%s1089 + $0x10] sm:$0xf]
      %v1095 = vld [vmem:[%s1089 + $0x14] sm:$0xf]
      %v1096 = vld [vmem:[%s1089 + $0x18] sm:$0xf]
      %v1097 = vld [vmem:[%s1089 + $0x1c] sm:$0xf]
      %v1106 = vunpack.c.l.b16 %v1090
      %v1107 = vunpack.c.l.b16 %v1091
      %v1108 = vunpack.c.l.b16 %v1092
      %v1109 = vunpack.c.l.b16 %v1093
      %v1110 = vunpack.c.l.b16 %v1094
      %v1111 = vunpack.c.l.b16 %v1095
      %v1112 = vunpack.c.l.b16 %v1096
      %v1113 = vunpack.c.l.b16 %v1097
      %v1114 = vpack.c.b16 %v1107, %v1106
      %v1115 = vpack.c.b16 %v1109, %v1108
      %v1116 = vpack.c.b16 %v1111, %v1110
      %v1117 = vpack.c.b16 %v1113, %v1112
      %1122 = vmatprep.subr.bf16.mxu0 0
      %1123 = vmatpush1.bf16.msra.mxu0 %v1114
      %1124 = vmatprep.subr.bf16.mxu0 0
      %1125 = vmatpush1.bf16.msra.mxu0 %v1115
      %1126 = vmatprep.subr.bf16.mxu0 0
      %1127 = vmatpush1.bf16.msra.mxu0 %v1116
      %1128 = vmatprep.subr.bf16.mxu0 0
      %1129 = vmatpush1.bf16.msra.mxu0 %v1117
      %1130 = vmatprep.subr.bf16.mxu0 0
      %1131 = vmatpush1.bf16.msra.mxu0 0
      %1132 = vmatprep.subr.bf16.mxu0 0
      %1133 = vmatpush1.bf16.msra.mxu0 0
      %1134 = vmatprep.subr.bf16.mxu0 0
      %1135 = vmatpush1.bf16.msra.mxu0 0
      %1136 = vmatprep.subr.bf16.mxu0 0
      %1137 = vmatpush1.bf16.msra.mxu0 0
      %1138 = vmatprep.subr.bf16.mxu0 0
      %1139 = vmatpush1.bf16.msra.mxu0 0
      %1140 = vmatprep.subr.bf16.mxu0 0
      %1141 = vmatpush1.bf16.msra.mxu0 0
      %1142 = vmatprep.subr.bf16.mxu0 0
      %1143 = vmatpush1.bf16.msra.mxu0 0
      %1144 = vmatprep.subr.bf16.mxu0 0
      %1145 = vmatpush1.bf16.msra.mxu0 0
      %1146 = vmatprep.subr.bf16.mxu0 0
      %1147 = vmatpush1.bf16.msra.mxu0 0
      %1148 = vmatprep.subr.bf16.mxu0 0
      %1149 = vmatpush1.bf16.msra.mxu0 0
      %1150 = vmatprep.subr.bf16.mxu0 0
      %1151 = vmatpush1.bf16.msra.mxu0 0
      %1152 = vmatprep.subr.bf16.mxu0 0
      %1153 = vmatpush1.bf16.msra.mxu0 0
      %1154 = vmatprep.mubr.bf16.mxu0 0
      %1155 = vmatmul.mubr.bf16.gmra.mrb[0].mxu0 %v595
      %v1156 = vpop.f32.mrb[0].mxu0
      %v1157 = vadd.f32 0.0, %v1156
      %v1158 = vpop.f32.mrb[0].mxu0
      %v1159 = vpop.f32.mrb[0].mxu0
      %v1160 = vadd.f32 0.0, %v1159
      %v1161 = vpop.f32.mrb[0].mxu0
      %1162 = vdwg.mxu0
      %v1163 = vpack.c.bf16 %v1160, %v1157
      %s1164 = scalar_lea.vmem %s5, 256
      %v1165 = vld [vmem:[%s1164] sm:$0xf]
      %v1166 = vld [vmem:[%s1164 + $0x4] sm:$0xf]
      %v1167 = vld [vmem:[%s1164 + $0x8] sm:$0xf]
      %v1168 = vld [vmem:[%s1164 + $0xc] sm:$0xf]
      %v1169 = vld [vmem:[%s1164 + $0x10] sm:$0xf]
      %v1170 = vld [vmem:[%s1164 + $0x14] sm:$0xf]
      %v1171 = vld [vmem:[%s1164 + $0x18] sm:$0xf]
      %v1172 = vld [vmem:[%s1164 + $0x1c] sm:$0xf]
      %v1181 = vunpack.c.l.b16 %v1165
      %v1182 = vunpack.c.l.b16 %v1166
      %v1183 = vunpack.c.l.b16 %v1167
      %v1184 = vunpack.c.l.b16 %v1168
      %v1185 = vunpack.c.l.b16 %v1169
      %v1186 = vunpack.c.l.b16 %v1170
      %v1187 = vunpack.c.l.b16 %v1171
      %v1188 = vunpack.c.l.b16 %v1172
      %v1189 = vpack.c.b16 %v1182, %v1181
      %v1190 = vpack.c.b16 %v1184, %v1183
      %v1191 = vpack.c.b16 %v1186, %v1185
      %v1192 = vpack.c.b16 %v1188, %v1187
      %1197 = vmatprep.subr.bf16.mxu0 0
      %1198 = vmatpush1.bf16.msra.mxu0 %v1189
      %1199 = vmatprep.subr.bf16.mxu0 0
      %1200 = vmatpush1.bf16.msra.mxu0 %v1190
      %1201 = vmatprep.subr.bf16.mxu0 0
      %1202 = vmatpush1.bf16.msra.mxu0 %v1191
      %1203 = vmatprep.subr.bf16.mxu0 0
      %1204 = vmatpush1.bf16.msra.mxu0 %v1192
      %1205 = vmatprep.subr.bf16.mxu0 0
      %1206 = vmatpush1.bf16.msra.mxu0 0
      %1207 = vmatprep.subr.bf16.mxu0 0
      %1208 = vmatpush1.bf16.msra.mxu0 0
      %1209 = vmatprep.subr.bf16.mxu0 0
      %1210 = vmatpush1.bf16.msra.mxu0 0
      %1211 = vmatprep.subr.bf16.mxu0 0
      %1212 = vmatpush1.bf16.msra.mxu0 0
      %1213 = vmatprep.subr.bf16.mxu0 0
      %1214 = vmatpush1.bf16.msra.mxu0 0
      %1215 = vmatprep.subr.bf16.mxu0 0
      %1216 = vmatpush1.bf16.msra.mxu0 0
      %1217 = vmatprep.subr.bf16.mxu0 0
      %1218 = vmatpush1.bf16.msra.mxu0 0
      %1219 = vmatprep.subr.bf16.mxu0 0
      %1220 = vmatpush1.bf16.msra.mxu0 0
      %1221 = vmatprep.subr.bf16.mxu0 0
      %1222 = vmatpush1.bf16.msra.mxu0 0
      %1223 = vmatprep.subr.bf16.mxu0 0
      %1224 = vmatpush1.bf16.msra.mxu0 0
      %1225 = vmatprep.subr.bf16.mxu0 0
      %1226 = vmatpush1.bf16.msra.mxu0 0
      %1227 = vmatprep.subr.bf16.mxu0 0
      %1228 = vmatpush1.bf16.msra.mxu0 0
      %1229 = vmatprep.mubr.bf16.mxu0 0
      %1230 = vmatmul.mubr.bf16.gmra.mrb[0].mxu0 %v595
      %v1231 = vpop.f32.mrb[0].mxu0
      %v1232 = vadd.f32 0.0, %v1231
      %v1233 = vpop.f32.mrb[0].mxu0
      %v1234 = vpop.f32.mrb[0].mxu0
      %v1235 = vadd.f32 0.0, %v1234
      %v1236 = vpop.f32.mrb[0].mxu0
      %1237 = vdwg.mxu0
      %v1238 = vpack.c.bf16 %v1235, %v1232
      %v1239 = vld [vmem:[%s3] sm:$0xff]
      %v1240 = vld [vmem:[%s3 + $0x8] sm:$0xff]
      %v1241 = vld [vmem:[%s4] sm:$0xff]
      %v1242 = vld [vmem:[%s4 + $0x8] sm:$0xff]
      %1244 = vset.pattern.permute.xlu0 0
      %1245 = vperm.xlu0 %1244, %v1241
      %v1246 = vpop.permute.xlu0 %1245
      %1249 = vset.pattern.permute.xlu0 0
      %1250 = vperm.xlu0 %1249, %v1242
      %v1251 = vpop.permute.xlu0 %1250
      %v1255 = vunpack.c.l.b16 %v1239
      %v1256 = vunpack.c.h.b16 %v1239
      %v1257 = vunpack.c.l.b16 %v1240
      %v1258 = vunpack.c.h.b16 %v1240
      %v1259 = vpack.c.b16 %v1257, %v1255
      %v1260 = vpack.c.b16 %v1258, %v1256
      %vm1262 = vcmask 130048
      %v1264 = vsel %vm1262, %v1260, 0
      %1266 = vmatprep.subr.bf16.mxu0 0
      %1267 = vmatpush1.bf16.msra.mxu0 %v638
      %1268 = vmatprep.subr.bf16.mxu0 0
      %1269 = vmatpush1.bf16.msra.mxu0 %v713
      %1270 = vmatprep.subr.bf16.mxu0 0
      %1271 = vmatpush1.bf16.msra.mxu0 %v788
      %1272 = vmatprep.subr.bf16.mxu0 0
      %1273 = vmatpush1.bf16.msra.mxu0 %v863
      %1274 = vmatprep.subr.bf16.mxu0 0
      %1275 = vmatpush1.bf16.msra.mxu0 %v938
      %1276 = vmatprep.subr.bf16.mxu0 0
      %1277 = vmatpush1.bf16.msra.mxu0 %v1013
      %1278 = vmatprep.subr.bf16.mxu0 0
      %1279 = vmatpush1.bf16.msra.mxu0 %v1088
      %1280 = vmatprep.subr.bf16.mxu0 0
      %1281 = vmatpush1.bf16.msra.mxu0 %v1163
      %1282 = vmatprep.subr.bf16.mxu0 0
      %1283 = vmatpush1.bf16.msra.mxu0 %v1238
      %1284 = vmatprep.subr.bf16.mxu0 0
      %1285 = vmatpush1.bf16.msra.mxu0 0
      %1286 = vmatprep.subr.bf16.mxu0 0
      %1287 = vmatpush1.bf16.msra.mxu0 0
      %1288 = vmatprep.subr.bf16.mxu0 0
      %1289 = vmatpush1.bf16.msra.mxu0 0
      %1290 = vmatprep.subr.bf16.mxu0 0
      %1291 = vmatpush1.bf16.msra.mxu0 0
      %1292 = vmatprep.subr.bf16.mxu0 0
      %1293 = vmatpush1.bf16.msra.mxu0 0
      %1294 = vmatprep.subr.bf16.mxu0 0
      %1295 = vmatpush1.bf16.msra.mxu0 0
      %1296 = vmatprep.subr.bf16.mxu0 0
      %1297 = vmatpush1.bf16.msra.mxu0 0
      %1298 = vmatprep.mubr.bf16.mxu0 %v1264
      %1299 = vmatmul.mubr.bf16.gmra.mrb[0].mxu0 %v1259
      %v1300 = vpop.f32.mrb[0].mxu0
      %v1301 = vadd.f32 %v1246, %v1300
      %v1302 = vpop.f32.mrb[0].mxu0
      %v1303 = vpop.f32.mrb[0].mxu0
      %v1304 = vadd.f32 %v1251, %v1303
      %v1305 = vpop.f32.mrb[0].mxu0
      %1306 = vdwg.mxu0
      %v1307 = vmax.f32 %v1301, 0.0
      %v1308 = vmax.f32 %v1304, 0.0
      %v1309 = vpack.c.bf16 %v1308, %v1307
      %v1310 = vld [vmem:[%s8] sm:$0xf]
      %v1311 = vld [vmem:[%s8 + $0x4] sm:$0xf]
      %v1312 = vld [vmem:[%s8 + $0x8] sm:$0xf]
      %v1313 = vld [vmem:[%s8 + $0xc] sm:$0xf]
      %v1314 = vld [vmem:[%s8 + $0x10] sm:$0xf]
      %v1315 = vld [vmem:[%s8 + $0x14] sm:$0xf]
      %v1316 = vld [vmem:[%s8 + $0x18] sm:$0xf]
      %v1317 = vld [vmem:[%s8 + $0x1c] sm:$0xf]
      %v1326 = vunpack.c.l.b16 %v1310
      %v1327 = vunpack.c.l.b16 %v1311
      %v1328 = vunpack.c.l.b16 %v1312
      %v1329 = vunpack.c.l.b16 %v1313
      %v1330 = vunpack.c.l.b16 %v1314
      %v1331 = vunpack.c.l.b16 %v1315
      %v1332 = vunpack.c.l.b16 %v1316
      %v1333 = vunpack.c.l.b16 %v1317
      %v1334 = vpack.c.b16 %v1327, %v1326
      %v1335 = vpack.c.b16 %v1329, %v1328
      %v1336 = vpack.c.b16 %v1331, %v1330
      %v1337 = vpack.c.b16 %v1333, %v1332
      %1342 = vmatprep.subr.bf16.mxu0 0
      %1343 = vmatpush1.bf16.msra.mxu0 %v1334
      %1344 = vmatprep.subr.bf16.mxu0 0
      %1345 = vmatpush1.bf16.msra.mxu0 %v1335
      %1346 = vmatprep.subr.bf16.mxu0 0
      %1347 = vmatpush1.bf16.msra.mxu0 %v1336
      %1348 = vmatprep.subr.bf16.mxu0 0
      %1349 = vmatpush1.bf16.msra.mxu0 %v1337
      %1350 = vmatprep.subr.bf16.mxu0 0
      %1351 = vmatpush1.bf16.msra.mxu0 0
      %1352 = vmatprep.subr.bf16.mxu0 0
      %1353 = vmatpush1.bf16.msra.mxu0 0
      %1354 = vmatprep.subr.bf16.mxu0 0
      %1355 = vmatpush1.bf16.msra.mxu0 0
      %1356 = vmatprep.subr.bf16.mxu0 0
      %1357 = vmatpush1.bf16.msra.mxu0 0
      %1358 = vmatprep.subr.bf16.mxu0 0
      %1359 = vmatpush1.bf16.msra.mxu0 0
      %1360 = vmatprep.subr.bf16.mxu0 0
      %1361 = vmatpush1.bf16.msra.mxu0 0
      %1362 = vmatprep.subr.bf16.mxu0 0
      %1363 = vmatpush1.bf16.msra.mxu0 0
      %1364 = vmatprep.subr.bf16.mxu0 0
      %1365 = vmatpush1.bf16.msra.mxu0 0
      %1366 = vmatprep.subr.bf16.mxu0 0
      %1367 = vmatpush1.bf16.msra.mxu0 0
      %1368 = vmatprep.subr.bf16.mxu0 0
      %1369 = vmatpush1.bf16.msra.mxu0 0
      %1370 = vmatprep.subr.bf16.mxu0 0
      %1371 = vmatpush1.bf16.msra.mxu0 0
      %1372 = vmatprep.subr.bf16.mxu0 0
      %1373 = vmatpush1.bf16.msra.mxu0 0
      %1374 = vmatprep.mubr.bf16.mxu0 0
      %1375 = vmatmul.mubr.bf16.gmra.mrb[0].mxu0 %v595
      %v1376 = vpop.f32.mrb[0].mxu0
      %v1377 = vadd.f32 0.0, %v1376
      %v1378 = vpop.f32.mrb[0].mxu0
      %v1379 = vpop.f32.mrb[0].mxu0
      %v1380 = vadd.f32 0.0, %v1379
      %v1381 = vpop.f32.mrb[0].mxu0
      %1382 = vdwg.mxu0
      %v1383 = vpack.c.bf16 %v1380, %v1377
      %s1384 = scalar_lea.vmem %s8, 32
      %v1385 = vld [vmem:[%s1384] sm:$0xf]
      %v1386 = vld [vmem:[%s1384 + $0x4] sm:$0xf]
      %v1387 = vld [vmem:[%s1384 + $0x8] sm:$0xf]
      %v1388 = vld [vmem:[%s1384 + $0xc] sm:$0xf]
      %v1389 = vld [vmem:[%s1384 + $0x10] sm:$0xf]
      %v1390 = vld [vmem:[%s1384 + $0x14] sm:$0xf]
      %v1391 = vld [vmem:[%s1384 + $0x18] sm:$0xf]
      %v1392 = vld [vmem:[%s1384 + $0x1c] sm:$0xf]
      %v1401 = vunpack.c.l.b16 %v1385
      %v1402 = vunpack.c.l.b16 %v1386
      %v1403 = vunpack.c.l.b16 %v1387
      %v1404 = vunpack.c.l.b16 %v1388
      %v1405 = vunpack.c.l.b16 %v1389
      %v1406 = vunpack.c.l.b16 %v1390
      %v1407 = vunpack.c.l.b16 %v1391
      %v1408 = vunpack.c.l.b16 %v1392
      %v1409 = vpack.c.b16 %v1402, %v1401
      %v1410 = vpack.c.b16 %v1404, %v1403
      %v1411 = vpack.c.b16 %v1406, %v1405
      %v1412 = vpack.c.b16 %v1408, %v1407
      %1417 = vmatprep.subr.bf16.mxu0 0
      %1418 = vmatpush1.bf16.msra.mxu0 %v1409
      %1419 = vmatprep.subr.bf16.mxu0 0
      %1420 = vmatpush1.bf16.msra.mxu0 %v1410
      %1421 = vmatprep.subr.bf16.mxu0 0
      %1422 = vmatpush1.bf16.msra.mxu0 %v1411
      %1423 = vmatprep.subr.bf16.mxu0 0
      %1424 = vmatpush1.bf16.msra.mxu0 %v1412
      %1425 = vmatprep.subr.bf16.mxu0 0
      %1426 = vmatpush1.bf16.msra.mxu0 0
      %1427 = vmatprep.subr.bf16.mxu0 0
      %1428 = vmatpush1.bf16.msra.mxu0 0
      %1429 = vmatprep.subr.bf16.mxu0 0
      %1430 = vmatpush1.bf16.msra.mxu0 0
      %1431 = vmatprep.subr.bf16.mxu0 0
      %1432 = vmatpush1.bf16.msra.mxu0 0
      %1433 = vmatprep.subr.bf16.mxu0 0
      %1434 = vmatpush1.bf16.msra.mxu0 0
      %1435 = vmatprep.subr.bf16.mxu0 0
      %1436 = vmatpush1.bf16.msra.mxu0 0
      %1437 = vmatprep.subr.bf16.mxu0 0
      %1438 = vmatpush1.bf16.msra.mxu0 0
      %1439 = vmatprep.subr.bf16.mxu0 0
      %1440 = vmatpush1.bf16.msra.mxu0 0
      %1441 = vmatprep.subr.bf16.mxu0 0
      %1442 = vmatpush1.bf16.msra.mxu0 0
      %1443 = vmatprep.subr.bf16.mxu0 0
      %1444 = vmatpush1.bf16.msra.mxu0 0
      %1445 = vmatprep.subr.bf16.mxu0 0
      %1446 = vmatpush1.bf16.msra.mxu0 0
      %1447 = vmatprep.subr.bf16.mxu0 0
      %1448 = vmatpush1.bf16.msra.mxu0 0
      %1449 = vmatprep.mubr.bf16.mxu0 0
      %1450 = vmatmul.mubr.bf16.gmra.mrb[0].mxu0 %v595
      %v1451 = vpop.f32.mrb[0].mxu0
      %v1452 = vadd.f32 0.0, %v1451
      %v1453 = vpop.f32.mrb[0].mxu0
      %v1454 = vpop.f32.mrb[0].mxu0
      %v1455 = vadd.f32 0.0, %v1454
      %v1456 = vpop.f32.mrb[0].mxu0
      %1457 = vdwg.mxu0
      %v1458 = vpack.c.bf16 %v1455, %v1452
      %s1459 = scalar_lea.vmem %s8, 64
      %v1460 = vld [vmem:[%s1459] sm:$0xf]
      %v1461 = vld [vmem:[%s1459 + $0x4] sm:$0xf]
      %v1462 = vld [vmem:[%s1459 + $0x8] sm:$0xf]
      %v1463 = vld [vmem:[%s1459 + $0xc] sm:$0xf]
      %v1464 = vld [vmem:[%s1459 + $0x10] sm:$0xf]
      %v1465 = vld [vmem:[%s1459 + $0x14] sm:$0xf]
      %v1466 = vld [vmem:[%s1459 + $0x18] sm:$0xf]
      %v1467 = vld [vmem:[%s1459 + $0x1c] sm:$0xf]
      %v1476 = vunpack.c.l.b16 %v1460
      %v1477 = vunpack.c.l.b16 %v1461
      %v1478 = vunpack.c.l.b16 %v1462
      %v1479 = vunpack.c.l.b16 %v1463
      %v1480 = vunpack.c.l.b16 %v1464
      %v1481 = vunpack.c.l.b16 %v1465
      %v1482 = vunpack.c.l.b16 %v1466
      %v1483 = vunpack.c.l.b16 %v1467
      %v1484 = vpack.c.b16 %v1477, %v1476
      %v1485 = vpack.c.b16 %v1479, %v1478
      %v1486 = vpack.c.b16 %v1481, %v1480
      %v1487 = vpack.c.b16 %v1483, %v1482
      %1492 = vmatprep.subr.bf16.mxu0 0
      %1493 = vmatpush1.bf16.msra.mxu0 %v1484
      %1494 = vmatprep.subr.bf16.mxu0 0
      %1495 = vmatpush1.bf16.msra.mxu0 %v1485
      %1496 = vmatprep.subr.bf16.mxu0 0
      %1497 = vmatpush1.bf16.msra.mxu0 %v1486
      %1498 = vmatprep.subr.bf16.mxu0 0
      %1499 = vmatpush1.bf16.msra.mxu0 %v1487
      %1500 = vmatprep.subr.bf16.mxu0 0
      %1501 = vmatpush1.bf16.msra.mxu0 0
      %1502 = vmatprep.subr.bf16.mxu0 0
      %1503 = vmatpush1.bf16.msra.mxu0 0
      %1504 = vmatprep.subr.bf16.mxu0 0
      %1505 = vmatpush1.bf16.msra.mxu0 0
      %1506 = vmatprep.subr.bf16.mxu0 0
      %1507 = vmatpush1.bf16.msra.mxu0 0
      %1508 = vmatprep.subr.bf16.mxu0 0
      %1509 = vmatpush1.bf16.msra.mxu0 0
      %1510 = vmatprep.subr.bf16.mxu0 0
      %1511 = vmatpush1.bf16.msra.mxu0 0
      %1512 = vmatprep.subr.bf16.mxu0 0
      %1513 = vmatpush1.bf16.msra.mxu0 0
      %1514 = vmatprep.subr.bf16.mxu0 0
      %1515 = vmatpush1.bf16.msra.mxu0 0
      %1516 = vmatprep.subr.bf16.mxu0 0
      %1517 = vmatpush1.bf16.msra.mxu0 0
      %1518 = vmatprep.subr.bf16.mxu0 0
      %1519 = vmatpush1.bf16.msra.mxu0 0
      %1520 = vmatprep.subr.bf16.mxu0 0
      %1521 = vmatpush1.bf16.msra.mxu0 0
      %1522 = vmatprep.subr.bf16.mxu0 0
      %1523 = vmatpush1.bf16.msra.mxu0 0
      %1524 = vmatprep.mubr.bf16.mxu0 0
      %1525 = vmatmul.mubr.bf16.gmra.mrb[0].mxu0 %v595
      %v1526 = vpop.f32.mrb[0].mxu0
      %v1527 = vadd.f32 0.0, %v1526
      %v1528 = vpop.f32.mrb[0].mxu0
      %v1529 = vpop.f32.mrb[0].mxu0
      %v1530 = vadd.f32 0.0, %v1529
      %v1531 = vpop.f32.mrb[0].mxu0
      %1532 = vdwg.mxu0
      %v1533 = vpack.c.bf16 %v1530, %v1527
      %s1534 = scalar_lea.vmem %s8, 96
      %v1535 = vld [vmem:[%s1534] sm:$0xf]
      %v1536 = vld [vmem:[%s1534 + $0x4] sm:$0xf]
      %v1537 = vld [vmem:[%s1534 + $0x8] sm:$0xf]
      %v1538 = vld [vmem:[%s1534 + $0xc] sm:$0xf]
      %v1539 = vld [vmem:[%s1534 + $0x10] sm:$0xf]
      %v1540 = vld [vmem:[%s1534 + $0x14] sm:$0xf]
      %v1541 = vld [vmem:[%s1534 + $0x18] sm:$0xf]
      %v1542 = vld [vmem:[%s1534 + $0x1c] sm:$0xf]
      %v1551 = vunpack.c.l.b16 %v1535
      %v1552 = vunpack.c.l.b16 %v1536
      %v1553 = vunpack.c.l.b16 %v1537
      %v1554 = vunpack.c.l.b16 %v1538
      %v1555 = vunpack.c.l.b16 %v1539
      %v1556 = vunpack.c.l.b16 %v1540
      %v1557 = vunpack.c.l.b16 %v1541
      %v1558 = vunpack.c.l.b16 %v1542
      %v1559 = vpack.c.b16 %v1552, %v1551
      %v1560 = vpack.c.b16 %v1554, %v1553
      %v1561 = vpack.c.b16 %v1556, %v1555
      %v1562 = vpack.c.b16 %v1558, %v1557
      %1567 = vmatprep.subr.bf16.mxu0 0
      %1568 = vmatpush1.bf16.msra.mxu0 %v1559
      %1569 = vmatprep.subr.bf16.mxu0 0
      %1570 = vmatpush1.bf16.msra.mxu0 %v1560
      %1571 = vmatprep.subr.bf16.mxu0 0
      %1572 = vmatpush1.bf16.msra.mxu0 %v1561
      %1573 = vmatprep.subr.bf16.mxu0 0
      %1574 = vmatpush1.bf16.msra.mxu0 %v1562
      %1575 = vmatprep.subr.bf16.mxu0 0
      %1576 = vmatpush1.bf16.msra.mxu0 0
      %1577 = vmatprep.subr.bf16.mxu0 0
      %1578 = vmatpush1.bf16.msra.mxu0 0
      %1579 = vmatprep.subr.bf16.mxu0 0
      %1580 = vmatpush1.bf16.msra.mxu0 0
      %1581 = vmatprep.subr.bf16.mxu0 0
      %1582 = vmatpush1.bf16.msra.mxu0 0
      %1583 = vmatprep.subr.bf16.mxu0 0
      %1584 = vmatpush1.bf16.msra.mxu0 0
      %1585 = vmatprep.subr.bf16.mxu0 0
      %1586 = vmatpush1.bf16.msra.mxu0 0
      %1587 = vmatprep.subr.bf16.mxu0 0
      %1588 = vmatpush1.bf16.msra.mxu0 0
      %1589 = vmatprep.subr.bf16.mxu0 0
      %1590 = vmatpush1.bf16.msra.mxu0 0
      %1591 = vmatprep.subr.bf16.mxu0 0
      %1592 = vmatpush1.bf16.msra.mxu0 0
      %1593 = vmatprep.subr.bf16.mxu0 0
      %1594 = vmatpush1.bf16.msra.mxu0 0
      %1595 = vmatprep.subr.bf16.mxu0 0
      %1596 = vmatpush1.bf16.msra.mxu0 0
      %1597 = vmatprep.subr.bf16.mxu0 0
      %1598 = vmatpush1.bf16.msra.mxu0 0
      %1599 = vmatprep.mubr.bf16.mxu0 0
      %1600 = vmatmul.mubr.bf16.gmra.mrb[0].mxu0 %v595
      %v1601 = vpop.f32.mrb[0].mxu0
      %v1602 = vadd.f32 0.0, %v1601
      %v1603 = vpop.f32.mrb[0].mxu0
      %v1604 = vpop.f32.mrb[0].mxu0
      %v1605 = vadd.f32 0.0, %v1604
      %v1606 = vpop.f32.mrb[0].mxu0
      %1607 = vdwg.mxu0
      %v1608 = vpack.c.bf16 %v1605, %v1602
      %s1609 = scalar_lea.vmem %s8, 128
      %v1610 = vld [vmem:[%s1609] sm:$0xf]
      %v1611 = vld [vmem:[%s1609 + $0x4] sm:$0xf]
      %v1612 = vld [vmem:[%s1609 + $0x8] sm:$0xf]
      %v1613 = vld [vmem:[%s1609 + $0xc] sm:$0xf]
      %v1614 = vld [vmem:[%s1609 + $0x10] sm:$0xf]
      %v1615 = vld [vmem:[%s1609 + $0x14] sm:$0xf]
      %v1616 = vld [vmem:[%s1609 + $0x18] sm:$0xf]
      %v1617 = vld [vmem:[%s1609 + $0x1c] sm:$0xf]
      %v1626 = vunpack.c.l.b16 %v1610
      %v1627 = vunpack.c.l.b16 %v1611
      %v1628 = vunpack.c.l.b16 %v1612
      %v1629 = vunpack.c.l.b16 %v1613
      %v1630 = vunpack.c.l.b16 %v1614
      %v1631 = vunpack.c.l.b16 %v1615
      %v1632 = vunpack.c.l.b16 %v1616
      %v1633 = vunpack.c.l.b16 %v1617
      %v1634 = vpack.c.b16 %v1627, %v1626
      %v1635 = vpack.c.b16 %v1629, %v1628
      %v1636 = vpack.c.b16 %v1631, %v1630
      %v1637 = vpack.c.b16 %v1633, %v1632
      %1642 = vmatprep.subr.bf16.mxu0 0
      %1643 = vmatpush1.bf16.msra.mxu0 %v1634
      %1644 = vmatprep.subr.bf16.mxu0 0
      %1645 = vmatpush1.bf16.msra.mxu0 %v1635
      %1646 = vmatprep.subr.bf16.mxu0 0
      %1647 = vmatpush1.bf16.msra.mxu0 %v1636
      %1648 = vmatprep.subr.bf16.mxu0 0
      %1649 = vmatpush1.bf16.msra.mxu0 %v1637
      %1650 = vmatprep.subr.bf16.mxu0 0
      %1651 = vmatpush1.bf16.msra.mxu0 0
      %1652 = vmatprep.subr.bf16.mxu0 0
      %1653 = vmatpush1.bf16.msra.mxu0 0
      %1654 = vmatprep.subr.bf16.mxu0 0
      %1655 = vmatpush1.bf16.msra.mxu0 0
      %1656 = vmatprep.subr.bf16.mxu0 0
      %1657 = vmatpush1.bf16.msra.mxu0 0
      %1658 = vmatprep.subr.bf16.mxu0 0
      %1659 = vmatpush1.bf16.msra.mxu0 0
      %1660 = vmatprep.subr.bf16.mxu0 0
      %1661 = vmatpush1.bf16.msra.mxu0 0
      %1662 = vmatprep.subr.bf16.mxu0 0
      %1663 = vmatpush1.bf16.msra.mxu0 0
      %1664 = vmatprep.subr.bf16.mxu0 0
      %1665 = vmatpush1.bf16.msra.mxu0 0
      %1666 = vmatprep.subr.bf16.mxu0 0
      %1667 = vmatpush1.bf16.msra.mxu0 0
      %1668 = vmatprep.subr.bf16.mxu0 0
      %1669 = vmatpush1.bf16.msra.mxu0 0
      %1670 = vmatprep.subr.bf16.mxu0 0
      %1671 = vmatpush1.bf16.msra.mxu0 0
      %1672 = vmatprep.subr.bf16.mxu0 0
      %1673 = vmatpush1.bf16.msra.mxu0 0
      %1674 = vmatprep.mubr.bf16.mxu0 0
      %1675 = vmatmul.mubr.bf16.gmra.mrb[0].mxu0 %v595
      %v1676 = vpop.f32.mrb[0].mxu0
      %v1677 = vadd.f32 0.0, %v1676
      %v1678 = vpop.f32.mrb[0].mxu0
      %v1679 = vpop.f32.mrb[0].mxu0
      %v1680 = vadd.f32 0.0, %v1679
      %v1681 = vpop.f32.mrb[0].mxu0
      %1682 = vdwg.mxu0
      %v1683 = vpack.c.bf16 %v1680, %v1677
      %s1684 = scalar_lea.vmem %s8, 160
      %v1685 = vld [vmem:[%s1684] sm:$0xf]
      %v1686 = vld [vmem:[%s1684 + $0x4] sm:$0xf]
      %v1687 = vld [vmem:[%s1684 + $0x8] sm:$0xf]
      %v1688 = vld [vmem:[%s1684 + $0xc] sm:$0xf]
      %v1689 = vld [vmem:[%s1684 + $0x10] sm:$0xf]
      %v1690 = vld [vmem:[%s1684 + $0x14] sm:$0xf]
      %v1691 = vld [vmem:[%s1684 + $0x18] sm:$0xf]
      %v1692 = vld [vmem:[%s1684 + $0x1c] sm:$0xf]
      %v1701 = vunpack.c.l.b16 %v1685
      %v1702 = vunpack.c.l.b16 %v1686
      %v1703 = vunpack.c.l.b16 %v1687
      %v1704 = vunpack.c.l.b16 %v1688
      %v1705 = vunpack.c.l.b16 %v1689
      %v1706 = vunpack.c.l.b16 %v1690
      %v1707 = vunpack.c.l.b16 %v1691
      %v1708 = vunpack.c.l.b16 %v1692
      %v1709 = vpack.c.b16 %v1702, %v1701
      %v1710 = vpack.c.b16 %v1704, %v1703
      %v1711 = vpack.c.b16 %v1706, %v1705
      %v1712 = vpack.c.b16 %v1708, %v1707
      %1717 = vmatprep.subr.bf16.mxu0 0
      %1718 = vmatpush1.bf16.msra.mxu0 %v1709
      %1719 = vmatprep.subr.bf16.mxu0 0
      %1720 = vmatpush1.bf16.msra.mxu0 %v1710
      %1721 = vmatprep.subr.bf16.mxu0 0
      %1722 = vmatpush1.bf16.msra.mxu0 %v1711
      %1723 = vmatprep.subr.bf16.mxu0 0
      %1724 = vmatpush1.bf16.msra.mxu0 %v1712
      %1725 = vmatprep.subr.bf16.mxu0 0
      %1726 = vmatpush1.bf16.msra.mxu0 0
      %1727 = vmatprep.subr.bf16.mxu0 0
      %1728 = vmatpush1.bf16.msra.mxu0 0
      %1729 = vmatprep.subr.bf16.mxu0 0
      %1730 = vmatpush1.bf16.msra.mxu0 0
      %1731 = vmatprep.subr.bf16.mxu0 0
      %1732 = vmatpush1.bf16.msra.mxu0 0
      %1733 = vmatprep.subr.bf16.mxu0 0
      %1734 = vmatpush1.bf16.msra.mxu0 0
      %1735 = vmatprep.subr.bf16.mxu0 0
      %1736 = vmatpush1.bf16.msra.mxu0 0
      %1737 = vmatprep.subr.bf16.mxu0 0
      %1738 = vmatpush1.bf16.msra.mxu0 0
      %1739 = vmatprep.subr.bf16.mxu0 0
      %1740 = vmatpush1.bf16.msra.mxu0 0
      %1741 = vmatprep.subr.bf16.mxu0 0
      %1742 = vmatpush1.bf16.msra.mxu0 0
      %1743 = vmatprep.subr.bf16.mxu0 0
      %1744 = vmatpush1.bf16.msra.mxu0 0
      %1745 = vmatprep.subr.bf16.mxu0 0
      %1746 = vmatpush1.bf16.msra.mxu0 0
      %1747 = vmatprep.subr.bf16.mxu0 0
      %1748 = vmatpush1.bf16.msra.mxu0 0
      %1749 = vmatprep.mubr.bf16.mxu0 0
      %1750 = vmatmul.mubr.bf16.gmra.mrb[0].mxu0 %v595
      %v1751 = vpop.f32.mrb[0].mxu0
      %v1752 = vadd.f32 0.0, %v1751
      %v1753 = vpop.f32.mrb[0].mxu0
      %v1754 = vpop.f32.mrb[0].mxu0
      %v1755 = vadd.f32 0.0, %v1754
      %v1756 = vpop.f32.mrb[0].mxu0
      %1757 = vdwg.mxu0
      %v1758 = vpack.c.bf16 %v1755, %v1752
      %s1759 = scalar_lea.vmem %s8, 192
      %v1760 = vld [vmem:[%s1759] sm:$0xf]
      %v1761 = vld [vmem:[%s1759 + $0x4] sm:$0xf]
      %v1762 = vld [vmem:[%s1759 + $0x8] sm:$0xf]
      %v1763 = vld [vmem:[%s1759 + $0xc] sm:$0xf]
      %v1764 = vld [vmem:[%s1759 + $0x10] sm:$0xf]
      %v1765 = vld [vmem:[%s1759 + $0x14] sm:$0xf]
      %v1766 = vld [vmem:[%s1759 + $0x18] sm:$0xf]
      %v1767 = vld [vmem:[%s1759 + $0x1c] sm:$0xf]
      %v1776 = vunpack.c.l.b16 %v1760
      %v1777 = vunpack.c.l.b16 %v1761
      %v1778 = vunpack.c.l.b16 %v1762
      %v1779 = vunpack.c.l.b16 %v1763
      %v1780 = vunpack.c.l.b16 %v1764
      %v1781 = vunpack.c.l.b16 %v1765
      %v1782 = vunpack.c.l.b16 %v1766
      %v1783 = vunpack.c.l.b16 %v1767
      %v1784 = vpack.c.b16 %v1777, %v1776
      %v1785 = vpack.c.b16 %v1779, %v1778
      %v1786 = vpack.c.b16 %v1781, %v1780
      %v1787 = vpack.c.b16 %v1783, %v1782
      %1792 = vmatprep.subr.bf16.mxu0 0
      %1793 = vmatpush1.bf16.msra.mxu0 %v1784
      %1794 = vmatprep.subr.bf16.mxu0 0
      %1795 = vmatpush1.bf16.msra.mxu0 %v1785
      %1796 = vmatprep.subr.bf16.mxu0 0
      %1797 = vmatpush1.bf16.msra.mxu0 %v1786
      %1798 = vmatprep.subr.bf16.mxu0 0
      %1799 = vmatpush1.bf16.msra.mxu0 %v1787
      %1800 = vmatprep.subr.bf16.mxu0 0
      %1801 = vmatpush1.bf16.msra.mxu0 0
      %1802 = vmatprep.subr.bf16.mxu0 0
      %1803 = vmatpush1.bf16.msra.mxu0 0
      %1804 = vmatprep.subr.bf16.mxu0 0
      %1805 = vmatpush1.bf16.msra.mxu0 0
      %1806 = vmatprep.subr.bf16.mxu0 0
      %1807 = vmatpush1.bf16.msra.mxu0 0
      %1808 = vmatprep.subr.bf16.mxu0 0
      %1809 = vmatpush1.bf16.msra.mxu0 0
      %1810 = vmatprep.subr.bf16.mxu0 0
      %1811 = vmatpush1.bf16.msra.mxu0 0
      %1812 = vmatprep.subr.bf16.mxu0 0
      %1813 = vmatpush1.bf16.msra.mxu0 0
      %1814 = vmatprep.subr.bf16.mxu0 0
      %1815 = vmatpush1.bf16.msra.mxu0 0
      %1816 = vmatprep.subr.bf16.mxu0 0
      %1817 = vmatpush1.bf16.msra.mxu0 0
      %1818 = vmatprep.subr.bf16.mxu0 0
      %1819 = vmatpush1.bf16.msra.mxu0 0
      %1820 = vmatprep.subr.bf16.mxu0 0
      %1821 = vmatpush1.bf16.msra.mxu0 0
      %1822 = vmatprep.subr.bf16.mxu0 0
      %1823 = vmatpush1.bf16.msra.mxu0 0
      %1824 = vmatprep.mubr.bf16.mxu0 0
      %1825 = vmatmul.mubr.bf16.gmra.mrb[0].mxu0 %v595
      %v1826 = vpop.f32.mrb[0].mxu0
      %v1827 = vadd.f32 0.0, %v1826
      %v1828 = vpop.f32.mrb[0].mxu0
      %v1829 = vpop.f32.mrb[0].mxu0
      %v1830 = vadd.f32 0.0, %v1829
      %v1831 = vpop.f32.mrb[0].mxu0
      %1832 = vdwg.mxu0
      %v1833 = vpack.c.bf16 %v1830, %v1827
      %s1834 = scalar_lea.vmem %s8, 224
      %v1835 = vld [vmem:[%s1834] sm:$0xf]
      %v1836 = vld [vmem:[%s1834 + $0x4] sm:$0xf]
      %v1837 = vld [vmem:[%s1834 + $0x8] sm:$0xf]
      %v1838 = vld [vmem:[%s1834 + $0xc] sm:$0xf]
      %v1839 = vld [vmem:[%s1834 + $0x10] sm:$0xf]
      %v1840 = vld [vmem:[%s1834 + $0x14] sm:$0xf]
      %v1841 = vld [vmem:[%s1834 + $0x18] sm:$0xf]
      %v1842 = vld [vmem:[%s1834 + $0x1c] sm:$0xf]
      %v1851 = vunpack.c.l.b16 %v1835
      %v1852 = vunpack.c.l.b16 %v1836
      %v1853 = vunpack.c.l.b16 %v1837
      %v1854 = vunpack.c.l.b16 %v1838
      %v1855 = vunpack.c.l.b16 %v1839
      %v1856 = vunpack.c.l.b16 %v1840
      %v1857 = vunpack.c.l.b16 %v1841
      %v1858 = vunpack.c.l.b16 %v1842
      %v1859 = vpack.c.b16 %v1852, %v1851
      %v1860 = vpack.c.b16 %v1854, %v1853
      %v1861 = vpack.c.b16 %v1856, %v1855
      %v1862 = vpack.c.b16 %v1858, %v1857
      %1867 = vmatprep.subr.bf16.mxu0 0
      %1868 = vmatpush1.bf16.msra.mxu0 %v1859
      %1869 = vmatprep.subr.bf16.mxu0 0
      %1870 = vmatpush1.bf16.msra.mxu0 %v1860
      %1871 = vmatprep.subr.bf16.mxu0 0
      %1872 = vmatpush1.bf16.msra.mxu0 %v1861
      %1873 = vmatprep.subr.bf16.mxu0 0
      %1874 = vmatpush1.bf16.msra.mxu0 %v1862
      %1875 = vmatprep.subr.bf16.mxu0 0
      %1876 = vmatpush1.bf16.msra.mxu0 0
      %1877 = vmatprep.subr.bf16.mxu0 0
      %1878 = vmatpush1.bf16.msra.mxu0 0
      %1879 = vmatprep.subr.bf16.mxu0 0
      %1880 = vmatpush1.bf16.msra.mxu0 0
      %1881 = vmatprep.subr.bf16.mxu0 0
      %1882 = vmatpush1.bf16.msra.mxu0 0
      %1883 = vmatprep.subr.bf16.mxu0 0
      %1884 = vmatpush1.bf16.msra.mxu0 0
      %1885 = vmatprep.subr.bf16.mxu0 0
      %1886 = vmatpush1.bf16.msra.mxu0 0
      %1887 = vmatprep.subr.bf16.mxu0 0
      %1888 = vmatpush1.bf16.msra.mxu0 0
      %1889 = vmatprep.subr.bf16.mxu0 0
      %1890 = vmatpush1.bf16.msra.mxu0 0
      %1891 = vmatprep.subr.bf16.mxu0 0
      %1892 = vmatpush1.bf16.msra.mxu0 0
      %1893 = vmatprep.subr.bf16.mxu0 0
      %1894 = vmatpush1.bf16.msra.mxu0 0
      %1895 = vmatprep.subr.bf16.mxu0 0
      %1896 = vmatpush1.bf16.msra.mxu0 0
      %1897 = vmatprep.subr.bf16.mxu0 0
      %1898 = vmatpush1.bf16.msra.mxu0 0
      %1899 = vmatprep.mubr.bf16.mxu0 0
      %1900 = vmatmul.mubr.bf16.gmra.mrb[0].mxu0 %v595
      %v1901 = vpop.f32.mrb[0].mxu0
      %v1902 = vadd.f32 0.0, %v1901
      %v1903 = vpop.f32.mrb[0].mxu0
      %v1904 = vpop.f32.mrb[0].mxu0
      %v1905 = vadd.f32 0.0, %v1904
      %v1906 = vpop.f32.mrb[0].mxu0
      %1907 = vdwg.mxu0
      %v1908 = vpack.c.bf16 %v1905, %v1902
      %s1909 = scalar_lea.vmem %s8, 256
      %v1910 = vld [vmem:[%s1909] sm:$0xf]
      %v1911 = vld [vmem:[%s1909 + $0x4] sm:$0xf]
      %v1912 = vld [vmem:[%s1909 + $0x8] sm:$0xf]
      %v1913 = vld [vmem:[%s1909 + $0xc] sm:$0xf]
      %v1914 = vld [vmem:[%s1909 + $0x10] sm:$0xf]
      %v1915 = vld [vmem:[%s1909 + $0x14] sm:$0xf]
      %v1916 = vld [vmem:[%s1909 + $0x18] sm:$0xf]
      %v1917 = vld [vmem:[%s1909 + $0x1c] sm:$0xf]
      %v1926 = vunpack.c.l.b16 %v1910
      %v1927 = vunpack.c.l.b16 %v1911
      %v1928 = vunpack.c.l.b16 %v1912
      %v1929 = vunpack.c.l.b16 %v1913
      %v1930 = vunpack.c.l.b16 %v1914
      %v1931 = vunpack.c.l.b16 %v1915
      %v1932 = vunpack.c.l.b16 %v1916
      %v1933 = vunpack.c.l.b16 %v1917
      %v1934 = vpack.c.b16 %v1927, %v1926
      %v1935 = vpack.c.b16 %v1929, %v1928
      %v1936 = vpack.c.b16 %v1931, %v1930
      %v1937 = vpack.c.b16 %v1933, %v1932
      %1942 = vmatprep.subr.bf16.mxu0 0
      %1943 = vmatpush1.bf16.msra.mxu0 %v1934
      %1944 = vmatprep.subr.bf16.mxu0 0
      %1945 = vmatpush1.bf16.msra.mxu0 %v1935
      %1946 = vmatprep.subr.bf16.mxu0 0
      %1947 = vmatpush1.bf16.msra.mxu0 %v1936
      %1948 = vmatprep.subr.bf16.mxu0 0
      %1949 = vmatpush1.bf16.msra.mxu0 %v1937
      %1950 = vmatprep.subr.bf16.mxu0 0
      %1951 = vmatpush1.bf16.msra.mxu0 0
      %1952 = vmatprep.subr.bf16.mxu0 0
      %1953 = vmatpush1.bf16.msra.mxu0 0
      %1954 = vmatprep.subr.bf16.mxu0 0
      %1955 = vmatpush1.bf16.msra.mxu0 0
      %1956 = vmatprep.subr.bf16.mxu0 0
      %1957 = vmatpush1.bf16.msra.mxu0 0
      %1958 = vmatprep.subr.bf16.mxu0 0
      %1959 = vmatpush1.bf16.msra.mxu0 0
      %1960 = vmatprep.subr.bf16.mxu0 0
      %1961 = vmatpush1.bf16.msra.mxu0 0
      %1962 = vmatprep.subr.bf16.mxu0 0
      %1963 = vmatpush1.bf16.msra.mxu0 0
      %1964 = vmatprep.subr.bf16.mxu0 0
      %1965 = vmatpush1.bf16.msra.mxu0 0
      %1966 = vmatprep.subr.bf16.mxu0 0
      %1967 = vmatpush1.bf16.msra.mxu0 0
      %1968 = vmatprep.subr.bf16.mxu0 0
      %1969 = vmatpush1.bf16.msra.mxu0 0
      %1970 = vmatprep.subr.bf16.mxu0 0
      %1971 = vmatpush1.bf16.msra.mxu0 0
      %1972 = vmatprep.subr.bf16.mxu0 0
      %1973 = vmatpush1.bf16.msra.mxu0 0
      %1974 = vmatprep.mubr.bf16.mxu0 0
      %1975 = vmatmul.mubr.bf16.gmra.mrb[0].mxu0 %v595
      %v1976 = vpop.f32.mrb[0].mxu0
      %v1977 = vadd.f32 0.0, %v1976
      %v1978 = vpop.f32.mrb[0].mxu0
      %v1979 = vpop.f32.mrb[0].mxu0
      %v1980 = vadd.f32 0.0, %v1979
      %v1981 = vpop.f32.mrb[0].mxu0
      %1982 = vdwg.mxu0
      %v1983 = vpack.c.bf16 %v1980, %v1977
      %v1984 = vld [vmem:[%s6] sm:$0xff]
      %v1985 = vld [vmem:[%s6 + $0x8] sm:$0xff]
      %v1986 = vld [vmem:[%s6 + $0x10] sm:$0x11]
      %v1987 = vld [vmem:[%s7] sm:$0xff]
      %v1988 = vld [vmem:[%s7 + $0x8] sm:$0xff]
      %v1989 = vld [vmem:[%s7 + $0x10] sm:$0x3]
      %1991 = vset.pattern.permute.xlu0 0
      %1992 = vperm.xlu0 %1991, %v1987
      %v1993 = vpop.permute.xlu0 %1992
      %1996 = vset.pattern.permute.xlu0 0
      %1997 = vperm.xlu0 %1996, %v1988
      %v1998 = vpop.permute.xlu0 %1997
      %2001 = vset.pattern.permute.xlu0 0
      %2002 = vperm.xlu0 %2001, %v1989
      %v2003 = vpop.permute.xlu0 %2002
      %v2008 = vunpack.c.l.b16 %v1984
      %v2009 = vunpack.c.h.b16 %v1984
      %v2010 = vunpack.c.l.b16 %v1985
      %v2011 = vunpack.c.h.b16 %v1985
      %v2012 = vunpack.c.l.b16 %v1986
      %v2013 = vunpack.c.h.b16 %v1986
      %v2014 = vpack.c.b16 %v2010, %v2008
      %v2015 = vpack.c.b16 %v2011, %v2009
      %v2016 = vpack.c.b16 %v2012, %v2012
      %v2017 = vpack.c.b16 %v2013, %v2013
      %v2021 = vsel %vm1262, %v2015, 0
      %v2024 = vsel %vm1262, %v2017, 0
      %2026 = vmatprep.subr.bf16.mxu0 0
      %2027 = vmatpush1.bf16.msra.mxu0 %v1383
      %2028 = vmatprep.subr.bf16.mxu0 0
      %2029 = vmatpush1.bf16.msra.mxu0 %v1458
      %2030 = vmatprep.subr.bf16.mxu0 0
      %2031 = vmatpush1.bf16.msra.mxu0 %v1533
      %2032 = vmatprep.subr.bf16.mxu0 0
      %2033 = vmatpush1.bf16.msra.mxu0 %v1608
      %2034 = vmatprep.subr.bf16.mxu0 0
      %2035 = vmatpush1.bf16.msra.mxu0 %v1683
      %2036 = vmatprep.subr.bf16.mxu0 0
      %2037 = vmatpush1.bf16.msra.mxu0 %v1758
      %2038 = vmatprep.subr.bf16.mxu0 0
      %2039 = vmatpush1.bf16.msra.mxu0 %v1833
      %2040 = vmatprep.subr.bf16.mxu0 0
      %2041 = vmatpush1.bf16.msra.mxu0 %v1908
      %2042 = vmatprep.subr.bf16.mxu0 0
      %2043 = vmatpush1.bf16.msra.mxu0 %v1983
      %2044 = vmatprep.subr.bf16.mxu0 0
      %2045 = vmatpush1.bf16.msra.mxu0 0
      %2046 = vmatprep.subr.bf16.mxu0 0
      %2047 = vmatpush1.bf16.msra.mxu0 0
      %2048 = vmatprep.subr.bf16.mxu0 0
      %2049 = vmatpush1.bf16.msra.mxu0 0
      %2050 = vmatprep.subr.bf16.mxu0 0
      %2051 = vmatpush1.bf16.msra.mxu0 0
      %2052 = vmatprep.subr.bf16.mxu0 0
      %2053 = vmatpush1.bf16.msra.mxu0 0
      %2054 = vmatprep.subr.bf16.mxu0 0
      %2055 = vmatpush1.bf16.msra.mxu0 0
      %2056 = vmatprep.subr.bf16.mxu0 0
      %2057 = vmatpush1.bf16.msra.mxu0 0
      %2058 = vmatprep.mubr.bf16.mxu0 %v2021
      %2059 = vmatmul.mubr.bf16.gmra.mrb[0].mxu0 %v2014
      %v2060 = vpop.f32.mrb[0].mxu0
      %v2061 = vadd.f32 %v1993, %v2060
      %v2062 = vpop.f32.mrb[0].mxu0
      %v2063 = vpop.f32.mrb[0].mxu0
      %v2064 = vadd.f32 %v1998, %v2063
      %v2065 = vpop.f32.mrb[0].mxu0
      %2066 = vmatprep.mubr.bf16.mxu0 %v2024
      %2067 = vmatmul.mubr.bf16.gmra.mrb[0].mxu0 %v2016
      %v2068 = vpop.f32.mrb[0].mxu0
      %v2069 = vadd.f32 %v2003, %v2068
      %v2070 = vpop.f32.mrb[0].mxu0
      %v2071 = vpop.f32.mrb[0].mxu0
      %v2072 = vpop.f32.mrb[0].mxu0
      %2073 = vdwg.mxu0
      %v2074 = vld [vmem:[%s11] sm:$0xf]
      %v2075 = vld [vmem:[%s11 + $0x4] sm:$0xf]
      %v2078 = vunpack.c.l.b16 %v2074
      %v2079 = vunpack.c.l.b16 %v2075
      %v2080 = vpack.c.b16 %v2079, %v2078
      %v2083 = vsel %vm1262, %v1309, 0
      %2085 = vmatprep.subr.bf16.mxu0 0
      %2086 = vmatpush1.bf16.msra.mxu0 %v2080
      %2087 = vmatprep.subr.bf16.mxu0 0
      %2088 = vmatpush1.bf16.msra.mxu0 0
      %2089 = vmatprep.subr.bf16.mxu0 0
      %2090 = vmatpush1.bf16.msra.mxu0 0
      %2091 = vmatprep.subr.bf16.mxu0 0
      %2092 = vmatpush1.bf16.msra.mxu0 0
      %2093 = vmatprep.subr.bf16.mxu0 0
      %2094 = vmatpush1.bf16.msra.mxu0 0
      %2095 = vmatprep.subr.bf16.mxu0 0
      %2096 = vmatpush1.bf16.msra.mxu0 0
      %2097 = vmatprep.subr.bf16.mxu0 0
      %2098 = vmatpush1.bf16.msra.mxu0 0
      %2099 = vmatprep.subr.bf16.mxu0 0
      %2100 = vmatpush1.bf16.msra.mxu0 0
      %2101 = vmatprep.subr.bf16.mxu0 0
      %2102 = vmatpush1.bf16.msra.mxu0 0
      %2103 = vmatprep.subr.bf16.mxu0 0
      %2104 = vmatpush1.bf16.msra.mxu0 0
      %2105 = vmatprep.subr.bf16.mxu0 0
      %2106 = vmatpush1.bf16.msra.mxu0 0
      %2107 = vmatprep.subr.bf16.mxu0 0
      %2108 = vmatpush1.bf16.msra.mxu0 0
      %2109 = vmatprep.subr.bf16.mxu0 0
      %2110 = vmatpush1.bf16.msra.mxu0 0
      %2111 = vmatprep.subr.bf16.mxu0 0
      %2112 = vmatpush1.bf16.msra.mxu0 0
      %2113 = vmatprep.subr.bf16.mxu0 0
      %2114 = vmatpush1.bf16.msra.mxu0 0
      %2115 = vmatprep.subr.bf16.mxu0 0
      %2116 = vmatpush1.bf16.msra.mxu0 0
      %2117 = vmatprep.mubr.bf16.mxu0 0
      %2118 = vmatmul.mubr.bf16.gmra.mrb[0].mxu0 %v2083
      %v2119 = vpop.f32.mrb[0].mxu0
      %v2120 = vadd.f32 0.0, %v2119
      %v2121 = vpop.f32.mrb[0].mxu0
      %v2122 = vpop.f32.mrb[0].mxu0
      %v2123 = vadd.f32 0.0, %v2122
      %v2124 = vpop.f32.mrb[0].mxu0
      %2125 = vdwg.mxu0
      %v2126 = vpack.c.bf16 %v2123, %v2120
      %s2127 = scalar_lea.vmem %s11, 8
      %v2128 = vld [vmem:[%s2127] sm:$0xf]
      %v2129 = vld [vmem:[%s2127 + $0x4] sm:$0xf]
      %v2132 = vunpack.c.l.b16 %v2128
      %v2133 = vunpack.c.l.b16 %v2129
      %v2134 = vpack.c.b16 %v2133, %v2132
      %2136 = vmatprep.subr.bf16.mxu0 0
      %2137 = vmatpush1.bf16.msra.mxu0 %v2134
      %2138 = vmatprep.subr.bf16.mxu0 0
      %2139 = vmatpush1.bf16.msra.mxu0 0
      %2140 = vmatprep.subr.bf16.mxu0 0
      %2141 = vmatpush1.bf16.msra.mxu0 0
      %2142 = vmatprep.subr.bf16.mxu0 0
      %2143 = vmatpush1.bf16.msra.mxu0 0
      %2144 = vmatprep.subr.bf16.mxu0 0
      %2145 = vmatpush1.bf16.msra.mxu0 0
      %2146 = vmatprep.subr.bf16.mxu0 0
      %2147 = vmatpush1.bf16.msra.mxu0 0
      %2148 = vmatprep.subr.bf16.mxu0 0
      %2149 = vmatpush1.bf16.msra.mxu0 0
      %2150 = vmatprep.subr.bf16.mxu0 0
      %2151 = vmatpush1.bf16.msra.mxu0 0
      %2152 = vmatprep.subr.bf16.mxu0 0
      %2153 = vmatpush1.bf16.msra.mxu0 0
      %2154 = vmatprep.subr.bf16.mxu0 0
      %2155 = vmatpush1.bf16.msra.mxu0 0
      %2156 = vmatprep.subr.bf16.mxu0 0
      %2157 = vmatpush1.bf16.msra.mxu0 0
      %2158 = vmatprep.subr.bf16.mxu0 0
      %2159 = vmatpush1.bf16.msra.mxu0 0
      %2160 = vmatprep.subr.bf16.mxu0 0
      %2161 = vmatpush1.bf16.msra.mxu0 0
      %2162 = vmatprep.subr.bf16.mxu0 0
      %2163 = vmatpush1.bf16.msra.mxu0 0
      %2164 = vmatprep.subr.bf16.mxu0 0
      %2165 = vmatpush1.bf16.msra.mxu0 0
      %2166 = vmatprep.subr.bf16.mxu0 0
      %2167 = vmatpush1.bf16.msra.mxu0 0
      %2168 = vmatprep.mubr.bf16.mxu0 0
      %2169 = vmatmul.mubr.bf16.gmra.mrb[0].mxu0 %v2083
      %v2170 = vpop.f32.mrb[0].mxu0
      %v2171 = vadd.f32 0.0, %v2170
      %v2172 = vpop.f32.mrb[0].mxu0
      %v2173 = vpop.f32.mrb[0].mxu0
      %v2174 = vadd.f32 0.0, %v2173
      %v2175 = vpop.f32.mrb[0].mxu0
      %2176 = vdwg.mxu0
      %v2177 = vpack.c.bf16 %v2174, %v2171
      %s2178 = scalar_lea.vmem %s11, 16
      %v2179 = vld [vmem:[%s2178] sm:$0xf]
      %v2180 = vld [vmem:[%s2178 + $0x4] sm:$0xf]
      %v2183 = vunpack.c.l.b16 %v2179
      %v2184 = vunpack.c.l.b16 %v2180
      %v2185 = vpack.c.b16 %v2184, %v2183
      %2187 = vmatprep.subr.bf16.mxu0 0
      %2188 = vmatpush1.bf16.msra.mxu0 %v2185
      %2189 = vmatprep.subr.bf16.mxu0 0
      %2190 = vmatpush1.bf16.msra.mxu0 0
      %2191 = vmatprep.subr.bf16.mxu0 0
      %2192 = vmatpush1.bf16.msra.mxu0 0
      %2193 = vmatprep.subr.bf16.mxu0 0
      %2194 = vmatpush1.bf16.msra.mxu0 0
      %2195 = vmatprep.subr.bf16.mxu0 0
      %2196 = vmatpush1.bf16.msra.mxu0 0
      %2197 = vmatprep.subr.bf16.mxu0 0
      %2198 = vmatpush1.bf16.msra.mxu0 0
      %2199 = vmatprep.subr.bf16.mxu0 0
      %2200 = vmatpush1.bf16.msra.mxu0 0
      %2201 = vmatprep.subr.bf16.mxu0 0
      %2202 = vmatpush1.bf16.msra.mxu0 0
      %2203 = vmatprep.subr.bf16.mxu0 0
      %2204 = vmatpush1.bf16.msra.mxu0 0
      %2205 = vmatprep.subr.bf16.mxu0 0
      %2206 = vmatpush1.bf16.msra.mxu0 0
      %2207 = vmatprep.subr.bf16.mxu0 0
      %2208 = vmatpush1.bf16.msra.mxu0 0
      %2209 = vmatprep.subr.bf16.mxu0 0
      %2210 = vmatpush1.bf16.msra.mxu0 0
      %2211 = vmatprep.subr.bf16.mxu0 0
      %2212 = vmatpush1.bf16.msra.mxu0 0
      %2213 = vmatprep.subr.bf16.mxu0 0
      %2214 = vmatpush1.bf16.msra.mxu0 0
      %2215 = vmatprep.subr.bf16.mxu0 0
      %2216 = vmatpush1.bf16.msra.mxu0 0
      %2217 = vmatprep.subr.bf16.mxu0 0
      %2218 = vmatpush1.bf16.msra.mxu0 0
      %2219 = vmatprep.mubr.bf16.mxu0 0
      %2220 = vmatmul.mubr.bf16.gmra.mrb[0].mxu0 %v2083
      %v2221 = vpop.f32.mrb[0].mxu0
      %v2222 = vadd.f32 0.0, %v2221
      %v2223 = vpop.f32.mrb[0].mxu0
      %v2224 = vpop.f32.mrb[0].mxu0
      %v2225 = vadd.f32 0.0, %v2224
      %v2226 = vpop.f32.mrb[0].mxu0
      %2227 = vdwg.mxu0
      %v2228 = vpack.c.bf16 %v2225, %v2222
      %s2229 = scalar_lea.vmem %s11, 24
      %v2230 = vld [vmem:[%s2229] sm:$0xf]
      %v2231 = vld [vmem:[%s2229 + $0x4] sm:$0xf]
      %v2234 = vunpack.c.l.b16 %v2230
      %v2235 = vunpack.c.l.b16 %v2231
      %v2236 = vpack.c.b16 %v2235, %v2234
      %2238 = vmatprep.subr.bf16.mxu0 0
      %2239 = vmatpush1.bf16.msra.mxu0 %v2236
      %2240 = vmatprep.subr.bf16.mxu0 0
      %2241 = vmatpush1.bf16.msra.mxu0 0
      %2242 = vmatprep.subr.bf16.mxu0 0
      %2243 = vmatpush1.bf16.msra.mxu0 0
      %2244 = vmatprep.subr.bf16.mxu0 0
      %2245 = vmatpush1.bf16.msra.mxu0 0
      %2246 = vmatprep.subr.bf16.mxu0 0
      %2247 = vmatpush1.bf16.msra.mxu0 0
      %2248 = vmatprep.subr.bf16.mxu0 0
      %2249 = vmatpush1.bf16.msra.mxu0 0
      %2250 = vmatprep.subr.bf16.mxu0 0
      %2251 = vmatpush1.bf16.msra.mxu0 0
      %2252 = vmatprep.subr.bf16.mxu0 0
      %2253 = vmatpush1.bf16.msra.mxu0 0
      %2254 = vmatprep.subr.bf16.mxu0 0
      %2255 = vmatpush1.bf16.msra.mxu0 0
      %2256 = vmatprep.subr.bf16.mxu0 0
      %2257 = vmatpush1.bf16.msra.mxu0 0
      %2258 = vmatprep.subr.bf16.mxu0 0
      %2259 = vmatpush1.bf16.msra.mxu0 0
      %2260 = vmatprep.subr.bf16.mxu0 0
      %2261 = vmatpush1.bf16.msra.mxu0 0
      %2262 = vmatprep.subr.bf16.mxu0 0
      %2263 = vmatpush1.bf16.msra.mxu0 0
      %2264 = vmatprep.subr.bf16.mxu0 0
      %2265 = vmatpush1.bf16.msra.mxu0 0
      %2266 = vmatprep.subr.bf16.mxu0 0
      %2267 = vmatpush1.bf16.msra.mxu0 0
      %2268 = vmatprep.subr.bf16.mxu0 0
      %2269 = vmatpush1.bf16.msra.mxu0 0
      %2270 = vmatprep.mubr.bf16.mxu0 0
      %2271 = vmatmul.mubr.bf16.gmra.mrb[0].mxu0 %v2083
      %v2272 = vpop.f32.mrb[0].mxu0
      %v2273 = vadd.f32 0.0, %v2272
      %v2274 = vpop.f32.mrb[0].mxu0
      %v2275 = vpop.f32.mrb[0].mxu0
      %v2276 = vadd.f32 0.0, %v2275
      %v2277 = vpop.f32.mrb[0].mxu0
      %2278 = vdwg.mxu0
      %v2279 = vpack.c.bf16 %v2276, %v2273
      %s2280 = scalar_lea.vmem %s11, 32
      %v2281 = vld [vmem:[%s2280] sm:$0xf]
      %v2282 = vld [vmem:[%s2280 + $0x4] sm:$0xf]
      %v2285 = vunpack.c.l.b16 %v2281
      %v2286 = vunpack.c.l.b16 %v2282
      %v2287 = vpack.c.b16 %v2286, %v2285
      %2289 = vmatprep.subr.bf16.mxu0 0
      %2290 = vmatpush1.bf16.msra.mxu0 %v2287
      %2291 = vmatprep.subr.bf16.mxu0 0
      %2292 = vmatpush1.bf16.msra.mxu0 0
      %2293 = vmatprep.subr.bf16.mxu0 0
      %2294 = vmatpush1.bf16.msra.mxu0 0
      %2295 = vmatprep.subr.bf16.mxu0 0
      %2296 = vmatpush1.bf16.msra.mxu0 0
      %2297 = vmatprep.subr.bf16.mxu0 0
      %2298 = vmatpush1.bf16.msra.mxu0 0
      %2299 = vmatprep.subr.bf16.mxu0 0
      %2300 = vmatpush1.bf16.msra.mxu0 0
      %2301 = vmatprep.subr.bf16.mxu0 0
      %2302 = vmatpush1.bf16.msra.mxu0 0
      %2303 = vmatprep.subr.bf16.mxu0 0
      %2304 = vmatpush1.bf16.msra.mxu0 0
      %2305 = vmatprep.subr.bf16.mxu0 0
      %2306 = vmatpush1.bf16.msra.mxu0 0
      %2307 = vmatprep.subr.bf16.mxu0 0
      %2308 = vmatpush1.bf16.msra.mxu0 0
      %2309 = vmatprep.subr.bf16.mxu0 0
      %2310 = vmatpush1.bf16.msra.mxu0 0
      %2311 = vmatprep.subr.bf16.mxu0 0
      %2312 = vmatpush1.bf16.msra.mxu0 0
      %2313 = vmatprep.subr.bf16.mxu0 0
      %2314 = vmatpush1.bf16.msra.mxu0 0
      %2315 = vmatprep.subr.bf16.mxu0 0
      %2316 = vmatpush1.bf16.msra.mxu0 0
      %2317 = vmatprep.subr.bf16.mxu0 0
      %2318 = vmatpush1.bf16.msra.mxu0 0
      %2319 = vmatprep.subr.bf16.mxu0 0
      %2320 = vmatpush1.bf16.msra.mxu0 0
      %2321 = vmatprep.mubr.bf16.mxu0 0
      %2322 = vmatmul.mubr.bf16.gmra.mrb[0].mxu0 %v2083
      %v2323 = vpop.f32.mrb[0].mxu0
      %v2324 = vadd.f32 0.0, %v2323
      %v2325 = vpop.f32.mrb[0].mxu0
      %v2326 = vpop.f32.mrb[0].mxu0
      %v2327 = vadd.f32 0.0, %v2326
      %v2328 = vpop.f32.mrb[0].mxu0
      %2329 = vdwg.mxu0
      %v2330 = vpack.c.bf16 %v2327, %v2324
      %s2331 = scalar_lea.vmem %s11, 40
      %v2332 = vld [vmem:[%s2331] sm:$0xf]
      %v2333 = vld [vmem:[%s2331 + $0x4] sm:$0xf]
      %v2336 = vunpack.c.l.b16 %v2332
      %v2337 = vunpack.c.l.b16 %v2333
      %v2338 = vpack.c.b16 %v2337, %v2336
      %2340 = vmatprep.subr.bf16.mxu0 0
      %2341 = vmatpush1.bf16.msra.mxu0 %v2338
      %2342 = vmatprep.subr.bf16.mxu0 0
      %2343 = vmatpush1.bf16.msra.mxu0 0
      %2344 = vmatprep.subr.bf16.mxu0 0
      %2345 = vmatpush1.bf16.msra.mxu0 0
      %2346 = vmatprep.subr.bf16.mxu0 0
      %2347 = vmatpush1.bf16.msra.mxu0 0
      %2348 = vmatprep.subr.bf16.mxu0 0
      %2349 = vmatpush1.bf16.msra.mxu0 0
      %2350 = vmatprep.subr.bf16.mxu0 0
      %2351 = vmatpush1.bf16.msra.mxu0 0
      %2352 = vmatprep.subr.bf16.mxu0 0
      %2353 = vmatpush1.bf16.msra.mxu0 0
      %2354 = vmatprep.subr.bf16.mxu0 0
      %2355 = vmatpush1.bf16.msra.mxu0 0
      %2356 = vmatprep.subr.bf16.mxu0 0
      %2357 = vmatpush1.bf16.msra.mxu0 0
      %2358 = vmatprep.subr.bf16.mxu0 0
      %2359 = vmatpush1.bf16.msra.mxu0 0
      %2360 = vmatprep.subr.bf16.mxu0 0
      %2361 = vmatpush1.bf16.msra.mxu0 0
      %2362 = vmatprep.subr.bf16.mxu0 0
      %2363 = vmatpush1.bf16.msra.mxu0 0
      %2364 = vmatprep.subr.bf16.mxu0 0
      %2365 = vmatpush1.bf16.msra.mxu0 0
      %2366 = vmatprep.subr.bf16.mxu0 0
      %2367 = vmatpush1.bf16.msra.mxu0 0
      %2368 = vmatprep.subr.bf16.mxu0 0
      %2369 = vmatpush1.bf16.msra.mxu0 0
      %2370 = vmatprep.subr.bf16.mxu0 0
      %2371 = vmatpush1.bf16.msra.mxu0 0
      %2372 = vmatprep.mubr.bf16.mxu0 0
      %2373 = vmatmul.mubr.bf16.gmra.mrb[0].mxu0 %v2083
      %v2374 = vpop.f32.mrb[0].mxu0
      %v2375 = vadd.f32 0.0, %v2374
      %v2376 = vpop.f32.mrb[0].mxu0
      %v2377 = vpop.f32.mrb[0].mxu0
      %v2378 = vadd.f32 0.0, %v2377
      %v2379 = vpop.f32.mrb[0].mxu0
      %2380 = vdwg.mxu0
      %v2381 = vpack.c.bf16 %v2378, %v2375
      %s2382 = scalar_lea.vmem %s11, 48
      %v2383 = vld [vmem:[%s2382] sm:$0xf]
      %v2384 = vld [vmem:[%s2382 + $0x4] sm:$0xf]
      %v2387 = vunpack.c.l.b16 %v2383
      %v2388 = vunpack.c.l.b16 %v2384
      %v2389 = vpack.c.b16 %v2388, %v2387
      %2391 = vmatprep.subr.bf16.mxu0 0
      %2392 = vmatpush1.bf16.msra.mxu0 %v2389
      %2393 = vmatprep.subr.bf16.mxu0 0
      %2394 = vmatpush1.bf16.msra.mxu0 0
      %2395 = vmatprep.subr.bf16.mxu0 0
      %2396 = vmatpush1.bf16.msra.mxu0 0
      %2397 = vmatprep.subr.bf16.mxu0 0
      %2398 = vmatpush1.bf16.msra.mxu0 0
      %2399 = vmatprep.subr.bf16.mxu0 0
      %2400 = vmatpush1.bf16.msra.mxu0 0
      %2401 = vmatprep.subr.bf16.mxu0 0
      %2402 = vmatpush1.bf16.msra.mxu0 0
      %2403 = vmatprep.subr.bf16.mxu0 0
      %2404 = vmatpush1.bf16.msra.mxu0 0
      %2405 = vmatprep.subr.bf16.mxu0 0
      %2406 = vmatpush1.bf16.msra.mxu0 0
      %2407 = vmatprep.subr.bf16.mxu0 0
      %2408 = vmatpush1.bf16.msra.mxu0 0
      %2409 = vmatprep.subr.bf16.mxu0 0
      %2410 = vmatpush1.bf16.msra.mxu0 0
      %2411 = vmatprep.subr.bf16.mxu0 0
      %2412 = vmatpush1.bf16.msra.mxu0 0
      %2413 = vmatprep.subr.bf16.mxu0 0
      %2414 = vmatpush1.bf16.msra.mxu0 0
      %2415 = vmatprep.subr.bf16.mxu0 0
      %2416 = vmatpush1.bf16.msra.mxu0 0
      %2417 = vmatprep.subr.bf16.mxu0 0
      %2418 = vmatpush1.bf16.msra.mxu0 0
      %2419 = vmatprep.subr.bf16.mxu0 0
      %2420 = vmatpush1.bf16.msra.mxu0 0
      %2421 = vmatprep.subr.bf16.mxu0 0
      %2422 = vmatpush1.bf16.msra.mxu0 0
      %2423 = vmatprep.mubr.bf16.mxu0 0
      %2424 = vmatmul.mubr.bf16.gmra.mrb[0].mxu0 %v2083
      %v2425 = vpop.f32.mrb[0].mxu0
      %v2426 = vadd.f32 0.0, %v2425
      %v2427 = vpop.f32.mrb[0].mxu0
      %v2428 = vpop.f32.mrb[0].mxu0
      %v2429 = vadd.f32 0.0, %v2428
      %v2430 = vpop.f32.mrb[0].mxu0
      %2431 = vdwg.mxu0
      %v2432 = vpack.c.bf16 %v2429, %v2426
      %s2433 = scalar_lea.vmem %s11, 56
      %v2434 = vld [vmem:[%s2433] sm:$0xf]
      %v2435 = vld [vmem:[%s2433 + $0x4] sm:$0xf]
      %v2438 = vunpack.c.l.b16 %v2434
      %v2439 = vunpack.c.l.b16 %v2435
      %v2440 = vpack.c.b16 %v2439, %v2438
      %2442 = vmatprep.subr.bf16.mxu0 0
      %2443 = vmatpush1.bf16.msra.mxu0 %v2440
      %2444 = vmatprep.subr.bf16.mxu0 0
      %2445 = vmatpush1.bf16.msra.mxu0 0
      %2446 = vmatprep.subr.bf16.mxu0 0
      %2447 = vmatpush1.bf16.msra.mxu0 0
      %2448 = vmatprep.subr.bf16.mxu0 0
      %2449 = vmatpush1.bf16.msra.mxu0 0
      %2450 = vmatprep.subr.bf16.mxu0 0
      %2451 = vmatpush1.bf16.msra.mxu0 0
      %2452 = vmatprep.subr.bf16.mxu0 0
      %2453 = vmatpush1.bf16.msra.mxu0 0
      %2454 = vmatprep.subr.bf16.mxu0 0
      %2455 = vmatpush1.bf16.msra.mxu0 0
      %2456 = vmatprep.subr.bf16.mxu0 0
      %2457 = vmatpush1.bf16.msra.mxu0 0
      %2458 = vmatprep.subr.bf16.mxu0 0
      %2459 = vmatpush1.bf16.msra.mxu0 0
      %2460 = vmatprep.subr.bf16.mxu0 0
      %2461 = vmatpush1.bf16.msra.mxu0 0
      %2462 = vmatprep.subr.bf16.mxu0 0
      %2463 = vmatpush1.bf16.msra.mxu0 0
      %2464 = vmatprep.subr.bf16.mxu0 0
      %2465 = vmatpush1.bf16.msra.mxu0 0
      %2466 = vmatprep.subr.bf16.mxu0 0
      %2467 = vmatpush1.bf16.msra.mxu0 0
      %2468 = vmatprep.subr.bf16.mxu0 0
      %2469 = vmatpush1.bf16.msra.mxu0 0
      %2470 = vmatprep.subr.bf16.mxu0 0
      %2471 = vmatpush1.bf16.msra.mxu0 0
      %2472 = vmatprep.subr.bf16.mxu0 0
      %2473 = vmatpush1.bf16.msra.mxu0 0
      %2474 = vmatprep.mubr.bf16.mxu0 0
      %2475 = vmatmul.mubr.bf16.gmra.mrb[0].mxu0 %v2083
      %v2476 = vpop.f32.mrb[0].mxu0
      %v2477 = vadd.f32 0.0, %v2476
      %v2478 = vpop.f32.mrb[0].mxu0
      %v2479 = vpop.f32.mrb[0].mxu0
      %v2480 = vadd.f32 0.0, %v2479
      %v2481 = vpop.f32.mrb[0].mxu0
      %2482 = vdwg.mxu0
      %v2483 = vpack.c.bf16 %v2480, %v2477
      %s2484 = scalar_lea.vmem %s11, 64
      %v2485 = vld [vmem:[%s2484] sm:$0xf]
      %v2486 = vld [vmem:[%s2484 + $0x4] sm:$0xf]
      %v2489 = vunpack.c.l.b16 %v2485
      %v2490 = vunpack.c.l.b16 %v2486
      %v2491 = vpack.c.b16 %v2490, %v2489
      %2493 = vmatprep.subr.bf16.mxu0 0
      %2494 = vmatpush1.bf16.msra.mxu0 %v2491
      %2495 = vmatprep.subr.bf16.mxu0 0
      %2496 = vmatpush1.bf16.msra.mxu0 0
      %2497 = vmatprep.subr.bf16.mxu0 0
      %2498 = vmatpush1.bf16.msra.mxu0 0
      %2499 = vmatprep.subr.bf16.mxu0 0
      %2500 = vmatpush1.bf16.msra.mxu0 0
      %2501 = vmatprep.subr.bf16.mxu0 0
      %2502 = vmatpush1.bf16.msra.mxu0 0
      %2503 = vmatprep.subr.bf16.mxu0 0
      %2504 = vmatpush1.bf16.msra.mxu0 0
      %2505 = vmatprep.subr.bf16.mxu0 0
      %2506 = vmatpush1.bf16.msra.mxu0 0
      %2507 = vmatprep.subr.bf16.mxu0 0
      %2508 = vmatpush1.bf16.msra.mxu0 0
      %2509 = vmatprep.subr.bf16.mxu0 0
      %2510 = vmatpush1.bf16.msra.mxu0 0
      %2511 = vmatprep.subr.bf16.mxu0 0
      %2512 = vmatpush1.bf16.msra.mxu0 0
      %2513 = vmatprep.subr.bf16.mxu0 0
      %2514 = vmatpush1.bf16.msra.mxu0 0
      %2515 = vmatprep.subr.bf16.mxu0 0
      %2516 = vmatpush1.bf16.msra.mxu0 0
      %2517 = vmatprep.subr.bf16.mxu0 0
      %2518 = vmatpush1.bf16.msra.mxu0 0
      %2519 = vmatprep.subr.bf16.mxu0 0
      %2520 = vmatpush1.bf16.msra.mxu0 0
      %2521 = vmatprep.subr.bf16.mxu0 0
      %2522 = vmatpush1.bf16.msra.mxu0 0
      %2523 = vmatprep.subr.bf16.mxu0 0
      %2524 = vmatpush1.bf16.msra.mxu0 0
      %2525 = vmatprep.mubr.bf16.mxu0 0
      %2526 = vmatmul.mubr.bf16.gmra.mrb[0].mxu0 %v2083
      %v2527 = vpop.f32.mrb[0].mxu0
      %v2528 = vadd.f32 0.0, %v2527
      %v2529 = vpop.f32.mrb[0].mxu0
      %v2530 = vpop.f32.mrb[0].mxu0
      %v2531 = vadd.f32 0.0, %v2530
      %v2532 = vpop.f32.mrb[0].mxu0
      %2533 = vdwg.mxu0
      %v2534 = vpack.c.bf16 %v2531, %v2528
      %v2535 = vld [vmem:[%s9] sm:$0xff]
      %v2536 = vld [vmem:[%s9 + $0x8] sm:$0xff]
      %v2537 = vld [vmem:[%s9 + $0x10] sm:$0x11]
      %v2538 = vld [vmem:[%s10] sm:$0xff]
      %v2539 = vld [vmem:[%s10 + $0x8] sm:$0xff]
      %v2540 = vld [vmem:[%s10 + $0x10] sm:$0x3]
      %2542 = vset.pattern.permute.xlu0 0
      %2543 = vperm.xlu0 %2542, %v2538
      %v2544 = vpop.permute.xlu0 %2543
      %2547 = vset.pattern.permute.xlu0 0
      %2548 = vperm.xlu0 %2547, %v2539
      %v2549 = vpop.permute.xlu0 %2548
      %2552 = vset.pattern.permute.xlu0 0
      %2553 = vperm.xlu0 %2552, %v2540
      %v2554 = vpop.permute.xlu0 %2553
      %v2559 = vunpack.c.l.b16 %v2535
      %v2560 = vunpack.c.h.b16 %v2535
      %v2561 = vunpack.c.l.b16 %v2536
      %v2562 = vunpack.c.h.b16 %v2536
      %v2563 = vunpack.c.l.b16 %v2537
      %v2564 = vunpack.c.h.b16 %v2537
      %v2565 = vpack.c.b16 %v2561, %v2559
      %v2566 = vpack.c.b16 %v2562, %v2560
      %v2567 = vpack.c.b16 %v2563, %v2563
      %v2568 = vpack.c.b16 %v2564, %v2564
      %v2572 = vsel %vm1262, %v2566, 0
      %v2575 = vsel %vm1262, %v2568, 0
      %2577 = vmatprep.subr.bf16.mxu0 0
      %2578 = vmatpush1.bf16.msra.mxu0 %v2126
      %2579 = vmatprep.subr.bf16.mxu0 0
      %2580 = vmatpush1.bf16.msra.mxu0 %v2177
      %2581 = vmatprep.subr.bf16.mxu0 0
      %2582 = vmatpush1.bf16.msra.mxu0 %v2228
      %2583 = vmatprep.subr.bf16.mxu0 0
      %2584 = vmatpush1.bf16.msra.mxu0 %v2279
      %2585 = vmatprep.subr.bf16.mxu0 0
      %2586 = vmatpush1.bf16.msra.mxu0 %v2330
      %2587 = vmatprep.subr.bf16.mxu0 0
      %2588 = vmatpush1.bf16.msra.mxu0 %v2381
      %2589 = vmatprep.subr.bf16.mxu0 0
      %2590 = vmatpush1.bf16.msra.mxu0 %v2432
      %2591 = vmatprep.subr.bf16.mxu0 0
      %2592 = vmatpush1.bf16.msra.mxu0 %v2483
      %2593 = vmatprep.subr.bf16.mxu0 0
      %2594 = vmatpush1.bf16.msra.mxu0 %v2534
      %2595 = vmatprep.subr.bf16.mxu0 0
      %2596 = vmatpush1.bf16.msra.mxu0 0
      %2597 = vmatprep.subr.bf16.mxu0 0
      %2598 = vmatpush1.bf16.msra.mxu0 0
      %2599 = vmatprep.subr.bf16.mxu0 0
      %2600 = vmatpush1.bf16.msra.mxu0 0
      %2601 = vmatprep.subr.bf16.mxu0 0
      %2602 = vmatpush1.bf16.msra.mxu0 0
      %2603 = vmatprep.subr.bf16.mxu0 0
      %2604 = vmatpush1.bf16.msra.mxu0 0
      %2605 = vmatprep.subr.bf16.mxu0 0
      %2606 = vmatpush1.bf16.msra.mxu0 0
      %2607 = vmatprep.subr.bf16.mxu0 0
      %2608 = vmatpush1.bf16.msra.mxu0 0
      %2609 = vmatprep.mubr.bf16.mxu0 %v2572
      %2610 = vmatmul.mubr.bf16.gmra.mrb[0].mxu0 %v2565
      %v2611 = vpop.f32.mrb[0].mxu0
      %v2612 = vadd.f32 %v2544, %v2611
      %v2613 = vpop.f32.mrb[0].mxu0
      %v2614 = vpop.f32.mrb[0].mxu0
      %v2615 = vadd.f32 %v2549, %v2614
      %v2616 = vpop.f32.mrb[0].mxu0
      %2617 = vmatprep.mubr.bf16.mxu0 %v2575
      %2618 = vmatmul.mubr.bf16.gmra.mrb[0].mxu0 %v2567
      %v2619 = vpop.f32.mrb[0].mxu0
      %v2620 = vadd.f32 %v2554, %v2619
      %v2621 = vpop.f32.mrb[0].mxu0
      %v2622 = vpop.f32.mrb[0].mxu0
      %v2623 = vpop.f32.mrb[0].mxu0
      %2624 = vdwg.mxu0
      %2628 = vrot.lane.b32.xlu0 %v2612, 64
      %v2629 = vpop.permute.xlu0 %2628
      %2630 = vrot.lane.b32.xlu0 %v2615, 64
      %v2631 = vpop.permute.xlu0 %2630
      %2632 = vrot.lane.b32.xlu0 %v2620, 64
      %v2633 = vpop.permute.xlu0 %2632
      %v2637 = vsel %vm593, %v2061, %v2629
      %v2638 = vsel %vm593, %v2064, %v2631
      %v2639 = vsel %vm593, %v2069, %v2633
      %v2640 = vld [vmem:[%s12] sm:$0xff]
      %vm2641 = vcmask 651264
      %v2642 = vsel %vm2641, %v2637, -inf
      %v2643 = vrot.slane %v2642, 4
      %v2644 = vmax.f32 %v2642, %v2643
      %v2645 = vrot.slane %v2644, 2
      %v2646 = vmax.f32 %v2644, %v2645
      %v2647 = vrot.slane %v2646, 1
      %v2648 = vmax.f32 %v2646, %v2647
      %v2649 = vsub.f32 %v2637, %v2648
      %v2650 = vmul.f32 %v2649, 1.442695
      %v2651 = vpow.pop %v2650
      %v2652 = vsel %vm2641, %v2651, 0.0
      %v2653 = vrot.slane %v2652, 4
      %v2654 = vadd.f32 %v2652, %v2653
      %v2655 = vrot.slane %v2654, 2
      %v2656 = vadd.f32 %v2654, %v2655
      %v2657 = vrot.slane %v2656, 1
      %v2658 = vadd.f32 %v2656, %v2657
      %v2659 = vrcp.pop %v2658
      %v2660 = vmul.f32 %v2651, %v2659
      %v2662 = vrot.slane %v2640, 2
      %v2664 = vadd.f32 %v2640, %v2662
      %v2665 = vmul.f32 %v2664, 0.5
      %v2666 = vrot.slane %v2640, 6
      %v2668 = vsub.f32 %v2640, %v2666
      %v2669 = vmul.f32 %v2638, 0.1
      %v2670 = vmul.f32 %v2638, 0.2
      %v2671 = vmax.f32 %v2670, -4.1351666
      %v2672 = vmin.f32 %v2671, 4.1351666
      %v2673 = vmul.f32 %v2668, %v2669
      %v2675 = vrot.slane %v2673, 2
      %v2677 = vadd.f32 %v2665, %v2675
      %v2678 = vmul.f32 %v2672, 1.442695
      %v2679 = vpow.pop %v2678
      %v2681 = vrot.slane %v2679, 2
      %v2683 = vmul.f32 %v2668, %v2681
      %v2684 = vmul.f32 %v2683, 0.5
      %v2686 = vrot.slane %v2684, 2
      %v2688 = vsub.f32 %v2677, %v2686
      %v2689 = vmax.f32 %v2688, 0.0
      %v2690 = vmin.f32 %v2689, 32.0
      %v2691 = vmul.f32 %v2690, 2.0
      %v2692 = vadd.f32 %v2677, %v2686
      %v2693 = vmax.f32 %v2692, 0.0
      %v2694 = vmin.f32 %v2693, 32.0
      %v2695 = vmul.f32 %v2694, 2.0
      %v2697 = vrot.slane %v2695, 6
      %vm2699 = vcmask 1041408
      %v2700 = vsel %vm2699, %v2691, %v2697
      %vm2701 = vcmask 1042432
      %v2702 = vsel %vm2701, %v2700, %v2697
      %vm2703 = vcmask 654341
      %v2704 = vsel %vm2703, %v2637, -inf
      %vm2705 = vcmask 648192
      %v2706 = vsel %vm2705, %v2638, -inf
      %v2707 = vmax.f32 %v2704, %v2706
      %v2708 = vrot.slane %v2707, 4
      %v2709 = vmax.f32 %v2707, %v2708
      %v2710 = vrot.slane %v2709, 2
      %v2711 = vmax.f32 %v2709, %v2710
      %v2712 = vrot.slane %v2711, 1
      %v2713 = vmax.f32 %v2711, %v2712
      %v2714 = vsub.f32 %v2637, %v2713
      %v2715 = vsub.f32 %v2638, %v2713
      %v2716 = vmul.f32 %v2714, 1.442695
      %v2717 = vpow.pop %v2716
      %v2718 = vmul.f32 %v2715, 1.442695
      %v2719 = vpow.pop %v2718
      %v2722 = vrot.slane %v2717, 5
      %v2723 = vrot.slane %v2719, 5
      %v2724 = vsel %vm2701, %v2722, %v2723
      %v2726 = vsel %vm2641, %v2724, 0.0
      %v2727 = vrot.slane %v2726, 4
      %v2728 = vadd.f32 %v2726, %v2727
      %v2729 = vrot.slane %v2728, 2
      %v2730 = vadd.f32 %v2728, %v2729
      %v2731 = vrot.slane %v2730, 1
      %v2732 = vadd.f32 %v2730, %v2731
      %v2733 = vrcp.pop %v2732
      %v2734 = vmul.f32 %v2717, %v2733
      %v2735 = vmul.f32 %v2719, %v2733
      %v2736 = vmul.f32 %v2639, 0.2
      %v2737 = vmax.f32 %v2736, -4.1351666
      %v2738 = vmin.f32 %v2737, 4.1351666
      %v2739 = vmul.f32 %v2738, 1.442695
      %v2740 = vpow.pop %v2739
      %v2742 = vrot.slane %v2740, 2
      %v2744 = vmul.f32 %v2668, %v2742
      %v2745 = vmul.f32 %v2744, 0.5
      %v2747 = vrot.slane %v2745, 2
      %v2749 = vsub.f32 %v2677, %v2747
      %v2750 = vmax.f32 %v2749, 0.0
      %v2751 = vmin.f32 %v2750, 32.0
      %v2752 = vmul.f32 %v2751, 2.0
      %v2753 = vadd.f32 %v2677, %v2747
      %v2754 = vmax.f32 %v2753, 0.0
      %v2755 = vmin.f32 %v2754, 32.0
      %v2756 = vmul.f32 %v2755, 2.0
      %v2758 = vrot.slane %v2752, 4
      %v2761 = vrot.slane %v2756, 2
      %v2763 = vsel %vm2699, %v2758, %v2761
      %v2764 = vsel %vm2701, %v2763, %v2761
      %v2766 = vrot.slane %v2764, 4
      %vm2768 = vcmask 1043456
      %v2769 = vsel %vm2768, %v2702, %v2766
      %vm2770 = vcmask 654336
      %2771 = vst.msk [vmem:[%s472] sm:$0xff] %vm2770, %v2769
      %vm2774 = vcmask 1046528
      %v2775 = vrot.slane %v2734, 1
      %v2776 = vrot.slane %v2735, 1
      %v2777 = vsel %vm2774, %v2775, %v2776
      %v2779 = vsel %vm2768, %v2660, %v2777
      %2780 = vst.msk [vmem:[%s476] sm:$0xff] %vm2770, %v2779
      %p2781 = scmp.lt.s32.totalorder %s26, 1
      %s2782 = scalar_select %p2781, %s26, 1
      %s2783 = smul.addr %s2782, 8
      %s2784 = scalar_lea.vmem %s13, %s2783
      %p2785 = scmp.lt.s32.totalorder %s26, 1
      %s2786 = scalar_select %p2785, %s26, 1
      %s2787 = smul.addr %s2786, 8
      %s2788 = scalar_lea.vmem %s14, %s2787
      // Predicated region
      $region73: #{ssd_r_forward.1} parent=71 // pred_check
        %p2789 = pneg %p322
      $region74: #{ssd_r_forward.1} parent=71 // pred_check_branch
        %2791 = sbr.rel (%p2789) target = $region76
      $region75: #{ssd_r_forward.1} parent=71 // pred_region
        _
      $region76: #{ssd_r_forward.1} parent=71 // pred_fallthru
        _
      // Predicated region
      $region77: #{ssd_r_forward.1} parent=71 // pred_check
        %p2792 = pneg %p348
      $region78: #{ssd_r_forward.1} parent=71 // pred_check_branch
        %2794 = sbr.rel (%p2792) target = $region80
      $region79: #{ssd_r_forward.1} parent=71 // pred_region
        _
      $region80: #{ssd_r_forward.1} parent=71 // pred_fallthru
        _
    $region72: #{ssd_r_forward.1} parent=5 // pred_fallthru
      _
    %p2795 = scmp.le.s32.totalorder 2, %s21
    // Predicated region
    $region81: #{ssd_r_forward.1} parent=5 // pred_check
      %p2796 = pneg %p2795
    $region82: #{ssd_r_forward.1} parent=5 // pred_check_branch
      %2798 = sbr.rel (%p2796) target = $region84
    $region83: #{ssd_r_forward.1} parent=5 // pred_region
      %s2799 = ssub.s32 %s21, 2
      // Predicated region
      $region85: #{ssd_r_forward.1} parent=83 // pred_check
        %p2800 = pneg %p328
      $region86: #{ssd_r_forward.1} parent=83 // pred_check_branch
        %2802 = sbr.rel (%p2800) target = $region88
      $region87: #{ssd_r_forward.1} parent=83 // pred_region
        %p2803 = scmp.lt.s32.totalorder %s27, 1
        %s2804 = scalar_select %p2803, %s27, 1
        %s2805 = smul.addr %s2804, 8
        %s2806 = scalar_lea.vmem %s13, %s2805
      $region88: #{ssd_r_forward.1} parent=83 // pred_fallthru
        _
      // Predicated region
      $region89: #{ssd_r_forward.1} parent=83 // pred_check
        %p2807 = pneg %p354
      $region90: #{ssd_r_forward.1} parent=83 // pred_check_branch
        %2809 = sbr.rel (%p2807) target = $region92
      $region91: #{ssd_r_forward.1} parent=83 // pred_region
        %p2810 = scmp.lt.s32.totalorder %s27, 1
        %s2811 = scalar_select %p2810, %s27, 1
        %s2812 = smul.addr %s2811, 8
        %s2813 = scalar_lea.vmem %s14, %s2812
      $region92: #{ssd_r_forward.1} parent=83 // pred_fallthru
        _
    $region84: #{ssd_r_forward.1} parent=5 // pred_fallthru
      _
  $region6: #{ssd_r_forward.1} parent=0 // loop_footer
    %s25 = sadd.s32 1, %s21
  $region7: #{ssd_r_forward.1} parent=0 // loop_footer_branch
    %20 = sbr.rel target = $region3
  $region8: #{ssd_r_forward.1} parent=0 // loop_exit
    _

</llo_original>
